<compile_context>
chip_gen: v7x
topology: tpu7x:2x2x1
jax: 0.10.0
libtpu: 0.0.40
codegen_flags: <defaults>
</compile_context>

<pallas_src>
import jax
import jax.numpy as jnp
from jax import lax
from jax.experimental import pallas as pl
from jax.experimental.pallas import tpu as pltpu

HIDDEN = 200          # hidden_dim
F = 26                # num_feature  -> deconv output = F + 2 = 28
LAYERS = 2            # layers_num
B = 2                 # batch
EPS = 1e-5            # BatchNorm2d eps
SLOPE = 0.1           # leaky_relu negative slope

HC = F + 4            # canvas height (2-pixel zero border on each side)
WC = F + 4            # canvas width
LFLAT = 1024          # flattened canvas length padded to 8*128 lanes
ROWS = 8              # stacked sublane rows: ci*B + b (3*B=6 used, 2 zero pad)
N_BN = float(B * F * F)

assert 3 * B <= ROWS

# conv taps, t = (dh+1)*3 + (dw+1)  (same order as kh*3+kw in the flat weight)
OFFS = [(dh, dw) for dh in (-1, 0, 1) for dw in (-1, 0, 1)]
# transposed-conv taps, t = kh*3 + kw
DEC_OFFS = [(kh, kw) for kh in range(3) for kw in range(3)]

VMEM_SPEC = pl.BlockSpec(memory_space=pltpu.MemorySpace.VMEM)
SMEM_SPEC = pl.BlockSpec(memory_space=pltpu.MemorySpace.SMEM)


def _shift(a, s):
    """Return b with b[..., i] = a[..., i + s] (valid for the positions kept)."""
    if s == 0:
        return a
    return pltpu.roll(a, (-s) % LFLAT, axis=1)


# ----------------------------------------------------------------------------
# Fully fused decoder kernel.
#   xblk_ref : (8, 3*HIDDEN)        VMEM bf16  block-diagonal latent input
#   w0_ref   : (3*HIDDEN, LFLAT)    VMEM bf16  canvas-embedded latent weight
#   mask_ref : (1, LFLAT)           VMEM f32   1.0 inside the 26x26 active region
#   wcol_ref : (LAYERS*9*3, 8, 1)   VMEM f32   conv weights as sublane columns,
#                                              idx = (l*9 + t)*3 + co, row = ci*B+b
#   dwcol_ref: (9, 8, 1)            VMEM f32   flipped deconv weight columns
#   cb_ref   : (LAYERS, 3)          SMEM       conv bias
#   g_ref    : (LAYERS, 3)          SMEM       BN gamma
#   bt_ref   : (LAYERS, 3)          SMEM       BN beta
#   db_ref   : (1,)                 SMEM       deconv bias
#   o_ref    : (B, LFLAT)           VMEM f32   deconv result on the canvas
# ----------------------------------------------------------------------------
def _decoder_kernel(xblk_ref, w0_ref, mask_ref, wcol_ref, dwcol_ref,
                    cb_ref, g_ref, bt_ref, db_ref, o_ref):
    mask = mask_ref[...]                                    # (1, LFLAT)
    zero_pad = jnp.zeros((ROWS - 3 * B, LFLAT), jnp.float32)
    zero_col = jnp.zeros((ROWS - 3 * B, 1), jnp.float32)

    # Fused latent matmul straight into the stacked (ci*B+b, canvas) layout:
    # x_blk is block-diagonal over channels, so row ci*B+b of the result is
    # channel ci / batch b on the zero-bordered canvas (border & pad lanes are
    # zero because the corresponding weight columns are zero).
    A = jnp.dot(xblk_ref[...], w0_ref[...],
                preferred_element_type=jnp.float32)         # (8, LFLAT) f32

    for l in range(LAYERS):
        # hoist all SMEM scalars out of the vector loops
        bias = [cb_ref[l, c] for c in range(3)]
        gam = [g_ref[l, c] for c in range(3)]
        beta = [bt_ref[l, c] for c in range(3)]

        # --- 3x3 'same' conv, tap-major: ONE roll per (dh, dw), then 3 column
        #     multiply-accumulates (one per output channel). ---
        acc = [None, None, None]
        for t in range(9):
            dh, dw = OFFS[t]
            rolled = _shift(A, dh * WC + dw)                # (8, LFLAT), one XLU roll
            for co in range(3):
                wc = wcol_ref[(l * 9 + t) * 3 + co]         # (8, 1) sublane weights
                term = wc * rolled
                acc[co] = term if acc[co] is None else acc[co] + term

        # --- collapse input-channel row groups, bias, leaky_relu, residual ---
        y_rows = []
        for co in range(3):
            a = acc[co]
            conv = a[0:B] + a[B:2 * B] + a[2 * B:3 * B] + bias[co]   # (B, LFLAT)
            act = jnp.maximum(conv, SLOPE * conv)           # leaky_relu(0.1)
            y_rows.append(A[co * B:(co + 1) * B] + act)     # residual
        y = jnp.concatenate(y_rows + [zero_pad], axis=0)    # (8, LFLAT)

        # --- training-mode BatchNorm2d: two batched lane reductions, tiny
        #     per-channel finish, one stacked normalize with (8,1) columns. ---
        ym = y * mask
        rs1 = jnp.sum(ym, axis=1, keepdims=True)            # (8, 1)
        rs2 = jnp.sum(ym * ym, axis=1, keepdims=True)       # (8, 1)
        scale_cols, shift_cols = [], []
        for co in range(3):
            s1 = jnp.sum(rs1[co * B:(co + 1) * B])
            s2 = jnp.sum(rs2[co * B:(co + 1) * B])
            mu = s1 / N_BN
            var = s2 / N_BN - mu * mu
            scale = gam[co] * lax.rsqrt(var + EPS)
            shift = beta[co] - mu * scale
            scale_cols.append(jnp.full((B, 1), scale, jnp.float32))
            shift_cols.append(jnp.full((B, 1), shift, jnp.float32))
        scale_col = jnp.concatenate(scale_cols + [zero_col], axis=0)   # (8, 1)
        shift_col = jnp.concatenate(shift_cols + [zero_col], axis=0)   # (8, 1)
        # (y - mu)*scale + beta, then re-zero border/pad lanes for the next conv
        A = (y * scale_col + shift_col) * mask

    # --- ConvTranspose2d(3, 1, 3): tap-major correlation with the flipped
    #     kernel on the zero-bordered canvas; valid output at canvas [0, 27]. ---
    dacc = None
    for t in range(9):
        kh, kw = DEC_OFFS[t]
        rolled = _shift(A, kh * WC + kw)
        term = dwcol_ref[t] * rolled
        dacc = term if dacc is None else dacc + term
    o_ref[...] = dacc[0:B] + dacc[B:2 * B] + dacc[2 * B:3 * B] + db_ref[0]


def _stack_latent(x):
    """Block-diagonal latent input: row ci*B+b holds x[b] in cols [ci*H:(ci+1)*H]."""
    xb = x.astype(jnp.bfloat16)
    xblk = jnp.zeros((ROWS, 3 * HIDDEN), jnp.bfloat16)
    for ci in range(3):
        xblk = xblk.at[ci * B:(ci + 1) * B, ci * HIDDEN:(ci + 1) * HIDDEN].set(xb)
    return xblk


@jax.jit
def decoder_forward(x, params):
    xblk = _stack_latent(x)
    cost = pl.CostEstimate(flops=11_000_000, transcendentals=2 * LAYERS * 3,
                           bytes_accessed=1_300_000)
    flat = pl.pallas_call(
        _decoder_kernel,
        out_shape=jax.ShapeDtypeStruct((B, LFLAT), jnp.float32),
        in_specs=[VMEM_SPEC, VMEM_SPEC, VMEM_SPEC, VMEM_SPEC, VMEM_SPEC,
                  SMEM_SPEC, SMEM_SPEC, SMEM_SPEC, SMEM_SPEC],
        out_specs=VMEM_SPEC,
        cost_estimate=cost,
    )(xblk, params["w0_blk"], params["region_mask"],
      params["conv_w_cols"], params["dec_w_cols"],
      params["conv_b"], params["gamma"], params["beta"], params["dec_b"])
    canvas = flat[:, :HC * WC].reshape(B, HC, WC)
    return canvas[:, None, :F + 2, :F + 2]                  # (B, 1, 28, 28)


# ----------------------------------------------------------------------------
# Parameter init (deterministic, shapes match the PyTorch module) + one-time
# re-layout into the kernel's canvas / sublane-column formats.
# The latent weight is quantized to bf16 once and that quantized value is used
# by BOTH the kernel and the reference (deliberate MXU precision choice).
# ----------------------------------------------------------------------------
def init_params(key):
    keys = jax.random.split(key, LAYERS + 2)
    std0 = (2.0 / (HIDDEN + 3 * F * F)) ** 0.5               # xavier_normal_
    param0_f32 = std0 * jax.random.normal(keys[0], (HIDDEN, 3 * F * F), jnp.float32)
    param0 = param0_f32.astype(jnp.bfloat16).astype(jnp.float32)

    bound = 1.0 / (3 * 3 * 3) ** 0.5
    layers = []
    for i in range(LAYERS):
        kw_, kb_ = jax.random.split(keys[1 + i])
        kg_, kbt_ = jax.random.split(jax.random.fold_in(keys[1 + i], 7))
        layers.append(dict(
            w=jax.random.uniform(kw_, (3, 3, 3, 3), jnp.float32, -bound, bound),
            b=jax.random.uniform(kb_, (3,), jnp.float32, -bound, bound),
            gamma=1.0 + 0.1 * jax.random.normal(kg_, (3,), jnp.float32),
            beta=0.1 * jax.random.normal(kbt_, (3,), jnp.float32),
        ))

    kdw, kdb = jax.random.split(keys[1 + LAYERS])
    w_dec = jax.random.uniform(kdw, (3, 1, 3, 3), jnp.float32, -bound, bound)
    b_dec = jax.random.uniform(kdb, (1,), jnp.float32, -bound, bound)
    # flipped + transposed -> equivalent forward-conv kernel, OIHW = (1, 3, 3, 3)
    w_dec_flip = jnp.transpose(w_dec[:, :, ::-1, ::-1], (1, 0, 2, 3))

    # latent weight per channel embedded into the zero-bordered 30x30 canvas,
    # lane-padded to 1024, stacked channel-major on K -> (3*HIDDEN, LFLAT) bf16
    p0 = param0.reshape(HIDDEN, 3, F, F)
    canvas_w = jnp.zeros((3, HIDDEN, HC, WC), jnp.float32)
    canvas_w = canvas_w.at[:, :, 2:2 + F, 2:2 + F].set(jnp.transpose(p0, (1, 0, 2, 3)))
    w_ch = canvas_w.reshape(3, HIDDEN, HC * WC)
    w_ch = jnp.pad(w_ch, ((0, 0), (0, 0), (0, LFLAT - HC * WC)))
    w0_blk = w_ch.reshape(3 * HIDDEN, LFLAT).astype(jnp.bfloat16)

    m = jnp.zeros((HC, WC), jnp.float32).at[2:2 + F, 2:2 + F].set(1.0)
    region_mask = jnp.pad(m.reshape(1, HC * WC), ((0, 0), (0, LFLAT - HC * WC)))

    # conv weights as sublane columns: conv_w_cols[(l*9+t)*3+co, ci*B+b, 0]
    #   = w[l][co, ci, kh, kw]   with t = kh*3 + kw
    conv_w = jnp.stack([lyr["w"] for lyr in layers])          # (L, co, ci, 3, 3)
    wflat = conv_w.reshape(LAYERS, 3, 3, 9)                   # (L, co, ci, t)
    wcol = jnp.transpose(wflat, (0, 3, 1, 2))                 # (L, t, co, ci)
    wcol = jnp.repeat(wcol, B, axis=3)                        # (L, t, co, ci*B+b)
    wcol = jnp.pad(wcol, ((0, 0), (0, 0), (0, 0), (0, ROWS - 3 * B)))
    conv_w_cols = wcol.reshape(LAYERS * 9 * 3, ROWS, 1)

    # deconv (flipped) weight columns: dec_w_cols[t, ci*B+b, 0] = w_flip[0,ci,kh,kw]
    dflat = w_dec_flip.reshape(3, 9)                          # (ci, t)
    dcol = jnp.transpose(dflat, (1, 0))                       # (t, ci)
    dcol = jnp.repeat(dcol, B, axis=1)
    dcol = jnp.pad(dcol, ((0, 0), (0, ROWS - 3 * B)))
    dec_w_cols = dcol.reshape(9, ROWS, 1)

    return dict(
        # spec-layout params (for the independent reference)
        param0=param0, layers=layers,
        deconv_w_flip=w_dec_flip, deconv_b=b_dec,
        # kernel-layout params
        w0_blk=w0_blk, region_mask=region_mask,
        conv_w_cols=conv_w_cols, dec_w_cols=dec_w_cols,
        conv_b=jnp.stack([lyr["b"] for lyr in layers]),
        gamma=jnp.stack([lyr["gamma"] for lyr in layers]),
        beta=jnp.stack([lyr["beta"] for lyr in layers]),
        dec_b=b_dec,
    )


# ----------------------------------------------------------------------------
# Pure-JAX reference (independent of the kernel's canvas/roll/stacking
# machinery).  It shares the kernel's deliberate bf16 quantization of the
# latent-matmul inputs so the comparison isolates layout/conv/BN/deconv logic.
# ----------------------------------------------------------------------------
def decoder_reference(x, params):
    dn = ("NCHW", "OIHW", "NCHW")
    xq = x.astype(jnp.bfloat16).astype(jnp.float32)
    o = jnp.dot(xq, params["param0"], precision=lax.Precision.HIGHEST)
    o = o.reshape(x.shape[0], 3, F, F)
    for lyr in params["layers"]:
        conv = lax.conv_general_dilated(o, lyr["w"], (1, 1), "SAME",
                                        dimension_numbers=dn,
                                        precision=lax.Precision.HIGHEST)
        conv = conv + lyr["b"].reshape(1, 3, 1, 1)
        act = jnp.where(conv >= 0, conv, SLOPE * conv)
        y = o + act
        mu = jnp.mean(y, axis=(0, 2, 3), keepdims=True)
        var = jnp.mean((y - mu) ** 2, axis=(0, 2, 3), keepdims=True)
        o = (lyr["gamma"].reshape(1, 3, 1, 1) * (y - mu) / jnp.sqrt(var + EPS)
             + lyr["beta"].reshape(1, 3, 1, 1))
    out = lax.conv_general_dilated(o, params["deconv_w_flip"], (1, 1),
                                   [(2, 2), (2, 2)], dimension_numbers=dn,
                                   precision=lax.Precision.HIGHEST)
    return out + params["deconv_b"].reshape(1, 1, 1, 1)


# TODO(synk): BatchNorm running-mean/var buffer updates (a training-mode side
# effect with no influence on the forward output) are not materialized.

if __name__ == "__main__":
    key = jax.random.PRNGKey(0)
    kx, kp = jax.random.split(key)
    x = jax.random.normal(kx, (B, HIDDEN), jnp.float32)
    params = init_params(kp)

    out = jax.block_until_ready(decoder_forward(x, params))
    assert out.shape == (B, 1, 28, 28), out.shape
    assert bool(jnp.all(jnp.isfinite(out)))

    ref = decoder_reference(x, params)
    max_err = float(jnp.max(jnp.abs(out - ref)))
    # kernel and reference share the bf16 latent-weight/input quantization, so
    # remaining differences are f32 accumulation-order only; 1e-2 still catches
    # any layout / roll / mask / BN bug (those produce O(1) errors).
    assert max_err < 1e-2, f"max abs err vs reference: {max_err}"

    print("KERNEL_OK")
</pallas_src>

<mosaic_0001>
module attributes {stable_mosaic.version = 11 : i64} {
  func.func @_decoder_kernel(%arg0: memref<8x600xbf16, #tpu.memory_space<vmem>>, %arg1: memref<600x1024xbf16, #tpu.memory_space<vmem>>, %arg2: memref<1x1024xf32, #tpu.memory_space<vmem>>, %arg3: memref<54x8x1xf32, #tpu.memory_space<vmem>>, %arg4: memref<9x8x1xf32, #tpu.memory_space<vmem>>, %arg5: memref<2x3xf32, #tpu.memory_space<smem>>, %arg6: memref<2x3xf32, #tpu.memory_space<smem>>, %arg7: memref<2x3xf32, #tpu.memory_space<smem>>, %arg8: memref<1xf32, #tpu.memory_space<smem>>, %arg9: memref<2x1024xf32, #tpu.memory_space<vmem>>) attributes {dimension_semantics = [], scalar_prefetch = 0 : i64, scratch_operands = 0 : i64, tpu.core_type = #tpu.core_type<tc>} {
    %c0 = arith.constant 0 : index
    %c0_0 = arith.constant 0 : index
    %0 = vector.load %arg2[%c0, %c0_0] : memref<1x1024xf32, #tpu.memory_space<vmem>>, vector<1x1024xf32>
    %cst = arith.constant 0.000000e+00 : f32
    %1 = vector.broadcast %cst : f32 to vector<2x1024xf32>
    %cst_1 = arith.constant 0.000000e+00 : f32
    %2 = vector.broadcast %cst_1 : f32 to vector<2x1xf32>
    %c0_2 = arith.constant 0 : index
    %c0_3 = arith.constant 0 : index
    %3 = vector.load %arg0[%c0_2, %c0_3] : memref<8x600xbf16, #tpu.memory_space<vmem>>, vector<8x600xbf16>
    %c0_4 = arith.constant 0 : index
    %c0_5 = arith.constant 0 : index
    %4 = vector.load %arg1[%c0_4, %c0_5] : memref<600x1024xbf16, #tpu.memory_space<vmem>>, vector<600x1024xbf16>
    %cst_6 = arith.constant dense<0.000000e+00> : vector<8x1024xf32>
    %5 = tpu.matmul %3, %4, %cst_6 {dimension_numbers = #tpu.dot_dimension_numbers<[1], [0], [0], [1], [0, 0, 1, 1], [], []>} : vector<8x600xbf16>, vector<600x1024xbf16>, vector<8x1024xf32> -> vector<8x1024xf32>
    %c0_7 = arith.constant 0 : index
    %c0_8 = arith.constant 0 : index
    %6 = memref.load %arg5[%c0_7, %c0_8] : memref<2x3xf32, #tpu.memory_space<smem>>
    %c0_9 = arith.constant 0 : index
    %c1 = arith.constant 1 : index
    %7 = memref.load %arg5[%c0_9, %c1] : memref<2x3xf32, #tpu.memory_space<smem>>
    %c0_10 = arith.constant 0 : index
    %c2 = arith.constant 2 : index
    %8 = memref.load %arg5[%c0_10, %c2] : memref<2x3xf32, #tpu.memory_space<smem>>
    %c0_11 = arith.constant 0 : index
    %c0_12 = arith.constant 0 : index
    %9 = memref.load %arg6[%c0_11, %c0_12] : memref<2x3xf32, #tpu.memory_space<smem>>
    %c0_13 = arith.constant 0 : index
    %c1_14 = arith.constant 1 : index
    %10 = memref.load %arg6[%c0_13, %c1_14] : memref<2x3xf32, #tpu.memory_space<smem>>
    %c0_15 = arith.constant 0 : index
    %c2_16 = arith.constant 2 : index
    %11 = memref.load %arg6[%c0_15, %c2_16] : memref<2x3xf32, #tpu.memory_space<smem>>
    %c0_17 = arith.constant 0 : index
    %c0_18 = arith.constant 0 : index
    %12 = memref.load %arg7[%c0_17, %c0_18] : memref<2x3xf32, #tpu.memory_space<smem>>
    %c0_19 = arith.constant 0 : index
    %c1_20 = arith.constant 1 : index
    %13 = memref.load %arg7[%c0_19, %c1_20] : memref<2x3xf32, #tpu.memory_space<smem>>
    %c0_21 = arith.constant 0 : index
    %c2_22 = arith.constant 2 : index
    %14 = memref.load %arg7[%c0_21, %c2_22] : memref<2x3xf32, #tpu.memory_space<smem>>
    %c31_i32 = arith.constant 31 : i32
    %15 = tpu.dynamic_rotate %5 by %c31_i32 dim 1 : vector<8x1024xf32>, i32 -> vector<8x1024xf32>
    %c0_23 = arith.constant 0 : index
    %c0_24 = arith.constant 0 : index
    %c0_25 = arith.constant 0 : index
    %16 = vector.load %arg3[%c0_23, %c0_24, %c0_25] : memref<54x8x1xf32, #tpu.memory_space<vmem>>, vector<1x8x1xf32>
    %17 = vector.shape_cast %16 : vector<1x8x1xf32> to vector<8x1xf32>
    %18 = vector.broadcast %17 : vector<8x1xf32> to vector<8x1024xf32>
    %19 = arith.mulf %18, %15 : vector<8x1024xf32>
    %c1_26 = arith.constant 1 : index
    %c0_27 = arith.constant 0 : index
    %c0_28 = arith.constant 0 : index
    %20 = vector.load %arg3[%c1_26, %c0_27, %c0_28] : memref<54x8x1xf32, #tpu.memory_space<vmem>>, vector<1x8x1xf32>
    %21 = vector.shape_cast %20 : vector<1x8x1xf32> to vector<8x1xf32>
    %22 = vector.broadcast %21 : vector<8x1xf32> to vector<8x1024xf32>
    %23 = arith.mulf %22, %15 : vector<8x1024xf32>
    %c2_29 = arith.constant 2 : index
    %c0_30 = arith.constant 0 : index
    %c0_31 = arith.constant 0 : index
    %24 = vector.load %arg3[%c2_29, %c0_30, %c0_31] : memref<54x8x1xf32, #tpu.memory_space<vmem>>, vector<1x8x1xf32>
    %25 = vector.shape_cast %24 : vector<1x8x1xf32> to vector<8x1xf32>
    %26 = vector.broadcast %25 : vector<8x1xf32> to vector<8x1024xf32>
    %27 = arith.mulf %26, %15 : vector<8x1024xf32>
    %c30_i32 = arith.constant 30 : i32
    %28 = tpu.dynamic_rotate %5 by %c30_i32 dim 1 : vector<8x1024xf32>, i32 -> vector<8x1024xf32>
    %c3 = arith.constant 3 : index
    %c0_32 = arith.constant 0 : index
    %c0_33 = arith.constant 0 : index
    %29 = vector.load %arg3[%c3, %c0_32, %c0_33] : memref<54x8x1xf32, #tpu.memory_space<vmem>>, vector<1x8x1xf32>
    %30 = vector.shape_cast %29 : vector<1x8x1xf32> to vector<8x1xf32>
    %31 = vector.broadcast %30 : vector<8x1xf32> to vector<8x1024xf32>
    %32 = arith.mulf %31, %28 : vector<8x1024xf32>
    %33 = arith.addf %19, %32 : vector<8x1024xf32>
    %c4 = arith.constant 4 : index
    %c0_34 = arith.constant 0 : index
    %c0_35 = arith.constant 0 : index
    %34 = vector.load %arg3[%c4, %c0_34, %c0_35] : memref<54x8x1xf32, #tpu.memory_space<vmem>>, vector<1x8x1xf32>
    %35 = vector.shape_cast %34 : vector<1x8x1xf32> to vector<8x1xf32>
    %36 = vector.broadcast %35 : vector<8x1xf32> to vector<8x1024xf32>
    %37 = arith.mulf %36, %28 : vector<8x1024xf32>
    %38 = arith.addf %23, %37 : vector<8x1024xf32>
    %c5 = arith.constant 5 : index
    %c0_36 = arith.constant 0 : index
    %c0_37 = arith.constant 0 : index
    %39 = vector.load %arg3[%c5, %c0_36, %c0_37] : memref<54x8x1xf32, #tpu.memory_space<vmem>>, vector<1x8x1xf32>
    %40 = vector.shape_cast %39 : vector<1x8x1xf32> to vector<8x1xf32>
    %41 = vector.broadcast %40 : vector<8x1xf32> to vector<8x1024xf32>
    %42 = arith.mulf %41, %28 : vector<8x1024xf32>
    %43 = arith.addf %27, %42 : vector<8x1024xf32>
    %c29_i32 = arith.constant 29 : i32
    %44 = tpu.dynamic_rotate %5 by %c29_i32 dim 1 : vector<8x1024xf32>, i32 -> vector<8x1024xf32>
    %c6 = arith.constant 6 : index
    %c0_38 = arith.constant 0 : index
    %c0_39 = arith.constant 0 : index
    %45 = vector.load %arg3[%c6, %c0_38, %c0_39] : memref<54x8x1xf32, #tpu.memory_space<vmem>>, vector<1x8x1xf32>
    %46 = vector.shape_cast %45 : vector<1x8x1xf32> to vector<8x1xf32>
    %47 = vector.broadcast %46 : vector<8x1xf32> to vector<8x1024xf32>
    %48 = arith.mulf %47, %44 : vector<8x1024xf32>
    %49 = arith.addf %33, %48 : vector<8x1024xf32>
    %c7 = arith.constant 7 : index
    %c0_40 = arith.constant 0 : index
    %c0_41 = arith.constant 0 : index
    %50 = vector.load %arg3[%c7, %c0_40, %c0_41] : memref<54x8x1xf32, #tpu.memory_space<vmem>>, vector<1x8x1xf32>
    %51 = vector.shape_cast %50 : vector<1x8x1xf32> to vector<8x1xf32>
    %52 = vector.broadcast %51 : vector<8x1xf32> to vector<8x1024xf32>
    %53 = arith.mulf %52, %44 : vector<8x1024xf32>
    %54 = arith.addf %38, %53 : vector<8x1024xf32>
    %c8 = arith.constant 8 : index
    %c0_42 = arith.constant 0 : index
    %c0_43 = arith.constant 0 : index
    %55 = vector.load %arg3[%c8, %c0_42, %c0_43] : memref<54x8x1xf32, #tpu.memory_space<vmem>>, vector<1x8x1xf32>
    %56 = vector.shape_cast %55 : vector<1x8x1xf32> to vector<8x1xf32>
    %57 = vector.broadcast %56 : vector<8x1xf32> to vector<8x1024xf32>
    %58 = arith.mulf %57, %44 : vector<8x1024xf32>
    %59 = arith.addf %43, %58 : vector<8x1024xf32>
    %c1_i32 = arith.constant 1 : i32
    %60 = tpu.dynamic_rotate %5 by %c1_i32 dim 1 : vector<8x1024xf32>, i32 -> vector<8x1024xf32>
    %c9 = arith.constant 9 : index
    %c0_44 = arith.constant 0 : index
    %c0_45 = arith.constant 0 : index
    %61 = vector.load %arg3[%c9, %c0_44, %c0_45] : memref<54x8x1xf32, #tpu.memory_space<vmem>>, vector<1x8x1xf32>
    %62 = vector.shape_cast %61 : vector<1x8x1xf32> to vector<8x1xf32>
    %63 = vector.broadcast %62 : vector<8x1xf32> to vector<8x1024xf32>
    %64 = arith.mulf %63, %60 : vector<8x1024xf32>
    %65 = arith.addf %49, %64 : vector<8x1024xf32>
    %c10 = arith.constant 10 : index
    %c0_46 = arith.constant 0 : index
    %c0_47 = arith.constant 0 : index
    %66 = vector.load %arg3[%c10, %c0_46, %c0_47] : memref<54x8x1xf32, #tpu.memory_space<vmem>>, vector<1x8x1xf32>
    %67 = vector.shape_cast %66 : vector<1x8x1xf32> to vector<8x1xf32>
    %68 = vector.broadcast %67 : vector<8x1xf32> to vector<8x1024xf32>
    %69 = arith.mulf %68, %60 : vector<8x1024xf32>
    %70 = arith.addf %54, %69 : vector<8x1024xf32>
    %c11 = arith.constant 11 : index
    %c0_48 = arith.constant 0 : index
    %c0_49 = arith.constant 0 : index
    %71 = vector.load %arg3[%c11, %c0_48, %c0_49] : memref<54x8x1xf32, #tpu.memory_space<vmem>>, vector<1x8x1xf32>
    %72 = vector.shape_cast %71 : vector<1x8x1xf32> to vector<8x1xf32>
    %73 = vector.broadcast %72 : vector<8x1xf32> to vector<8x1024xf32>
    %74 = arith.mulf %73, %60 : vector<8x1024xf32>
    %75 = arith.addf %59, %74 : vector<8x1024xf32>
    %c12 = arith.constant 12 : index
    %c0_50 = arith.constant 0 : index
    %c0_51 = arith.constant 0 : index
    %76 = vector.load %arg3[%c12, %c0_50, %c0_51] : memref<54x8x1xf32, #tpu.memory_space<vmem>>, vector<1x8x1xf32>
    %77 = vector.shape_cast %76 : vector<1x8x1xf32> to vector<8x1xf32>
    %78 = vector.broadcast %77 : vector<8x1xf32> to vector<8x1024xf32>
    %79 = arith.mulf %78, %5 : vector<8x1024xf32>
    %80 = arith.addf %65, %79 : vector<8x1024xf32>
    %c13 = arith.constant 13 : index
    %c0_52 = arith.constant 0 : index
    %c0_53 = arith.constant 0 : index
    %81 = vector.load %arg3[%c13, %c0_52, %c0_53] : memref<54x8x1xf32, #tpu.memory_space<vmem>>, vector<1x8x1xf32>
    %82 = vector.shape_cast %81 : vector<1x8x1xf32> to vector<8x1xf32>
    %83 = vector.broadcast %82 : vector<8x1xf32> to vector<8x1024xf32>
    %84 = arith.mulf %83, %5 : vector<8x1024xf32>
    %85 = arith.addf %70, %84 : vector<8x1024xf32>
    %c14 = arith.constant 14 : index
    %c0_54 = arith.constant 0 : index
    %c0_55 = arith.constant 0 : index
    %86 = vector.load %arg3[%c14, %c0_54, %c0_55] : memref<54x8x1xf32, #tpu.memory_space<vmem>>, vector<1x8x1xf32>
    %87 = vector.shape_cast %86 : vector<1x8x1xf32> to vector<8x1xf32>
    %88 = vector.broadcast %87 : vector<8x1xf32> to vector<8x1024xf32>
    %89 = arith.mulf %88, %5 : vector<8x1024xf32>
    %90 = arith.addf %75, %89 : vector<8x1024xf32>
    %c1023_i32 = arith.constant 1023 : i32
    %91 = tpu.dynamic_rotate %5 by %c1023_i32 dim 1 : vector<8x1024xf32>, i32 -> vector<8x1024xf32>
    %c15 = arith.constant 15 : index
    %c0_56 = arith.constant 0 : index
    %c0_57 = arith.constant 0 : index
    %92 = vector.load %arg3[%c15, %c0_56, %c0_57] : memref<54x8x1xf32, #tpu.memory_space<vmem>>, vector<1x8x1xf32>
    %93 = vector.shape_cast %92 : vector<1x8x1xf32> to vector<8x1xf32>
    %94 = vector.broadcast %93 : vector<8x1xf32> to vector<8x1024xf32>
    %95 = arith.mulf %94, %91 : vector<8x1024xf32>
    %96 = arith.addf %80, %95 : vector<8x1024xf32>
    %c16 = arith.constant 16 : index
    %c0_58 = arith.constant 0 : index
    %c0_59 = arith.constant 0 : index
    %97 = vector.load %arg3[%c16, %c0_58, %c0_59] : memref<54x8x1xf32, #tpu.memory_space<vmem>>, vector<1x8x1xf32>
    %98 = vector.shape_cast %97 : vector<1x8x1xf32> to vector<8x1xf32>
    %99 = vector.broadcast %98 : vector<8x1xf32> to vector<8x1024xf32>
    %100 = arith.mulf %99, %91 : vector<8x1024xf32>
    %101 = arith.addf %85, %100 : vector<8x1024xf32>
    %c17 = arith.constant 17 : index
    %c0_60 = arith.constant 0 : index
    %c0_61 = arith.constant 0 : index
    %102 = vector.load %arg3[%c17, %c0_60, %c0_61] : memref<54x8x1xf32, #tpu.memory_space<vmem>>, vector<1x8x1xf32>
    %103 = vector.shape_cast %102 : vector<1x8x1xf32> to vector<8x1xf32>
    %104 = vector.broadcast %103 : vector<8x1xf32> to vector<8x1024xf32>
    %105 = arith.mulf %104, %91 : vector<8x1024xf32>
    %106 = arith.addf %90, %105 : vector<8x1024xf32>
    %c995_i32 = arith.constant 995 : i32
    %107 = tpu.dynamic_rotate %5 by %c995_i32 dim 1 : vector<8x1024xf32>, i32 -> vector<8x1024xf32>
    %c18 = arith.constant 18 : index
    %c0_62 = arith.constant 0 : index
    %c0_63 = arith.constant 0 : index
    %108 = vector.load %arg3[%c18, %c0_62, %c0_63] : memref<54x8x1xf32, #tpu.memory_space<vmem>>, vector<1x8x1xf32>
    %109 = vector.shape_cast %108 : vector<1x8x1xf32> to vector<8x1xf32>
    %110 = vector.broadcast %109 : vector<8x1xf32> to vector<8x1024xf32>
    %111 = arith.mulf %110, %107 : vector<8x1024xf32>
    %112 = arith.addf %96, %111 : vector<8x1024xf32>
    %c19 = arith.constant 19 : index
    %c0_64 = arith.constant 0 : index
    %c0_65 = arith.constant 0 : index
    %113 = vector.load %arg3[%c19, %c0_64, %c0_65] : memref<54x8x1xf32, #tpu.memory_space<vmem>>, vector<1x8x1xf32>
    %114 = vector.shape_cast %113 : vector<1x8x1xf32> to vector<8x1xf32>
    %115 = vector.broadcast %114 : vector<8x1xf32> to vector<8x1024xf32>
    %116 = arith.mulf %115, %107 : vector<8x1024xf32>
    %117 = arith.addf %101, %116 : vector<8x1024xf32>
    %c20 = arith.constant 20 : index
    %c0_66 = arith.constant 0 : index
    %c0_67 = arith.constant 0 : index
    %118 = vector.load %arg3[%c20, %c0_66, %c0_67] : memref<54x8x1xf32, #tpu.memory_space<vmem>>, vector<1x8x1xf32>
    %119 = vector.shape_cast %118 : vector<1x8x1xf32> to vector<8x1xf32>
    %120 = vector.broadcast %119 : vector<8x1xf32> to vector<8x1024xf32>
    %121 = arith.mulf %120, %107 : vector<8x1024xf32>
    %122 = arith.addf %106, %121 : vector<8x1024xf32>
    %c994_i32 = arith.constant 994 : i32
    %123 = tpu.dynamic_rotate %5 by %c994_i32 dim 1 : vector<8x1024xf32>, i32 -> vector<8x1024xf32>
    %c21 = arith.constant 21 : index
    %c0_68 = arith.constant 0 : index
    %c0_69 = arith.constant 0 : index
    %124 = vector.load %arg3[%c21, %c0_68, %c0_69] : memref<54x8x1xf32, #tpu.memory_space<vmem>>, vector<1x8x1xf32>
    %125 = vector.shape_cast %124 : vector<1x8x1xf32> to vector<8x1xf32>
    %126 = vector.broadcast %125 : vector<8x1xf32> to vector<8x1024xf32>
    %127 = arith.mulf %126, %123 : vector<8x1024xf32>
    %128 = arith.addf %112, %127 : vector<8x1024xf32>
    %c22 = arith.constant 22 : index
    %c0_70 = arith.constant 0 : index
    %c0_71 = arith.constant 0 : index
    %129 = vector.load %arg3[%c22, %c0_70, %c0_71] : memref<54x8x1xf32, #tpu.memory_space<vmem>>, vector<1x8x1xf32>
    %130 = vector.shape_cast %129 : vector<1x8x1xf32> to vector<8x1xf32>
    %131 = vector.broadcast %130 : vector<8x1xf32> to vector<8x1024xf32>
    %132 = arith.mulf %131, %123 : vector<8x1024xf32>
    %133 = arith.addf %117, %132 : vector<8x1024xf32>
    %c23 = arith.constant 23 : index
    %c0_72 = arith.constant 0 : index
    %c0_73 = arith.constant 0 : index
    %134 = vector.load %arg3[%c23, %c0_72, %c0_73] : memref<54x8x1xf32, #tpu.memory_space<vmem>>, vector<1x8x1xf32>
    %135 = vector.shape_cast %134 : vector<1x8x1xf32> to vector<8x1xf32>
    %136 = vector.broadcast %135 : vector<8x1xf32> to vector<8x1024xf32>
    %137 = arith.mulf %136, %123 : vector<8x1024xf32>
    %138 = arith.addf %122, %137 : vector<8x1024xf32>
    %c993_i32 = arith.constant 993 : i32
    %139 = tpu.dynamic_rotate %5 by %c993_i32 dim 1 : vector<8x1024xf32>, i32 -> vector<8x1024xf32>
    %c24 = arith.constant 24 : index
    %c0_74 = arith.constant 0 : index
    %c0_75 = arith.constant 0 : index
    %140 = vector.load %arg3[%c24, %c0_74, %c0_75] : memref<54x8x1xf32, #tpu.memory_space<vmem>>, vector<1x8x1xf32>
    %141 = vector.shape_cast %140 : vector<1x8x1xf32> to vector<8x1xf32>
    %142 = vector.broadcast %141 : vector<8x1xf32> to vector<8x1024xf32>
    %143 = arith.mulf %142, %139 : vector<8x1024xf32>
    %144 = arith.addf %128, %143 : vector<8x1024xf32>
    %c25 = arith.constant 25 : index
    %c0_76 = arith.constant 0 : index
    %c0_77 = arith.constant 0 : index
    %145 = vector.load %arg3[%c25, %c0_76, %c0_77] : memref<54x8x1xf32, #tpu.memory_space<vmem>>, vector<1x8x1xf32>
    %146 = vector.shape_cast %145 : vector<1x8x1xf32> to vector<8x1xf32>
    %147 = vector.broadcast %146 : vector<8x1xf32> to vector<8x1024xf32>
    %148 = arith.mulf %147, %139 : vector<8x1024xf32>
    %149 = arith.addf %133, %148 : vector<8x1024xf32>
    %c26 = arith.constant 26 : index
    %c0_78 = arith.constant 0 : index
    %c0_79 = arith.constant 0 : index
    %150 = vector.load %arg3[%c26, %c0_78, %c0_79] : memref<54x8x1xf32, #tpu.memory_space<vmem>>, vector<1x8x1xf32>
    %151 = vector.shape_cast %150 : vector<1x8x1xf32> to vector<8x1xf32>
    %152 = vector.broadcast %151 : vector<8x1xf32> to vector<8x1024xf32>
    %153 = arith.mulf %152, %139 : vector<8x1024xf32>
    %154 = arith.addf %138, %153 : vector<8x1024xf32>
    %155 = vector.extract_strided_slice %144 {offsets = [0, 0], sizes = [2, 1024], strides = [1, 1]} : vector<8x1024xf32> to vector<2x1024xf32>
    %156 = vector.extract_strided_slice %144 {offsets = [2, 0], sizes = [2, 1024], strides = [1, 1]} : vector<8x1024xf32> to vector<2x1024xf32>
    %157 = arith.addf %155, %156 : vector<2x1024xf32>
    %158 = vector.extract_strided_slice %144 {offsets = [4, 0], sizes = [2, 1024], strides = [1, 1]} : vector<8x1024xf32> to vector<2x1024xf32>
    %159 = arith.addf %157, %158 : vector<2x1024xf32>
    %160 = vector.broadcast %6 : f32 to vector<2x1024xf32>
    %161 = arith.addf %159, %160 : vector<2x1024xf32>
    %cst_80 = arith.constant 1.000000e-01 : f32
    %162 = vector.broadcast %cst_80 : f32 to vector<2x1024xf32>
    %163 = arith.mulf %162, %161 : vector<2x1024xf32>
    %164 = arith.maximumf %161, %163 : vector<2x1024xf32>
    %165 = vector.extract_strided_slice %5 {offsets = [0, 0], sizes = [2, 1024], strides = [1, 1]} : vector<8x1024xf32> to vector<2x1024xf32>
    %166 = arith.addf %165, %164 : vector<2x1024xf32>
    %167 = vector.extract_strided_slice %149 {offsets = [0, 0], sizes = [2, 1024], strides = [1, 1]} : vector<8x1024xf32> to vector<2x1024xf32>
    %168 = vector.extract_strided_slice %149 {offsets = [2, 0], sizes = [2, 1024], strides = [1, 1]} : vector<8x1024xf32> to vector<2x1024xf32>
    %169 = arith.addf %167, %168 : vector<2x1024xf32>
    %170 = vector.extract_strided_slice %149 {offsets = [4, 0], sizes = [2, 1024], strides = [1, 1]} : vector<8x1024xf32> to vector<2x1024xf32>
    %171 = arith.addf %169, %170 : vector<2x1024xf32>
    %172 = vector.broadcast %7 : f32 to vector<2x1024xf32>
    %173 = arith.addf %171, %172 : vector<2x1024xf32>
    %cst_81 = arith.constant 1.000000e-01 : f32
    %174 = vector.broadcast %cst_81 : f32 to vector<2x1024xf32>
    %175 = arith.mulf %174, %173 : vector<2x1024xf32>
    %176 = arith.maximumf %173, %175 : vector<2x1024xf32>
    %177 = vector.extract_strided_slice %5 {offsets = [2, 0], sizes = [2, 1024], strides = [1, 1]} : vector<8x1024xf32> to vector<2x1024xf32>
    %178 = arith.addf %177, %176 : vector<2x1024xf32>
    %179 = vector.extract_strided_slice %154 {offsets = [0, 0], sizes = [2, 1024], strides = [1, 1]} : vector<8x1024xf32> to vector<2x1024xf32>
    %180 = vector.extract_strided_slice %154 {offsets = [2, 0], sizes = [2, 1024], strides = [1, 1]} : vector<8x1024xf32> to vector<2x1024xf32>
    %181 = arith.addf %179, %180 : vector<2x1024xf32>
    %182 = vector.extract_strided_slice %154 {offsets = [4, 0], sizes = [2, 1024], strides = [1, 1]} : vector<8x1024xf32> to vector<2x1024xf32>
    %183 = arith.addf %181, %182 : vector<2x1024xf32>
    %184 = vector.broadcast %8 : f32 to vector<2x1024xf32>
    %185 = arith.addf %183, %184 : vector<2x1024xf32>
    %cst_82 = arith.constant 1.000000e-01 : f32
    %186 = vector.broadcast %cst_82 : f32 to vector<2x1024xf32>
    %187 = arith.mulf %186, %185 : vector<2x1024xf32>
    %188 = arith.maximumf %185, %187 : vector<2x1024xf32>
    %189 = vector.extract_strided_slice %5 {offsets = [4, 0], sizes = [2, 1024], strides = [1, 1]} : vector<8x1024xf32> to vector<2x1024xf32>
    %190 = arith.addf %189, %188 : vector<2x1024xf32>
    %191 = tpu.concatenate %166, %178, %190, %1 in 0 : vector<2x1024xf32>, vector<2x1024xf32>, vector<2x1024xf32>, vector<2x1024xf32> -> vector<8x1024xf32>
    %192 = vector.broadcast %0 : vector<1x1024xf32> to vector<8x1024xf32>
    %193 = arith.mulf %191, %192 : vector<8x1024xf32>
    %cst_83 = arith.constant dense<0.000000e+00> : vector<8xf32>
    %194 = vector.multi_reduction <add>, %193, %cst_83 [1] : vector<8x1024xf32> to vector<8xf32>
    %195 = vector.shape_cast %194 : vector<8xf32> to vector<8x1xf32>
    %196 = arith.mulf %193, %193 : vector<8x1024xf32>
    %cst_84 = arith.constant dense<0.000000e+00> : vector<8xf32>
    %197 = vector.multi_reduction <add>, %196, %cst_84 [1] : vector<8x1024xf32> to vector<8xf32>
    %198 = vector.shape_cast %197 : vector<8xf32> to vector<8x1xf32>
    %199 = vector.extract_strided_slice %195 {offsets = [0, 0], sizes = [2, 1], strides = [1, 1]} : vector<8x1xf32> to vector<2x1xf32>
    %200 = vector.shape_cast %199 : vector<2x1xf32> to vector<1x2x1xf32>
    %cst_85 = arith.constant dense<0.000000e+00> : vector<1xf32>
    %201 = vector.multi_reduction <add>, %200, %cst_85 [1, 2] : vector<1x2x1xf32> to vector<1xf32>
    %202 = vector.shape_cast %201 : vector<1xf32> to vector<1x1x1xf32>
    %203 = vector.extract %202[0, 0, 0] : f32 from vector<1x1x1xf32>
    %204 = vector.extract_strided_slice %198 {offsets = [0, 0], sizes = [2, 1], strides = [1, 1]} : vector<8x1xf32> to vector<2x1xf32>
    %205 = vector.shape_cast %204 : vector<2x1xf32> to vector<1x2x1xf32>
    %cst_86 = arith.constant dense<0.000000e+00> : vector<1xf32>
    %206 = vector.multi_reduction <add>, %205, %cst_86 [1, 2] : vector<1x2x1xf32> to vector<1xf32>
    %207 = vector.shape_cast %206 : vector<1xf32> to vector<1x1x1xf32>
    %208 = vector.extract %207[0, 0, 0] : f32 from vector<1x1x1xf32>
    %cst_87 = arith.constant 1.352000e+03 : f32
    %209 = arith.divf %203, %cst_87 : f32
    %cst_88 = arith.constant 1.352000e+03 : f32
    %210 = arith.divf %208, %cst_88 : f32
    %211 = arith.mulf %209, %209 : f32
    %212 = arith.subf %210, %211 : f32
    %cst_89 = arith.constant 9.99999974E-6 : f32
    %213 = arith.addf %212, %cst_89 : f32
    %214 = math.rsqrt %213 : f32
    %215 = arith.mulf %9, %214 : f32
    %216 = arith.mulf %209, %215 : f32
    %217 = arith.subf %12, %216 : f32
    %218 = vector.broadcast %215 : f32 to vector<2x1xf32>
    %219 = vector.broadcast %217 : f32 to vector<2x1xf32>
    %220 = vector.extract_strided_slice %195 {offsets = [2, 0], sizes = [2, 1], strides = [1, 1]} : vector<8x1xf32> to vector<2x1xf32>
    %221 = vector.shape_cast %220 : vector<2x1xf32> to vector<1x2x1xf32>
    %cst_90 = arith.constant dense<0.000000e+00> : vector<1xf32>
    %222 = vector.multi_reduction <add>, %221, %cst_90 [1, 2] : vector<1x2x1xf32> to vector<1xf32>
    %223 = vector.shape_cast %222 : vector<1xf32> to vector<1x1x1xf32>
    %224 = vector.extract %223[0, 0, 0] : f32 from vector<1x1x1xf32>
    %225 = vector.extract_strided_slice %198 {offsets = [2, 0], sizes = [2, 1], strides = [1, 1]} : vector<8x1xf32> to vector<2x1xf32>
    %226 = vector.shape_cast %225 : vector<2x1xf32> to vector<1x2x1xf32>
    %cst_91 = arith.constant dense<0.000000e+00> : vector<1xf32>
    %227 = vector.multi_reduction <add>, %226, %cst_91 [1, 2] : vector<1x2x1xf32> to vector<1xf32>
    %228 = vector.shape_cast %227 : vector<1xf32> to vector<1x1x1xf32>
    %229 = vector.extract %228[0, 0, 0] : f32 from vector<1x1x1xf32>
    %cst_92 = arith.constant 1.352000e+03 : f32
    %230 = arith.divf %224, %cst_92 : f32
    %cst_93 = arith.constant 1.352000e+03 : f32
    %231 = arith.divf %229, %cst_93 : f32
    %232 = arith.mulf %230, %230 : f32
    %233 = arith.subf %231, %232 : f32
    %cst_94 = arith.constant 9.99999974E-6 : f32
    %234 = arith.addf %233, %cst_94 : f32
    %235 = math.rsqrt %234 : f32
    %236 = arith.mulf %10, %235 : f32
    %237 = arith.mulf %230, %236 : f32
    %238 = arith.subf %13, %237 : f32
    %239 = vector.broadcast %236 : f32 to vector<2x1xf32>
    %240 = vector.broadcast %238 : f32 to vector<2x1xf32>
    %241 = vector.extract_strided_slice %195 {offsets = [4, 0], sizes = [2, 1], strides = [1, 1]} : vector<8x1xf32> to vector<2x1xf32>
    %242 = vector.shape_cast %241 : vector<2x1xf32> to vector<1x2x1xf32>
    %cst_95 = arith.constant dense<0.000000e+00> : vector<1xf32>
    %243 = vector.multi_reduction <add>, %242, %cst_95 [1, 2] : vector<1x2x1xf32> to vector<1xf32>
    %244 = vector.shape_cast %243 : vector<1xf32> to vector<1x1x1xf32>
    %245 = vector.extract %244[0, 0, 0] : f32 from vector<1x1x1xf32>
    %246 = vector.extract_strided_slice %198 {offsets = [4, 0], sizes = [2, 1], strides = [1, 1]} : vector<8x1xf32> to vector<2x1xf32>
    %247 = vector.shape_cast %246 : vector<2x1xf32> to vector<1x2x1xf32>
    %cst_96 = arith.constant dense<0.000000e+00> : vector<1xf32>
    %248 = vector.multi_reduction <add>, %247, %cst_96 [1, 2] : vector<1x2x1xf32> to vector<1xf32>
    %249 = vector.shape_cast %248 : vector<1xf32> to vector<1x1x1xf32>
    %250 = vector.extract %249[0, 0, 0] : f32 from vector<1x1x1xf32>
    %cst_97 = arith.constant 1.352000e+03 : f32
    %251 = arith.divf %245, %cst_97 : f32
    %cst_98 = arith.constant 1.352000e+03 : f32
    %252 = arith.divf %250, %cst_98 : f32
    %253 = arith.mulf %251, %251 : f32
    %254 = arith.subf %252, %253 : f32
    %cst_99 = arith.constant 9.99999974E-6 : f32
    %255 = arith.addf %254, %cst_99 : f32
    %256 = math.rsqrt %255 : f32
    %257 = arith.mulf %11, %256 : f32
    %258 = arith.mulf %251, %257 : f32
    %259 = arith.subf %14, %258 : f32
    %260 = vector.broadcast %257 : f32 to vector<2x1xf32>
    %261 = vector.broadcast %259 : f32 to vector<2x1xf32>
    %262 = tpu.concatenate %218, %239, %260, %2 in 0 : vector<2x1xf32>, vector<2x1xf32>, vector<2x1xf32>, vector<2x1xf32> -> vector<8x1xf32>
    %263 = tpu.concatenate %219, %240, %261, %2 in 0 : vector<2x1xf32>, vector<2x1xf32>, vector<2x1xf32>, vector<2x1xf32> -> vector<8x1xf32>
    %264 = vector.broadcast %262 : vector<8x1xf32> to vector<8x1024xf32>
    %265 = arith.mulf %191, %264 : vector<8x1024xf32>
    %266 = vector.broadcast %263 : vector<8x1xf32> to vector<8x1024xf32>
    %267 = arith.addf %265, %266 : vector<8x1024xf32>
    %268 = vector.broadcast %0 : vector<1x1024xf32> to vector<8x1024xf32>
    %269 = arith.mulf %267, %268 : vector<8x1024xf32>
    %c1_100 = arith.constant 1 : index
    %c0_101 = arith.constant 0 : index
    %270 = memref.load %arg5[%c1_100, %c0_101] : memref<2x3xf32, #tpu.memory_space<smem>>
    %c1_102 = arith.constant 1 : index
    %c1_103 = arith.constant 1 : index
    %271 = memref.load %arg5[%c1_102, %c1_103] : memref<2x3xf32, #tpu.memory_space<smem>>
    %c1_104 = arith.constant 1 : index
    %c2_105 = arith.constant 2 : index
    %272 = memref.load %arg5[%c1_104, %c2_105] : memref<2x3xf32, #tpu.memory_space<smem>>
    %c1_106 = arith.constant 1 : index
    %c0_107 = arith.constant 0 : index
    %273 = memref.load %arg6[%c1_106, %c0_107] : memref<2x3xf32, #tpu.memory_space<smem>>
    %c1_108 = arith.constant 1 : index
    %c1_109 = arith.constant 1 : index
    %274 = memref.load %arg6[%c1_108, %c1_109] : memref<2x3xf32, #tpu.memory_space<smem>>
    %c1_110 = arith.constant 1 : index
    %c2_111 = arith.constant 2 : index
    %275 = memref.load %arg6[%c1_110, %c2_111] : memref<2x3xf32, #tpu.memory_space<smem>>
    %c1_112 = arith.constant 1 : index
    %c0_113 = arith.constant 0 : index
    %276 = memref.load %arg7[%c1_112, %c0_113] : memref<2x3xf32, #tpu.memory_space<smem>>
    %c1_114 = arith.constant 1 : index
    %c1_115 = arith.constant 1 : index
    %277 = memref.load %arg7[%c1_114, %c1_115] : memref<2x3xf32, #tpu.memory_space<smem>>
    %c1_116 = arith.constant 1 : index
    %c2_117 = arith.constant 2 : index
    %278 = memref.load %arg7[%c1_116, %c2_117] : memref<2x3xf32, #tpu.memory_space<smem>>
    %c31_i32_118 = arith.constant 31 : i32
    %279 = tpu.dynamic_rotate %269 by %c31_i32_118 dim 1 : vector<8x1024xf32>, i32 -> vector<8x1024xf32>
    %c27 = arith.constant 27 : index
    %c0_119 = arith.constant 0 : index
    %c0_120 = arith.constant 0 : index
    %280 = vector.load %arg3[%c27, %c0_119, %c0_120] : memref<54x8x1xf32, #tpu.memory_space<vmem>>, vector<1x8x1xf32>
    %281 = vector.shape_cast %280 : vector<1x8x1xf32> to vector<8x1xf32>
    %282 = vector.broadcast %281 : vector<8x1xf32> to vector<8x1024xf32>
    %283 = arith.mulf %282, %279 : vector<8x1024xf32>
    %c28 = arith.constant 28 : index
    %c0_121 = arith.constant 0 : index
    %c0_122 = arith.constant 0 : index
    %284 = vector.load %arg3[%c28, %c0_121, %c0_122] : memref<54x8x1xf32, #tpu.memory_space<vmem>>, vector<1x8x1xf32>
    %285 = vector.shape_cast %284 : vector<1x8x1xf32> to vector<8x1xf32>
    %286 = vector.broadcast %285 : vector<8x1xf32> to vector<8x1024xf32>
    %287 = arith.mulf %286, %279 : vector<8x1024xf32>
    %c29 = arith.constant 29 : index
    %c0_123 = arith.constant 0 : index
    %c0_124 = arith.constant 0 : index
    %288 = vector.load %arg3[%c29, %c0_123, %c0_124] : memref<54x8x1xf32, #tpu.memory_space<vmem>>, vector<1x8x1xf32>
    %289 = vector.shape_cast %288 : vector<1x8x1xf32> to vector<8x1xf32>
    %290 = vector.broadcast %289 : vector<8x1xf32> to vector<8x1024xf32>
    %291 = arith.mulf %290, %279 : vector<8x1024xf32>
    %c30_i32_125 = arith.constant 30 : i32
    %292 = tpu.dynamic_rotate %269 by %c30_i32_125 dim 1 : vector<8x1024xf32>, i32 -> vector<8x1024xf32>
    %c30 = arith.constant 30 : index
    %c0_126 = arith.constant 0 : index
    %c0_127 = arith.constant 0 : index
    %293 = vector.load %arg3[%c30, %c0_126, %c0_127] : memref<54x8x1xf32, #tpu.memory_space<vmem>>, vector<1x8x1xf32>
    %294 = vector.shape_cast %293 : vector<1x8x1xf32> to vector<8x1xf32>
    %295 = vector.broadcast %294 : vector<8x1xf32> to vector<8x1024xf32>
    %296 = arith.mulf %295, %292 : vector<8x1024xf32>
    %297 = arith.addf %283, %296 : vector<8x1024xf32>
    %c31 = arith.constant 31 : index
    %c0_128 = arith.constant 0 : index
    %c0_129 = arith.constant 0 : index
    %298 = vector.load %arg3[%c31, %c0_128, %c0_129] : memref<54x8x1xf32, #tpu.memory_space<vmem>>, vector<1x8x1xf32>
    %299 = vector.shape_cast %298 : vector<1x8x1xf32> to vector<8x1xf32>
    %300 = vector.broadcast %299 : vector<8x1xf32> to vector<8x1024xf32>
    %301 = arith.mulf %300, %292 : vector<8x1024xf32>
    %302 = arith.addf %287, %301 : vector<8x1024xf32>
    %c32 = arith.constant 32 : index
    %c0_130 = arith.constant 0 : index
    %c0_131 = arith.constant 0 : index
    %303 = vector.load %arg3[%c32, %c0_130, %c0_131] : memref<54x8x1xf32, #tpu.memory_space<vmem>>, vector<1x8x1xf32>
    %304 = vector.shape_cast %303 : vector<1x8x1xf32> to vector<8x1xf32>
    %305 = vector.broadcast %304 : vector<8x1xf32> to vector<8x1024xf32>
    %306 = arith.mulf %305, %292 : vector<8x1024xf32>
    %307 = arith.addf %291, %306 : vector<8x1024xf32>
    %c29_i32_132 = arith.constant 29 : i32
    %308 = tpu.dynamic_rotate %269 by %c29_i32_132 dim 1 : vector<8x1024xf32>, i32 -> vector<8x1024xf32>
    %c33 = arith.constant 33 : index
    %c0_133 = arith.constant 0 : index
    %c0_134 = arith.constant 0 : index
    %309 = vector.load %arg3[%c33, %c0_133, %c0_134] : memref<54x8x1xf32, #tpu.memory_space<vmem>>, vector<1x8x1xf32>
    %310 = vector.shape_cast %309 : vector<1x8x1xf32> to vector<8x1xf32>
    %311 = vector.broadcast %310 : vector<8x1xf32> to vector<8x1024xf32>
    %312 = arith.mulf %311, %308 : vector<8x1024xf32>
    %313 = arith.addf %297, %312 : vector<8x1024xf32>
    %c34 = arith.constant 34 : index
    %c0_135 = arith.constant 0 : index
    %c0_136 = arith.constant 0 : index
    %314 = vector.load %arg3[%c34, %c0_135, %c0_136] : memref<54x8x1xf32, #tpu.memory_space<vmem>>, vector<1x8x1xf32>
    %315 = vector.shape_cast %314 : vector<1x8x1xf32> to vector<8x1xf32>
    %316 = vector.broadcast %315 : vector<8x1xf32> to vector<8x1024xf32>
    %317 = arith.mulf %316, %308 : vector<8x1024xf32>
    %318 = arith.addf %302, %317 : vector<8x1024xf32>
    %c35 = arith.constant 35 : index
    %c0_137 = arith.constant 0 : index
    %c0_138 = arith.constant 0 : index
    %319 = vector.load %arg3[%c35, %c0_137, %c0_138] : memref<54x8x1xf32, #tpu.memory_space<vmem>>, vector<1x8x1xf32>
    %320 = vector.shape_cast %319 : vector<1x8x1xf32> to vector<8x1xf32>
    %321 = vector.broadcast %320 : vector<8x1xf32> to vector<8x1024xf32>
    %322 = arith.mulf %321, %308 : vector<8x1024xf32>
    %323 = arith.addf %307, %322 : vector<8x1024xf32>
    %c1_i32_139 = arith.constant 1 : i32
    %324 = tpu.dynamic_rotate %269 by %c1_i32_139 dim 1 : vector<8x1024xf32>, i32 -> vector<8x1024xf32>
    %c36 = arith.constant 36 : index
    %c0_140 = arith.constant 0 : index
    %c0_141 = arith.constant 0 : index
    %325 = vector.load %arg3[%c36, %c0_140, %c0_141] : memref<54x8x1xf32, #tpu.memory_space<vmem>>, vector<1x8x1xf32>
    %326 = vector.shape_cast %325 : vector<1x8x1xf32> to vector<8x1xf32>
    %327 = vector.broadcast %326 : vector<8x1xf32> to vector<8x1024xf32>
    %328 = arith.mulf %327, %324 : vector<8x1024xf32>
    %329 = arith.addf %313, %328 : vector<8x1024xf32>
    %c37 = arith.constant 37 : index
    %c0_142 = arith.constant 0 : index
    %c0_143 = arith.constant 0 : index
    %330 = vector.load %arg3[%c37, %c0_142, %c0_143] : memref<54x8x1xf32, #tpu.memory_space<vmem>>, vector<1x8x1xf32>
    %331 = vector.shape_cast %330 : vector<1x8x1xf32> to vector<8x1xf32>
    %332 = vector.broadcast %331 : vector<8x1xf32> to vector<8x1024xf32>
    %333 = arith.mulf %332, %324 : vector<8x1024xf32>
    %334 = arith.addf %318, %333 : vector<8x1024xf32>
    %c38 = arith.constant 38 : index
    %c0_144 = arith.constant 0 : index
    %c0_145 = arith.constant 0 : index
    %335 = vector.load %arg3[%c38, %c0_144, %c0_145] : memref<54x8x1xf32, #tpu.memory_space<vmem>>, vector<1x8x1xf32>
    %336 = vector.shape_cast %335 : vector<1x8x1xf32> to vector<8x1xf32>
    %337 = vector.broadcast %336 : vector<8x1xf32> to vector<8x1024xf32>
    %338 = arith.mulf %337, %324 : vector<8x1024xf32>
    %339 = arith.addf %323, %338 : vector<8x1024xf32>
    %c39 = arith.constant 39 : index
    %c0_146 = arith.constant 0 : index
    %c0_147 = arith.constant 0 : index
    %340 = vector.load %arg3[%c39, %c0_146, %c0_147] : memref<54x8x1xf32, #tpu.memory_space<vmem>>, vector<1x8x1xf32>
    %341 = vector.shape_cast %340 : vector<1x8x1xf32> to vector<8x1xf32>
    %342 = vector.broadcast %341 : vector<8x1xf32> to vector<8x1024xf32>
    %343 = arith.mulf %342, %269 : vector<8x1024xf32>
    %344 = arith.addf %329, %343 : vector<8x1024xf32>
    %c40 = arith.constant 40 : index
    %c0_148 = arith.constant 0 : index
    %c0_149 = arith.constant 0 : index
    %345 = vector.load %arg3[%c40, %c0_148, %c0_149] : memref<54x8x1xf32, #tpu.memory_space<vmem>>, vector<1x8x1xf32>
    %346 = vector.shape_cast %345 : vector<1x8x1xf32> to vector<8x1xf32>
    %347 = vector.broadcast %346 : vector<8x1xf32> to vector<8x1024xf32>
    %348 = arith.mulf %347, %269 : vector<8x1024xf32>
    %349 = arith.addf %334, %348 : vector<8x1024xf32>
    %c41 = arith.constant 41 : index
    %c0_150 = arith.constant 0 : index
    %c0_151 = arith.constant 0 : index
    %350 = vector.load %arg3[%c41, %c0_150, %c0_151] : memref<54x8x1xf32, #tpu.memory_space<vmem>>, vector<1x8x1xf32>
    %351 = vector.shape_cast %350 : vector<1x8x1xf32> to vector<8x1xf32>
    %352 = vector.broadcast %351 : vector<8x1xf32> to vector<8x1024xf32>
    %353 = arith.mulf %352, %269 : vector<8x1024xf32>
    %354 = arith.addf %339, %353 : vector<8x1024xf32>
    %c1023_i32_152 = arith.constant 1023 : i32
    %355 = tpu.dynamic_rotate %269 by %c1023_i32_152 dim 1 : vector<8x1024xf32>, i32 -> vector<8x1024xf32>
    %c42 = arith.constant 42 : index
    %c0_153 = arith.constant 0 : index
    %c0_154 = arith.constant 0 : index
    %356 = vector.load %arg3[%c42, %c0_153, %c0_154] : memref<54x8x1xf32, #tpu.memory_space<vmem>>, vector<1x8x1xf32>
    %357 = vector.shape_cast %356 : vector<1x8x1xf32> to vector<8x1xf32>
    %358 = vector.broadcast %357 : vector<8x1xf32> to vector<8x1024xf32>
    %359 = arith.mulf %358, %355 : vector<8x1024xf32>
    %360 = arith.addf %344, %359 : vector<8x1024xf32>
    %c43 = arith.constant 43 : index
    %c0_155 = arith.constant 0 : index
    %c0_156 = arith.constant 0 : index
    %361 = vector.load %arg3[%c43, %c0_155, %c0_156] : memref<54x8x1xf32, #tpu.memory_space<vmem>>, vector<1x8x1xf32>
    %362 = vector.shape_cast %361 : vector<1x8x1xf32> to vector<8x1xf32>
    %363 = vector.broadcast %362 : vector<8x1xf32> to vector<8x1024xf32>
    %364 = arith.mulf %363, %355 : vector<8x1024xf32>
    %365 = arith.addf %349, %364 : vector<8x1024xf32>
    %c44 = arith.constant 44 : index
    %c0_157 = arith.constant 0 : index
    %c0_158 = arith.constant 0 : index
    %366 = vector.load %arg3[%c44, %c0_157, %c0_158] : memref<54x8x1xf32, #tpu.memory_space<vmem>>, vector<1x8x1xf32>
    %367 = vector.shape_cast %366 : vector<1x8x1xf32> to vector<8x1xf32>
    %368 = vector.broadcast %367 : vector<8x1xf32> to vector<8x1024xf32>
    %369 = arith.mulf %368, %355 : vector<8x1024xf32>
    %370 = arith.addf %354, %369 : vector<8x1024xf32>
    %c995_i32_159 = arith.constant 995 : i32
    %371 = tpu.dynamic_rotate %269 by %c995_i32_159 dim 1 : vector<8x1024xf32>, i32 -> vector<8x1024xf32>
    %c45 = arith.constant 45 : index
    %c0_160 = arith.constant 0 : index
    %c0_161 = arith.constant 0 : index
    %372 = vector.load %arg3[%c45, %c0_160, %c0_161] : memref<54x8x1xf32, #tpu.memory_space<vmem>>, vector<1x8x1xf32>
    %373 = vector.shape_cast %372 : vector<1x8x1xf32> to vector<8x1xf32>
    %374 = vector.broadcast %373 : vector<8x1xf32> to vector<8x1024xf32>
    %375 = arith.mulf %374, %371 : vector<8x1024xf32>
    %376 = arith.addf %360, %375 : vector<8x1024xf32>
    %c46 = arith.constant 46 : index
    %c0_162 = arith.constant 0 : index
    %c0_163 = arith.constant 0 : index
    %377 = vector.load %arg3[%c46, %c0_162, %c0_163] : memref<54x8x1xf32, #tpu.memory_space<vmem>>, vector<1x8x1xf32>
    %378 = vector.shape_cast %377 : vector<1x8x1xf32> to vector<8x1xf32>
    %379 = vector.broadcast %378 : vector<8x1xf32> to vector<8x1024xf32>
    %380 = arith.mulf %379, %371 : vector<8x1024xf32>
    %381 = arith.addf %365, %380 : vector<8x1024xf32>
    %c47 = arith.constant 47 : index
    %c0_164 = arith.constant 0 : index
    %c0_165 = arith.constant 0 : index
    %382 = vector.load %arg3[%c47, %c0_164, %c0_165] : memref<54x8x1xf32, #tpu.memory_space<vmem>>, vector<1x8x1xf32>
    %383 = vector.shape_cast %382 : vector<1x8x1xf32> to vector<8x1xf32>
    %384 = vector.broadcast %383 : vector<8x1xf32> to vector<8x1024xf32>
    %385 = arith.mulf %384, %371 : vector<8x1024xf32>
    %386 = arith.addf %370, %385 : vector<8x1024xf32>
    %c994_i32_166 = arith.constant 994 : i32
    %387 = tpu.dynamic_rotate %269 by %c994_i32_166 dim 1 : vector<8x1024xf32>, i32 -> vector<8x1024xf32>
    %c48 = arith.constant 48 : index
    %c0_167 = arith.constant 0 : index
    %c0_168 = arith.constant 0 : index
    %388 = vector.load %arg3[%c48, %c0_167, %c0_168] : memref<54x8x1xf32, #tpu.memory_space<vmem>>, vector<1x8x1xf32>
    %389 = vector.shape_cast %388 : vector<1x8x1xf32> to vector<8x1xf32>
    %390 = vector.broadcast %389 : vector<8x1xf32> to vector<8x1024xf32>
    %391 = arith.mulf %390, %387 : vector<8x1024xf32>
    %392 = arith.addf %376, %391 : vector<8x1024xf32>
    %c49 = arith.constant 49 : index
    %c0_169 = arith.constant 0 : index
    %c0_170 = arith.constant 0 : index
    %393 = vector.load %arg3[%c49, %c0_169, %c0_170] : memref<54x8x1xf32, #tpu.memory_space<vmem>>, vector<1x8x1xf32>
    %394 = vector.shape_cast %393 : vector<1x8x1xf32> to vector<8x1xf32>
    %395 = vector.broadcast %394 : vector<8x1xf32> to vector<8x1024xf32>
    %396 = arith.mulf %395, %387 : vector<8x1024xf32>
    %397 = arith.addf %381, %396 : vector<8x1024xf32>
    %c50 = arith.constant 50 : index
    %c0_171 = arith.constant 0 : index
    %c0_172 = arith.constant 0 : index
    %398 = vector.load %arg3[%c50, %c0_171, %c0_172] : memref<54x8x1xf32, #tpu.memory_space<vmem>>, vector<1x8x1xf32>
    %399 = vector.shape_cast %398 : vector<1x8x1xf32> to vector<8x1xf32>
    %400 = vector.broadcast %399 : vector<8x1xf32> to vector<8x1024xf32>
    %401 = arith.mulf %400, %387 : vector<8x1024xf32>
    %402 = arith.addf %386, %401 : vector<8x1024xf32>
    %c993_i32_173 = arith.constant 993 : i32
    %403 = tpu.dynamic_rotate %269 by %c993_i32_173 dim 1 : vector<8x1024xf32>, i32 -> vector<8x1024xf32>
    %c51 = arith.constant 51 : index
    %c0_174 = arith.constant 0 : index
    %c0_175 = arith.constant 0 : index
    %404 = vector.load %arg3[%c51, %c0_174, %c0_175] : memref<54x8x1xf32, #tpu.memory_space<vmem>>, vector<1x8x1xf32>
    %405 = vector.shape_cast %404 : vector<1x8x1xf32> to vector<8x1xf32>
    %406 = vector.broadcast %405 : vector<8x1xf32> to vector<8x1024xf32>
    %407 = arith.mulf %406, %403 : vector<8x1024xf32>
    %408 = arith.addf %392, %407 : vector<8x1024xf32>
    %c52 = arith.constant 52 : index
    %c0_176 = arith.constant 0 : index
    %c0_177 = arith.constant 0 : index
    %409 = vector.load %arg3[%c52, %c0_176, %c0_177] : memref<54x8x1xf32, #tpu.memory_space<vmem>>, vector<1x8x1xf32>
    %410 = vector.shape_cast %409 : vector<1x8x1xf32> to vector<8x1xf32>
    %411 = vector.broadcast %410 : vector<8x1xf32> to vector<8x1024xf32>
    %412 = arith.mulf %411, %403 : vector<8x1024xf32>
    %413 = arith.addf %397, %412 : vector<8x1024xf32>
    %c53 = arith.constant 53 : index
    %c0_178 = arith.constant 0 : index
    %c0_179 = arith.constant 0 : index
    %414 = vector.load %arg3[%c53, %c0_178, %c0_179] : memref<54x8x1xf32, #tpu.memory_space<vmem>>, vector<1x8x1xf32>
    %415 = vector.shape_cast %414 : vector<1x8x1xf32> to vector<8x1xf32>
    %416 = vector.broadcast %415 : vector<8x1xf32> to vector<8x1024xf32>
    %417 = arith.mulf %416, %403 : vector<8x1024xf32>
    %418 = arith.addf %402, %417 : vector<8x1024xf32>
    %419 = vector.extract_strided_slice %408 {offsets = [0, 0], sizes = [2, 1024], strides = [1, 1]} : vector<8x1024xf32> to vector<2x1024xf32>
    %420 = vector.extract_strided_slice %408 {offsets = [2, 0], sizes = [2, 1024], strides = [1, 1]} : vector<8x1024xf32> to vector<2x1024xf32>
    %421 = arith.addf %419, %420 : vector<2x1024xf32>
    %422 = vector.extract_strided_slice %408 {offsets = [4, 0], sizes = [2, 1024], strides = [1, 1]} : vector<8x1024xf32> to vector<2x1024xf32>
    %423 = arith.addf %421, %422 : vector<2x1024xf32>
    %424 = vector.broadcast %270 : f32 to vector<2x1024xf32>
    %425 = arith.addf %423, %424 : vector<2x1024xf32>
    %cst_180 = arith.constant 1.000000e-01 : f32
    %426 = vector.broadcast %cst_180 : f32 to vector<2x1024xf32>
    %427 = arith.mulf %426, %425 : vector<2x1024xf32>
    %428 = arith.maximumf %425, %427 : vector<2x1024xf32>
    %429 = vector.extract_strided_slice %269 {offsets = [0, 0], sizes = [2, 1024], strides = [1, 1]} : vector<8x1024xf32> to vector<2x1024xf32>
    %430 = arith.addf %429, %428 : vector<2x1024xf32>
    %431 = vector.extract_strided_slice %413 {offsets = [0, 0], sizes = [2, 1024], strides = [1, 1]} : vector<8x1024xf32> to vector<2x1024xf32>
    %432 = vector.extract_strided_slice %413 {offsets = [2, 0], sizes = [2, 1024], strides = [1, 1]} : vector<8x1024xf32> to vector<2x1024xf32>
    %433 = arith.addf %431, %432 : vector<2x1024xf32>
    %434 = vector.extract_strided_slice %413 {offsets = [4, 0], sizes = [2, 1024], strides = [1, 1]} : vector<8x1024xf32> to vector<2x1024xf32>
    %435 = arith.addf %433, %434 : vector<2x1024xf32>
    %436 = vector.broadcast %271 : f32 to vector<2x1024xf32>
    %437 = arith.addf %435, %436 : vector<2x1024xf32>
    %cst_181 = arith.constant 1.000000e-01 : f32
    %438 = vector.broadcast %cst_181 : f32 to vector<2x1024xf32>
    %439 = arith.mulf %438, %437 : vector<2x1024xf32>
    %440 = arith.maximumf %437, %439 : vector<2x1024xf32>
    %441 = vector.extract_strided_slice %269 {offsets = [2, 0], sizes = [2, 1024], strides = [1, 1]} : vector<8x1024xf32> to vector<2x1024xf32>
    %442 = arith.addf %441, %440 : vector<2x1024xf32>
    %443 = vector.extract_strided_slice %418 {offsets = [0, 0], sizes = [2, 1024], strides = [1, 1]} : vector<8x1024xf32> to vector<2x1024xf32>
    %444 = vector.extract_strided_slice %418 {offsets = [2, 0], sizes = [2, 1024], strides = [1, 1]} : vector<8x1024xf32> to vector<2x1024xf32>
    %445 = arith.addf %443, %444 : vector<2x1024xf32>
    %446 = vector.extract_strided_slice %418 {offsets = [4, 0], sizes = [2, 1024], strides = [1, 1]} : vector<8x1024xf32> to vector<2x1024xf32>
    %447 = arith.addf %445, %446 : vector<2x1024xf32>
    %448 = vector.broadcast %272 : f32 to vector<2x1024xf32>
    %449 = arith.addf %447, %448 : vector<2x1024xf32>
    %cst_182 = arith.constant 1.000000e-01 : f32
    %450 = vector.broadcast %cst_182 : f32 to vector<2x1024xf32>
    %451 = arith.mulf %450, %449 : vector<2x1024xf32>
    %452 = arith.maximumf %449, %451 : vector<2x1024xf32>
    %453 = vector.extract_strided_slice %269 {offsets = [4, 0], sizes = [2, 1024], strides = [1, 1]} : vector<8x1024xf32> to vector<2x1024xf32>
    %454 = arith.addf %453, %452 : vector<2x1024xf32>
    %455 = tpu.concatenate %430, %442, %454, %1 in 0 : vector<2x1024xf32>, vector<2x1024xf32>, vector<2x1024xf32>, vector<2x1024xf32> -> vector<8x1024xf32>
    %456 = vector.broadcast %0 : vector<1x1024xf32> to vector<8x1024xf32>
    %457 = arith.mulf %455, %456 : vector<8x1024xf32>
    %cst_183 = arith.constant dense<0.000000e+00> : vector<8xf32>
    %458 = vector.multi_reduction <add>, %457, %cst_183 [1] : vector<8x1024xf32> to vector<8xf32>
    %459 = vector.shape_cast %458 : vector<8xf32> to vector<8x1xf32>
    %460 = arith.mulf %457, %457 : vector<8x1024xf32>
    %cst_184 = arith.constant dense<0.000000e+00> : vector<8xf32>
    %461 = vector.multi_reduction <add>, %460, %cst_184 [1] : vector<8x1024xf32> to vector<8xf32>
    %462 = vector.shape_cast %461 : vector<8xf32> to vector<8x1xf32>
    %463 = vector.extract_strided_slice %459 {offsets = [0, 0], sizes = [2, 1], strides = [1, 1]} : vector<8x1xf32> to vector<2x1xf32>
    %464 = vector.shape_cast %463 : vector<2x1xf32> to vector<1x2x1xf32>
    %cst_185 = arith.constant dense<0.000000e+00> : vector<1xf32>
    %465 = vector.multi_reduction <add>, %464, %cst_185 [1, 2] : vector<1x2x1xf32> to vector<1xf32>
    %466 = vector.shape_cast %465 : vector<1xf32> to vector<1x1x1xf32>
    %467 = vector.extract %466[0, 0, 0] : f32 from vector<1x1x1xf32>
    %468 = vector.extract_strided_slice %462 {offsets = [0, 0], sizes = [2, 1], strides = [1, 1]} : vector<8x1xf32> to vector<2x1xf32>
    %469 = vector.shape_cast %468 : vector<2x1xf32> to vector<1x2x1xf32>
    %cst_186 = arith.constant dense<0.000000e+00> : vector<1xf32>
    %470 = vector.multi_reduction <add>, %469, %cst_186 [1, 2] : vector<1x2x1xf32> to vector<1xf32>
    %471 = vector.shape_cast %470 : vector<1xf32> to vector<1x1x1xf32>
    %472 = vector.extract %471[0, 0, 0] : f32 from vector<1x1x1xf32>
    %cst_187 = arith.constant 1.352000e+03 : f32
    %473 = arith.divf %467, %cst_187 : f32
    %cst_188 = arith.constant 1.352000e+03 : f32
    %474 = arith.divf %472, %cst_188 : f32
    %475 = arith.mulf %473, %473 : f32
    %476 = arith.subf %474, %475 : f32
    %cst_189 = arith.constant 9.99999974E-6 : f32
    %477 = arith.addf %476, %cst_189 : f32
    %478 = math.rsqrt %477 : f32
    %479 = arith.mulf %273, %478 : f32
    %480 = arith.mulf %473, %479 : f32
    %481 = arith.subf %276, %480 : f32
    %482 = vector.broadcast %479 : f32 to vector<2x1xf32>
    %483 = vector.broadcast %481 : f32 to vector<2x1xf32>
    %484 = vector.extract_strided_slice %459 {offsets = [2, 0], sizes = [2, 1], strides = [1, 1]} : vector<8x1xf32> to vector<2x1xf32>
    %485 = vector.shape_cast %484 : vector<2x1xf32> to vector<1x2x1xf32>
    %cst_190 = arith.constant dense<0.000000e+00> : vector<1xf32>
    %486 = vector.multi_reduction <add>, %485, %cst_190 [1, 2] : vector<1x2x1xf32> to vector<1xf32>
    %487 = vector.shape_cast %486 : vector<1xf32> to vector<1x1x1xf32>
    %488 = vector.extract %487[0, 0, 0] : f32 from vector<1x1x1xf32>
    %489 = vector.extract_strided_slice %462 {offsets = [2, 0], sizes = [2, 1], strides = [1, 1]} : vector<8x1xf32> to vector<2x1xf32>
    %490 = vector.shape_cast %489 : vector<2x1xf32> to vector<1x2x1xf32>
    %cst_191 = arith.constant dense<0.000000e+00> : vector<1xf32>
    %491 = vector.multi_reduction <add>, %490, %cst_191 [1, 2] : vector<1x2x1xf32> to vector<1xf32>
    %492 = vector.shape_cast %491 : vector<1xf32> to vector<1x1x1xf32>
    %493 = vector.extract %492[0, 0, 0] : f32 from vector<1x1x1xf32>
    %cst_192 = arith.constant 1.352000e+03 : f32
    %494 = arith.divf %488, %cst_192 : f32
    %cst_193 = arith.constant 1.352000e+03 : f32
    %495 = arith.divf %493, %cst_193 : f32
    %496 = arith.mulf %494, %494 : f32
    %497 = arith.subf %495, %496 : f32
    %cst_194 = arith.constant 9.99999974E-6 : f32
    %498 = arith.addf %497, %cst_194 : f32
    %499 = math.rsqrt %498 : f32
    %500 = arith.mulf %274, %499 : f32
    %501 = arith.mulf %494, %500 : f32
    %502 = arith.subf %277, %501 : f32
    %503 = vector.broadcast %500 : f32 to vector<2x1xf32>
    %504 = vector.broadcast %502 : f32 to vector<2x1xf32>
    %505 = vector.extract_strided_slice %459 {offsets = [4, 0], sizes = [2, 1], strides = [1, 1]} : vector<8x1xf32> to vector<2x1xf32>
    %506 = vector.shape_cast %505 : vector<2x1xf32> to vector<1x2x1xf32>
    %cst_195 = arith.constant dense<0.000000e+00> : vector<1xf32>
    %507 = vector.multi_reduction <add>, %506, %cst_195 [1, 2] : vector<1x2x1xf32> to vector<1xf32>
    %508 = vector.shape_cast %507 : vector<1xf32> to vector<1x1x1xf32>
    %509 = vector.extract %508[0, 0, 0] : f32 from vector<1x1x1xf32>
    %510 = vector.extract_strided_slice %462 {offsets = [4, 0], sizes = [2, 1], strides = [1, 1]} : vector<8x1xf32> to vector<2x1xf32>
    %511 = vector.shape_cast %510 : vector<2x1xf32> to vector<1x2x1xf32>
    %cst_196 = arith.constant dense<0.000000e+00> : vector<1xf32>
    %512 = vector.multi_reduction <add>, %511, %cst_196 [1, 2] : vector<1x2x1xf32> to vector<1xf32>
    %513 = vector.shape_cast %512 : vector<1xf32> to vector<1x1x1xf32>
    %514 = vector.extract %513[0, 0, 0] : f32 from vector<1x1x1xf32>
    %cst_197 = arith.constant 1.352000e+03 : f32
    %515 = arith.divf %509, %cst_197 : f32
    %cst_198 = arith.constant 1.352000e+03 : f32
    %516 = arith.divf %514, %cst_198 : f32
    %517 = arith.mulf %515, %515 : f32
    %518 = arith.subf %516, %517 : f32
    %cst_199 = arith.constant 9.99999974E-6 : f32
    %519 = arith.addf %518, %cst_199 : f32
    %520 = math.rsqrt %519 : f32
    %521 = arith.mulf %275, %520 : f32
    %522 = arith.mulf %515, %521 : f32
    %523 = arith.subf %278, %522 : f32
    %524 = vector.broadcast %521 : f32 to vector<2x1xf32>
    %525 = vector.broadcast %523 : f32 to vector<2x1xf32>
    %526 = tpu.concatenate %482, %503, %524, %2 in 0 : vector<2x1xf32>, vector<2x1xf32>, vector<2x1xf32>, vector<2x1xf32> -> vector<8x1xf32>
    %527 = tpu.concatenate %483, %504, %525, %2 in 0 : vector<2x1xf32>, vector<2x1xf32>, vector<2x1xf32>, vector<2x1xf32> -> vector<8x1xf32>
    %528 = vector.broadcast %526 : vector<8x1xf32> to vector<8x1024xf32>
    %529 = arith.mulf %455, %528 : vector<8x1024xf32>
    %530 = vector.broadcast %527 : vector<8x1xf32> to vector<8x1024xf32>
    %531 = arith.addf %529, %530 : vector<8x1024xf32>
    %532 = vector.broadcast %0 : vector<1x1024xf32> to vector<8x1024xf32>
    %533 = arith.mulf %531, %532 : vector<8x1024xf32>
    %c0_200 = arith.constant 0 : index
    %c0_201 = arith.constant 0 : index
    %c0_202 = arith.constant 0 : index
    %534 = vector.load %arg4[%c0_200, %c0_201, %c0_202] : memref<9x8x1xf32, #tpu.memory_space<vmem>>, vector<1x8x1xf32>
    %535 = vector.shape_cast %534 : vector<1x8x1xf32> to vector<8x1xf32>
    %536 = vector.broadcast %535 : vector<8x1xf32> to vector<8x1024xf32>
    %537 = arith.mulf %536, %533 : vector<8x1024xf32>
    %c1023_i32_203 = arith.constant 1023 : i32
    %538 = tpu.dynamic_rotate %533 by %c1023_i32_203 dim 1 : vector<8x1024xf32>, i32 -> vector<8x1024xf32>
    %c1_204 = arith.constant 1 : index
    %c0_205 = arith.constant 0 : index
    %c0_206 = arith.constant 0 : index
    %539 = vector.load %arg4[%c1_204, %c0_205, %c0_206] : memref<9x8x1xf32, #tpu.memory_space<vmem>>, vector<1x8x1xf32>
    %540 = vector.shape_cast %539 : vector<1x8x1xf32> to vector<8x1xf32>
    %541 = vector.broadcast %540 : vector<8x1xf32> to vector<8x1024xf32>
    %542 = arith.mulf %541, %538 : vector<8x1024xf32>
    %543 = arith.addf %537, %542 : vector<8x1024xf32>
    %c1022_i32 = arith.constant 1022 : i32
    %544 = tpu.dynamic_rotate %533 by %c1022_i32 dim 1 : vector<8x1024xf32>, i32 -> vector<8x1024xf32>
    %c2_207 = arith.constant 2 : index
    %c0_208 = arith.constant 0 : index
    %c0_209 = arith.constant 0 : index
    %545 = vector.load %arg4[%c2_207, %c0_208, %c0_209] : memref<9x8x1xf32, #tpu.memory_space<vmem>>, vector<1x8x1xf32>
    %546 = vector.shape_cast %545 : vector<1x8x1xf32> to vector<8x1xf32>
    %547 = vector.broadcast %546 : vector<8x1xf32> to vector<8x1024xf32>
    %548 = arith.mulf %547, %544 : vector<8x1024xf32>
    %549 = arith.addf %543, %548 : vector<8x1024xf32>
    %c994_i32_210 = arith.constant 994 : i32
    %550 = tpu.dynamic_rotate %533 by %c994_i32_210 dim 1 : vector<8x1024xf32>, i32 -> vector<8x1024xf32>
    %c3_211 = arith.constant 3 : index
    %c0_212 = arith.constant 0 : index
    %c0_213 = arith.constant 0 : index
    %551 = vector.load %arg4[%c3_211, %c0_212, %c0_213] : memref<9x8x1xf32, #tpu.memory_space<vmem>>, vector<1x8x1xf32>
    %552 = vector.shape_cast %551 : vector<1x8x1xf32> to vector<8x1xf32>
    %553 = vector.broadcast %552 : vector<8x1xf32> to vector<8x1024xf32>
    %554 = arith.mulf %553, %550 : vector<8x1024xf32>
    %555 = arith.addf %549, %554 : vector<8x1024xf32>
    %c993_i32_214 = arith.constant 993 : i32
    %556 = tpu.dynamic_rotate %533 by %c993_i32_214 dim 1 : vector<8x1024xf32>, i32 -> vector<8x1024xf32>
    %c4_215 = arith.constant 4 : index
    %c0_216 = arith.constant 0 : index
    %c0_217 = arith.constant 0 : index
    %557 = vector.load %arg4[%c4_215, %c0_216, %c0_217] : memref<9x8x1xf32, #tpu.memory_space<vmem>>, vector<1x8x1xf32>
    %558 = vector.shape_cast %557 : vector<1x8x1xf32> to vector<8x1xf32>
    %559 = vector.broadcast %558 : vector<8x1xf32> to vector<8x1024xf32>
    %560 = arith.mulf %559, %556 : vector<8x1024xf32>
    %561 = arith.addf %555, %560 : vector<8x1024xf32>
    %c992_i32 = arith.constant 992 : i32
    %562 = tpu.dynamic_rotate %533 by %c992_i32 dim 1 : vector<8x1024xf32>, i32 -> vector<8x1024xf32>
    %c5_218 = arith.constant 5 : index
    %c0_219 = arith.constant 0 : index
    %c0_220 = arith.constant 0 : index
    %563 = vector.load %arg4[%c5_218, %c0_219, %c0_220] : memref<9x8x1xf32, #tpu.memory_space<vmem>>, vector<1x8x1xf32>
    %564 = vector.shape_cast %563 : vector<1x8x1xf32> to vector<8x1xf32>
    %565 = vector.broadcast %564 : vector<8x1xf32> to vector<8x1024xf32>
    %566 = arith.mulf %565, %562 : vector<8x1024xf32>
    %567 = arith.addf %561, %566 : vector<8x1024xf32>
    %c964_i32 = arith.constant 964 : i32
    %568 = tpu.dynamic_rotate %533 by %c964_i32 dim 1 : vector<8x1024xf32>, i32 -> vector<8x1024xf32>
    %c6_221 = arith.constant 6 : index
    %c0_222 = arith.constant 0 : index
    %c0_223 = arith.constant 0 : index
    %569 = vector.load %arg4[%c6_221, %c0_222, %c0_223] : memref<9x8x1xf32, #tpu.memory_space<vmem>>, vector<1x8x1xf32>
    %570 = vector.shape_cast %569 : vector<1x8x1xf32> to vector<8x1xf32>
    %571 = vector.broadcast %570 : vector<8x1xf32> to vector<8x1024xf32>
    %572 = arith.mulf %571, %568 : vector<8x1024xf32>
    %573 = arith.addf %567, %572 : vector<8x1024xf32>
    %c963_i32 = arith.constant 963 : i32
    %574 = tpu.dynamic_rotate %533 by %c963_i32 dim 1 : vector<8x1024xf32>, i32 -> vector<8x1024xf32>
    %c7_224 = arith.constant 7 : index
    %c0_225 = arith.constant 0 : index
    %c0_226 = arith.constant 0 : index
    %575 = vector.load %arg4[%c7_224, %c0_225, %c0_226] : memref<9x8x1xf32, #tpu.memory_space<vmem>>, vector<1x8x1xf32>
    %576 = vector.shape_cast %575 : vector<1x8x1xf32> to vector<8x1xf32>
    %577 = vector.broadcast %576 : vector<8x1xf32> to vector<8x1024xf32>
    %578 = arith.mulf %577, %574 : vector<8x1024xf32>
    %579 = arith.addf %573, %578 : vector<8x1024xf32>
    %c962_i32 = arith.constant 962 : i32
    %580 = tpu.dynamic_rotate %533 by %c962_i32 dim 1 : vector<8x1024xf32>, i32 -> vector<8x1024xf32>
    %c8_227 = arith.constant 8 : index
    %c0_228 = arith.constant 0 : index
    %c0_229 = arith.constant 0 : index
    %581 = vector.load %arg4[%c8_227, %c0_228, %c0_229] : memref<9x8x1xf32, #tpu.memory_space<vmem>>, vector<1x8x1xf32>
    %582 = vector.shape_cast %581 : vector<1x8x1xf32> to vector<8x1xf32>
    %583 = vector.broadcast %582 : vector<8x1xf32> to vector<8x1024xf32>
    %584 = arith.mulf %583, %580 : vector<8x1024xf32>
    %585 = arith.addf %579, %584 : vector<8x1024xf32>
    %586 = vector.extract_strided_slice %585 {offsets = [0, 0], sizes = [2, 1024], strides = [1, 1]} : vector<8x1024xf32> to vector<2x1024xf32>
    %587 = vector.extract_strided_slice %585 {offsets = [2, 0], sizes = [2, 1024], strides = [1, 1]} : vector<8x1024xf32> to vector<2x1024xf32>
    %588 = arith.addf %586, %587 : vector<2x1024xf32>
    %589 = vector.extract_strided_slice %585 {offsets = [4, 0], sizes = [2, 1024], strides = [1, 1]} : vector<8x1024xf32> to vector<2x1024xf32>
    %590 = arith.addf %588, %589 : vector<2x1024xf32>
    %c0_230 = arith.constant 0 : index
    %591 = memref.load %arg8[%c0_230] : memref<1xf32, #tpu.memory_space<smem>>
    %592 = vector.broadcast %591 : f32 to vector<2x1024xf32>
    %593 = arith.addf %590, %592 : vector<2x1024xf32>
    %c0_231 = arith.constant 0 : index
    %c0_232 = arith.constant 0 : index
    %594 = vector.load %arg9[%c0_231, %c0_232] : memref<2x1024xf32, #tpu.memory_space<vmem>>, vector<2x1024xf32>
    tpu.vector_store %arg9[%c0_231, %c0_232], %593 {strides = array<i32>} : memref<2x1024xf32, #tpu.memory_space<vmem>>, vector<2x1024xf32>,
    return
  }
}

</mosaic_0001>

<llo_original>
// kernel: decoder_forward.1
$region0: #{decoder_forward.1}
  #allocation0 [shape = 'u32[]', space=smem, size = 0x4, offset = 0x4, fixed_abs, tag = 'smem constant byte address 0x4 - core index']
  #allocation1 [shape = 'u32[144,128]{1,0:T(1,128)}', space=vmem, size = 0x12000, scoped, tag = 'internal scratch']
  #allocation2 [shape = 'f32[1]{0:T(128)S(6)}', space=smem, size = 0x200, scoped, tag = 'scoped memory for decoder_forward.1']
  %s0 = inlined_call_operand.vmem [shape: bf16[8,600], index: 0, kind: input, shape index: {}]
  %s1 = inlined_call_operand.hbm [shape: bf16[600,1024], index: 1, kind: input, shape index: {}]
  %s2 = inlined_call_operand.hbm [shape: f32[1,1024], index: 2, kind: input, shape index: {}]
  %s3 = inlined_call_operand.vmem [shape: f32[54,8,1], index: 3, kind: input, shape index: {}]
  %s4 = inlined_call_operand.vmem [shape: f32[9,8,1], index: 4, kind: input, shape index: {}]
  %s5 = inlined_call_operand.hbm [shape: f32[2,3], index: 5, kind: input, shape index: {}]
  %s6 = inlined_call_operand.hbm [shape: f32[2,3], index: 6, kind: input, shape index: {}]
  %s7 = inlined_call_operand.hbm [shape: f32[2,3], index: 7, kind: input, shape index: {}]
  %s8 = inlined_call_operand.<no memory space> [shape: f32[1], index: 8, kind: input, shape index: {}]
  %s9 = inlined_call_operand.vmem [shape: f32[2,1024], index: 9, kind: output, shape index: {}]
  %s10 = sld [smem:[#allocation0]]
  $region66: #{decoder_forward.1} parent=0
    _
  %s12 = ssub.s32 1, %s10
  %s13 = scalar_select 0, %s12, %s10
  %14 = sst [smem:[#allocation2]] %s8
  $region1: #{decoder_forward.1} parent=0
    #allocation3 [shape = 'u8[1228800]{0}', space=vmem, size = 0x12c000, scoped, tag = 'input window, operand 1, single buffered']
    #allocation4 [shape = 's32[1]{0}', space=sflag, size = 0x4, scoped, tag = 'scoped memory for decoder_forward.1']
    #allocation5 [shape = 's32[1]{0}', space=sflag, size = 0x4, scoped, tag = 'scoped memory for decoder_forward.1']
    #allocation6 [shape = 'u8[4096]{0}', space=vmem, size = 0x1000, scoped, tag = 'input window, operand 2, single buffered']
    #allocation7 [shape = 's32[1]{0}', space=sflag, size = 0x4, scoped, tag = 'scoped memory for decoder_forward.1']
    #allocation8 [shape = 'u8[1024]{0}', space=smem, size = 0x400, scoped, tag = 'input window, operand 5, single buffered']
    #allocation9 [shape = 'u8[1024]{0}', space=smem, size = 0x400, scoped, tag = 'input window, operand 6, single buffered']
    #allocation10 [shape = 's32[1]{0}', space=sflag, size = 0x4, scoped, tag = 'scoped memory for decoder_forward.1']
    #allocation11 [shape = 'u8[1024]{0}', space=smem, size = 0x400, scoped, tag = 'input window, operand 7, single buffered']
    %15 = vsyncpa [#allocation4], 0
    %16 = vsyncpa [#allocation7], 0
    %17 = vsyncpa [#allocation5], 0
    %18 = vsyncpa [#allocation10], 0
    // Predicated region
    $region2: #{decoder_forward.1} parent=1 // pred_check
      _
    $region3: #{decoder_forward.1} parent=1 // pred_check_branch
      %20 = sbr.rel (0) target = $region5
    $region4: #{decoder_forward.1} parent=1 // pred_region
      _
    $region5: #{decoder_forward.1} parent=1 // pred_fallthru
      _
    // Predicated region
    $region6: #{decoder_forward.1} parent=1 // pred_check
      _
    $region7: #{decoder_forward.1} parent=1 // pred_check_branch
      %22 = sbr.rel (0) target = $region9
    $region8: #{decoder_forward.1} parent=1 // pred_region
      %s24 = ssub.s32 38400, 38400
      %25 = vsyncadd [#allocation4], %s24
      %s26 = sshll.u32 [#allocation3], 4
      %s27 = int_to_ptr.vmem [resolvable:$true] %s26
      %32 = dma.hbm_to_vmem [thread:$0]  %s1, 38400, %s27, [#allocation4], 512, 512, 32
    $region9: #{decoder_forward.1} parent=1 // pred_fallthru
      _
    // Predicated region
    $region10: #{decoder_forward.1} parent=1 // pred_check
      _
    $region11: #{decoder_forward.1} parent=1 // pred_check_branch
      %34 = sbr.rel (0) target = $region13
    $region12: #{decoder_forward.1} parent=1 // pred_region
      %s36 = ssub.s32 128, 128
      %37 = vsyncadd [#allocation7], %s36
      %s39 = sshll.u32 [#allocation6], 4
      %s40 = int_to_ptr.vmem [resolvable:$true] %s39
      %42 = dma.hbm_to_vmem [thread:$0]  %s2, 128, %s40, [#allocation7]
    $region13: #{decoder_forward.1} parent=1 // pred_fallthru
      _
    // Predicated region
    $region14: #{decoder_forward.1} parent=1 // pred_check
      _
    $region15: #{decoder_forward.1} parent=1 // pred_check_branch
      %44 = sbr.rel (0) target = $region17
    $region16: #{decoder_forward.1} parent=1 // pred_region
      _
    $region17: #{decoder_forward.1} parent=1 // pred_fallthru
      _
    // Predicated region
    $region18: #{decoder_forward.1} parent=1 // pred_check
      _
    $region19: #{decoder_forward.1} parent=1 // pred_check_branch
      %46 = sbr.rel (0) target = $region21
    $region20: #{decoder_forward.1} parent=1 // pred_region
      _
    $region21: #{decoder_forward.1} parent=1 // pred_fallthru
      _
    // Predicated region
    $region22: #{decoder_forward.1} parent=1 // pred_check
      _
    $region23: #{decoder_forward.1} parent=1 // pred_check_branch
      %48 = sbr.rel (0) target = $region25
    $region24: #{decoder_forward.1} parent=1 // pred_region
      %s50 = ssub.s32 32, 32
      %51 = vsyncadd [#allocation5], %s50
      %54 = dma.hbm_to_smem %s5, 32, [#allocation8], [#allocation5]
    $region25: #{decoder_forward.1} parent=1 // pred_fallthru
      _
    // Predicated region
    $region26: #{decoder_forward.1} parent=1 // pred_check
      _
    $region27: #{decoder_forward.1} parent=1 // pred_check_branch
      %56 = sbr.rel (0) target = $region29
    $region28: #{decoder_forward.1} parent=1 // pred_region
      %s58 = ssub.s32 32, 32
      %59 = vsyncadd [#allocation10], %s58
      %62 = dma.hbm_to_smem %s6, 32, [#allocation9], [#allocation10]
    $region29: #{decoder_forward.1} parent=1 // pred_fallthru
      _
    // Predicated region
    $region30: #{decoder_forward.1} parent=1 // pred_check
      _
    $region31: #{decoder_forward.1} parent=1 // pred_check_branch
      %64 = sbr.rel (0) target = $region33
    $region32: #{decoder_forward.1} parent=1 // pred_region
      %s66 = ssub.s32 32, 32
      %67 = vsyncadd [#allocation10], %s66
      %70 = dma.hbm_to_smem %s7, 32, [#allocation11], [#allocation10]
    $region33: #{decoder_forward.1} parent=1 // pred_fallthru
      _
    // Predicated region
    $region34: #{decoder_forward.1} parent=1 // pred_check
      _
    $region35: #{decoder_forward.1} parent=1 // pred_check_branch
      %72 = sbr.rel (0) target = $region37
    $region36: #{decoder_forward.1} parent=1 // pred_region
      _
    $region37: #{decoder_forward.1} parent=1 // pred_fallthru
      _
    // Predicated region
    $region38: #{decoder_forward.1} parent=1 // pred_check
      _
    $region39: #{decoder_forward.1} parent=1 // pred_check_branch
      %74 = sbr.rel (0) target = $region41
    $region40: #{decoder_forward.1} parent=1 // pred_region
      %75 = dma.done [#allocation4], 38400
    $region41: #{decoder_forward.1} parent=1 // pred_fallthru
      _
    // Predicated region
    $region42: #{decoder_forward.1} parent=1 // pred_check
      _
    $region43: #{decoder_forward.1} parent=1 // pred_check_branch
      %77 = sbr.rel (0) target = $region45
    $region44: #{decoder_forward.1} parent=1 // pred_region
      %78 = dma.done [#allocation7], 128
    $region45: #{decoder_forward.1} parent=1 // pred_fallthru
      _
    // Predicated region
    $region46: #{decoder_forward.1} parent=1 // pred_check
      _
    $region47: #{decoder_forward.1} parent=1 // pred_check_branch
      %80 = sbr.rel (0) target = $region49
    $region48: #{decoder_forward.1} parent=1 // pred_region
      %81 = dma.done [#allocation5], 32
    $region49: #{decoder_forward.1} parent=1 // pred_fallthru
      _
    // Predicated region
    $region50: #{decoder_forward.1} parent=1 // pred_check
      _
    $region51: #{decoder_forward.1} parent=1 // pred_check_branch
      %83 = sbr.rel (0) target = $region53
    $region52: #{decoder_forward.1} parent=1 // pred_region
      %84 = dma.done [#allocation10], 32
    $region53: #{decoder_forward.1} parent=1 // pred_fallthru
      _
    // Predicated region
    $region54: #{decoder_forward.1} parent=1 // pred_check
      _
    $region55: #{decoder_forward.1} parent=1 // pred_check_branch
      %86 = sbr.rel (0) target = $region57
    $region56: #{decoder_forward.1} parent=1 // pred_region
      %87 = dma.done [#allocation10], 32
    $region57: #{decoder_forward.1} parent=1 // pred_fallthru
      _
    %88 = sfence
    %v90 = vld [vmem:[#allocation6] sm:$0xff]
    %v91 = vld [vmem:[%s0] sm:$0xff]
    %v92 = vld [vmem:[%s0 + $0x8] sm:$0xff]
    %v93 = vld [vmem:[%s0 + $0x10] sm:$0xf]
    %v94 = vld [vmem:[#allocation3] sm:$0xff]
    %v95 = vld [vmem:[#allocation3 + $0x8] sm:$0xff]
    %v96 = vld [vmem:[#allocation3 + $0x10] sm:$0xff]
    %v97 = vld [vmem:[#allocation3 + $0x18] sm:$0xff]
    %v98 = vld [vmem:[#allocation3 + $0x20] sm:$0xff]
    %v99 = vld [vmem:[#allocation3 + $0x28] sm:$0xff]
    %v100 = vld [vmem:[#allocation3 + $0x30] sm:$0xff]
    %v101 = vld [vmem:[#allocation3 + $0x38] sm:$0xff]
    %v102 = vld [vmem:[#allocation3 + $0x40] sm:$0xff]
    %v103 = vld [vmem:[#allocation3 + $0x48] sm:$0xff]
    %v104 = vld [vmem:[#allocation3 + $0x50] sm:$0xff]
    %v105 = vld [vmem:[#allocation3 + $0x58] sm:$0xff]
    %v106 = vld [vmem:[#allocation3 + $0x60] sm:$0xff]
    %v107 = vld [vmem:[#allocation3 + $0x68] sm:$0xff]
    %v108 = vld [vmem:[#allocation3 + $0x70] sm:$0xff]
    %v109 = vld [vmem:[#allocation3 + $0x78] sm:$0xff]
    %v110 = vld [vmem:[#allocation3 + $0x80] sm:$0xff]
    %v111 = vld [vmem:[#allocation3 + $0x88] sm:$0xff]
    %v112 = vld [vmem:[#allocation3 + $0x90] sm:$0xff]
    %v113 = vld [vmem:[#allocation3 + $0x98] sm:$0xff]
    %v114 = vld [vmem:[#allocation3 + $0xa0] sm:$0xff]
    %v115 = vld [vmem:[#allocation3 + $0xa8] sm:$0xff]
    %v116 = vld [vmem:[#allocation3 + $0xb0] sm:$0xff]
    %v117 = vld [vmem:[#allocation3 + $0xb8] sm:$0xff]
    %v118 = vld [vmem:[#allocation3 + $0xc0] sm:$0xff]
    %v119 = vld [vmem:[#allocation3 + $0xc8] sm:$0xff]
    %v120 = vld [vmem:[#allocation3 + $0xd0] sm:$0xff]
    %v121 = vld [vmem:[#allocation3 + $0xd8] sm:$0xff]
    %v122 = vld [vmem:[#allocation3 + $0xe0] sm:$0xff]
    %v123 = vld [vmem:[#allocation3 + $0xe8] sm:$0xff]
    %v124 = vld [vmem:[#allocation3 + $0xf0] sm:$0xff]
    %v125 = vld [vmem:[#allocation3 + $0xf8] sm:$0xff]
    %v126 = vld [vmem:[#allocation3 + $0x100] sm:$0xff]
    %v127 = vld [vmem:[#allocation3 + $0x108] sm:$0xff]
    %v128 = vld [vmem:[#allocation3 + $0x110] sm:$0xff]
    %v129 = vld [vmem:[#allocation3 + $0x118] sm:$0xff]
    %v130 = vld [vmem:[#allocation3 + $0x120] sm:$0xff]
    %v131 = vld [vmem:[#allocation3 + $0x128] sm:$0xff]
    %v132 = vld [vmem:[#allocation3 + $0x130] sm:$0xff]
    %v133 = vld [vmem:[#allocation3 + $0x138] sm:$0xff]
    %v134 = vld [vmem:[#allocation3 + $0x140] sm:$0xff]
    %v135 = vld [vmem:[#allocation3 + $0x148] sm:$0xff]
    %v136 = vld [vmem:[#allocation3 + $0x150] sm:$0xff]
    %v137 = vld [vmem:[#allocation3 + $0x158] sm:$0xff]
    %v138 = vld [vmem:[#allocation3 + $0x160] sm:$0xff]
    %v139 = vld [vmem:[#allocation3 + $0x168] sm:$0xff]
    %v140 = vld [vmem:[#allocation3 + $0x170] sm:$0xff]
    %v141 = vld [vmem:[#allocation3 + $0x178] sm:$0xff]
    %v142 = vld [vmem:[#allocation3 + $0x180] sm:$0xff]
    %v143 = vld [vmem:[#allocation3 + $0x188] sm:$0xff]
    %v144 = vld [vmem:[#allocation3 + $0x190] sm:$0xff]
    %v145 = vld [vmem:[#allocation3 + $0x198] sm:$0xff]
    %v146 = vld [vmem:[#allocation3 + $0x1a0] sm:$0xff]
    %v147 = vld [vmem:[#allocation3 + $0x1a8] sm:$0xff]
    %v148 = vld [vmem:[#allocation3 + $0x1b0] sm:$0xff]
    %v149 = vld [vmem:[#allocation3 + $0x1b8] sm:$0xff]
    %v150 = vld [vmem:[#allocation3 + $0x1c0] sm:$0xff]
    %v151 = vld [vmem:[#allocation3 + $0x1c8] sm:$0xff]
    %v152 = vld [vmem:[#allocation3 + $0x1d0] sm:$0xff]
    %v153 = vld [vmem:[#allocation3 + $0x1d8] sm:$0xff]
    %v154 = vld [vmem:[#allocation3 + $0x1e0] sm:$0xff]
    %v155 = vld [vmem:[#allocation3 + $0x1e8] sm:$0xff]
    %v156 = vld [vmem:[#allocation3 + $0x1f0] sm:$0xff]
    %v157 = vld [vmem:[#allocation3 + $0x1f8] sm:$0xff]
    %v158 = vld [vmem:[#allocation3 + $0x200] sm:$0xff]
    %v159 = vld [vmem:[#allocation3 + $0x208] sm:$0xff]
    %v160 = vld [vmem:[#allocation3 + $0x210] sm:$0xff]
    %v161 = vld [vmem:[#allocation3 + $0x218] sm:$0xff]
    %v162 = vld [vmem:[#allocation3 + $0x220] sm:$0xff]
    %v163 = vld [vmem:[#allocation3 + $0x228] sm:$0xff]
    %v164 = vld [vmem:[#allocation3 + $0x230] sm:$0xff]
    %v165 = vld [vmem:[#allocation3 + $0x238] sm:$0xff]
    %v166 = vld [vmem:[#allocation3 + $0x240] sm:$0xff]
    %v167 = vld [vmem:[#allocation3 + $0x248] sm:$0xff]
    %v168 = vld [vmem:[#allocation3 + $0x250] sm:$0xff]
    %v169 = vld [vmem:[#allocation3 + $0x258] sm:$0xff]
    %v170 = vld [vmem:[#allocation3 + $0x260] sm:$0xff]
    %v171 = vld [vmem:[#allocation3 + $0x268] sm:$0xff]
    %v172 = vld [vmem:[#allocation3 + $0x270] sm:$0xff]
    %v173 = vld [vmem:[#allocation3 + $0x278] sm:$0xff]
    %v174 = vld [vmem:[#allocation3 + $0x280] sm:$0xff]
    %v175 = vld [vmem:[#allocation3 + $0x288] sm:$0xff]
    %v176 = vld [vmem:[#allocation3 + $0x290] sm:$0xff]
    %v177 = vld [vmem:[#allocation3 + $0x298] sm:$0xff]
    %v178 = vld [vmem:[#allocation3 + $0x2a0] sm:$0xff]
    %v179 = vld [vmem:[#allocation3 + $0x2a8] sm:$0xff]
    %v180 = vld [vmem:[#allocation3 + $0x2b0] sm:$0xff]
    %v181 = vld [vmem:[#allocation3 + $0x2b8] sm:$0xff]
    %v182 = vld [vmem:[#allocation3 + $0x2c0] sm:$0xff]
    %v183 = vld [vmem:[#allocation3 + $0x2c8] sm:$0xff]
    %v184 = vld [vmem:[#allocation3 + $0x2d0] sm:$0xff]
    %v185 = vld [vmem:[#allocation3 + $0x2d8] sm:$0xff]
    %v186 = vld [vmem:[#allocation3 + $0x2e0] sm:$0xff]
    %v187 = vld [vmem:[#allocation3 + $0x2e8] sm:$0xff]
    %v188 = vld [vmem:[#allocation3 + $0x2f0] sm:$0xff]
    %v189 = vld [vmem:[#allocation3 + $0x2f8] sm:$0xff]
    %v190 = vld [vmem:[#allocation3 + $0x300] sm:$0xff]
    %v191 = vld [vmem:[#allocation3 + $0x308] sm:$0xff]
    %v192 = vld [vmem:[#allocation3 + $0x310] sm:$0xff]
    %v193 = vld [vmem:[#allocation3 + $0x318] sm:$0xff]
    %v194 = vld [vmem:[#allocation3 + $0x320] sm:$0xff]
    %v195 = vld [vmem:[#allocation3 + $0x328] sm:$0xff]
    %v196 = vld [vmem:[#allocation3 + $0x330] sm:$0xff]
    %v197 = vld [vmem:[#allocation3 + $0x338] sm:$0xff]
    %v198 = vld [vmem:[#allocation3 + $0x340] sm:$0xff]
    %v199 = vld [vmem:[#allocation3 + $0x348] sm:$0xff]
    %v200 = vld [vmem:[#allocation3 + $0x350] sm:$0xff]
    %v201 = vld [vmem:[#allocation3 + $0x358] sm:$0xff]
    %v202 = vld [vmem:[#allocation3 + $0x360] sm:$0xff]
    %v203 = vld [vmem:[#allocation3 + $0x368] sm:$0xff]
    %v204 = vld [vmem:[#allocation3 + $0x370] sm:$0xff]
    %v205 = vld [vmem:[#allocation3 + $0x378] sm:$0xff]
    %v206 = vld [vmem:[#allocation3 + $0x380] sm:$0xff]
    %v207 = vld [vmem:[#allocation3 + $0x388] sm:$0xff]
    %v208 = vld [vmem:[#allocation3 + $0x390] sm:$0xff]
    %v209 = vld [vmem:[#allocation3 + $0x398] sm:$0xff]
    %v210 = vld [vmem:[#allocation3 + $0x3a0] sm:$0xff]
    %v211 = vld [vmem:[#allocation3 + $0x3a8] sm:$0xff]
    %v212 = vld [vmem:[#allocation3 + $0x3b0] sm:$0xff]
    %v213 = vld [vmem:[#allocation3 + $0x3b8] sm:$0xff]
    %v214 = vld [vmem:[#allocation3 + $0x3c0] sm:$0xff]
    %v215 = vld [vmem:[#allocation3 + $0x3c8] sm:$0xff]
    %v216 = vld [vmem:[#allocation3 + $0x3d0] sm:$0xff]
    %v217 = vld [vmem:[#allocation3 + $0x3d8] sm:$0xff]
    %v218 = vld [vmem:[#allocation3 + $0x3e0] sm:$0xff]
    %v219 = vld [vmem:[#allocation3 + $0x3e8] sm:$0xff]
    %v220 = vld [vmem:[#allocation3 + $0x3f0] sm:$0xff]
    %v221 = vld [vmem:[#allocation3 + $0x3f8] sm:$0xff]
    %v222 = vld [vmem:[#allocation3 + $0x400] sm:$0xff]
    %v223 = vld [vmem:[#allocation3 + $0x408] sm:$0xff]
    %v224 = vld [vmem:[#allocation3 + $0x410] sm:$0xff]
    %v225 = vld [vmem:[#allocation3 + $0x418] sm:$0xff]
    %v226 = vld [vmem:[#allocation3 + $0x420] sm:$0xff]
    %v227 = vld [vmem:[#allocation3 + $0x428] sm:$0xff]
    %v228 = vld [vmem:[#allocation3 + $0x430] sm:$0xff]
    %v229 = vld [vmem:[#allocation3 + $0x438] sm:$0xff]
    %v230 = vld [vmem:[#allocation3 + $0x440] sm:$0xff]
    %v231 = vld [vmem:[#allocation3 + $0x448] sm:$0xff]
    %v232 = vld [vmem:[#allocation3 + $0x450] sm:$0xff]
    %v233 = vld [vmem:[#allocation3 + $0x458] sm:$0xff]
    %v234 = vld [vmem:[#allocation3 + $0x460] sm:$0xff]
    %v235 = vld [vmem:[#allocation3 + $0x468] sm:$0xff]
    %v236 = vld [vmem:[#allocation3 + $0x470] sm:$0xff]
    %v237 = vld [vmem:[#allocation3 + $0x478] sm:$0xff]
    %v238 = vld [vmem:[#allocation3 + $0x480] sm:$0xff]
    %v239 = vld [vmem:[#allocation3 + $0x488] sm:$0xff]
    %v240 = vld [vmem:[#allocation3 + $0x490] sm:$0xff]
    %v241 = vld [vmem:[#allocation3 + $0x498] sm:$0xff]
    %v242 = vld [vmem:[#allocation3 + $0x4a0] sm:$0xff]
    %v243 = vld [vmem:[#allocation3 + $0x4a8] sm:$0xff]
    %v244 = vld [vmem:[#allocation3 + $0x4b0] sm:$0xff]
    %v245 = vld [vmem:[#allocation3 + $0x4b8] sm:$0xff]
    %v246 = vld [vmem:[#allocation3 + $0x4c0] sm:$0xff]
    %v247 = vld [vmem:[#allocation3 + $0x4c8] sm:$0xff]
    %v248 = vld [vmem:[#allocation3 + $0x4d0] sm:$0xff]
    %v249 = vld [vmem:[#allocation3 + $0x4d8] sm:$0xff]
    %v250 = vld [vmem:[#allocation3 + $0x4e0] sm:$0xff]
    %v251 = vld [vmem:[#allocation3 + $0x4e8] sm:$0xff]
    %v252 = vld [vmem:[#allocation3 + $0x4f0] sm:$0xff]
    %v253 = vld [vmem:[#allocation3 + $0x4f8] sm:$0xff]
    %v254 = vld [vmem:[#allocation3 + $0x500] sm:$0xff]
    %v255 = vld [vmem:[#allocation3 + $0x508] sm:$0xff]
    %v256 = vld [vmem:[#allocation3 + $0x510] sm:$0xff]
    %v257 = vld [vmem:[#allocation3 + $0x518] sm:$0xff]
    %v258 = vld [vmem:[#allocation3 + $0x520] sm:$0xff]
    %v259 = vld [vmem:[#allocation3 + $0x528] sm:$0xff]
    %v260 = vld [vmem:[#allocation3 + $0x530] sm:$0xff]
    %v261 = vld [vmem:[#allocation3 + $0x538] sm:$0xff]
    %v262 = vld [vmem:[#allocation3 + $0x540] sm:$0xff]
    %v263 = vld [vmem:[#allocation3 + $0x548] sm:$0xff]
    %v264 = vld [vmem:[#allocation3 + $0x550] sm:$0xff]
    %v265 = vld [vmem:[#allocation3 + $0x558] sm:$0xff]
    %v266 = vld [vmem:[#allocation3 + $0x560] sm:$0xff]
    %v267 = vld [vmem:[#allocation3 + $0x568] sm:$0xff]
    %v268 = vld [vmem:[#allocation3 + $0x570] sm:$0xff]
    %v269 = vld [vmem:[#allocation3 + $0x578] sm:$0xff]
    %v270 = vld [vmem:[#allocation3 + $0x580] sm:$0xff]
    %v271 = vld [vmem:[#allocation3 + $0x588] sm:$0xff]
    %v272 = vld [vmem:[#allocation3 + $0x590] sm:$0xff]
    %v273 = vld [vmem:[#allocation3 + $0x598] sm:$0xff]
    %v274 = vld [vmem:[#allocation3 + $0x5a0] sm:$0xff]
    %v275 = vld [vmem:[#allocation3 + $0x5a8] sm:$0xff]
    %v276 = vld [vmem:[#allocation3 + $0x5b0] sm:$0xff]
    %v277 = vld [vmem:[#allocation3 + $0x5b8] sm:$0xff]
    %v278 = vld [vmem:[#allocation3 + $0x5c0] sm:$0xff]
    %v279 = vld [vmem:[#allocation3 + $0x5c8] sm:$0xff]
    %v280 = vld [vmem:[#allocation3 + $0x5d0] sm:$0xff]
    %v281 = vld [vmem:[#allocation3 + $0x5d8] sm:$0xff]
    %v282 = vld [vmem:[#allocation3 + $0x5e0] sm:$0xff]
    %v283 = vld [vmem:[#allocation3 + $0x5e8] sm:$0xff]
    %v284 = vld [vmem:[#allocation3 + $0x5f0] sm:$0xff]
    %v285 = vld [vmem:[#allocation3 + $0x5f8] sm:$0xff]
    %v286 = vld [vmem:[#allocation3 + $0x600] sm:$0xff]
    %v287 = vld [vmem:[#allocation3 + $0x608] sm:$0xff]
    %v288 = vld [vmem:[#allocation3 + $0x610] sm:$0xff]
    %v289 = vld [vmem:[#allocation3 + $0x618] sm:$0xff]
    %v290 = vld [vmem:[#allocation3 + $0x620] sm:$0xff]
    %v291 = vld [vmem:[#allocation3 + $0x628] sm:$0xff]
    %v292 = vld [vmem:[#allocation3 + $0x630] sm:$0xff]
    %v293 = vld [vmem:[#allocation3 + $0x638] sm:$0xff]
    %v294 = vld [vmem:[#allocation3 + $0x640] sm:$0xff]
    %v295 = vld [vmem:[#allocation3 + $0x648] sm:$0xff]
    %v296 = vld [vmem:[#allocation3 + $0x650] sm:$0xff]
    %v297 = vld [vmem:[#allocation3 + $0x658] sm:$0xff]
    %v298 = vld [vmem:[#allocation3 + $0x660] sm:$0xff]
    %v299 = vld [vmem:[#allocation3 + $0x668] sm:$0xff]
    %v300 = vld [vmem:[#allocation3 + $0x670] sm:$0xff]
    %v301 = vld [vmem:[#allocation3 + $0x678] sm:$0xff]
    %v302 = vld [vmem:[#allocation3 + $0x680] sm:$0xff]
    %v303 = vld [vmem:[#allocation3 + $0x688] sm:$0xff]
    %v304 = vld [vmem:[#allocation3 + $0x690] sm:$0xff]
    %v305 = vld [vmem:[#allocation3 + $0x698] sm:$0xff]
    %v306 = vld [vmem:[#allocation3 + $0x6a0] sm:$0xff]
    %v307 = vld [vmem:[#allocation3 + $0x6a8] sm:$0xff]
    %v308 = vld [vmem:[#allocation3 + $0x6b0] sm:$0xff]
    %v309 = vld [vmem:[#allocation3 + $0x6b8] sm:$0xff]
    %v310 = vld [vmem:[#allocation3 + $0x6c0] sm:$0xff]
    %v311 = vld [vmem:[#allocation3 + $0x6c8] sm:$0xff]
    %v312 = vld [vmem:[#allocation3 + $0x6d0] sm:$0xff]
    %v313 = vld [vmem:[#allocation3 + $0x6d8] sm:$0xff]
    %v314 = vld [vmem:[#allocation3 + $0x6e0] sm:$0xff]
    %v315 = vld [vmem:[#allocation3 + $0x6e8] sm:$0xff]
    %v316 = vld [vmem:[#allocation3 + $0x6f0] sm:$0xff]
    %v317 = vld [vmem:[#allocation3 + $0x6f8] sm:$0xff]
    %v318 = vld [vmem:[#allocation3 + $0x700] sm:$0xff]
    %v319 = vld [vmem:[#allocation3 + $0x708] sm:$0xff]
    %v320 = vld [vmem:[#allocation3 + $0x710] sm:$0xff]
    %v321 = vld [vmem:[#allocation3 + $0x718] sm:$0xff]
    %v322 = vld [vmem:[#allocation3 + $0x720] sm:$0xff]
    %v323 = vld [vmem:[#allocation3 + $0x728] sm:$0xff]
    %v324 = vld [vmem:[#allocation3 + $0x730] sm:$0xff]
    %v325 = vld [vmem:[#allocation3 + $0x738] sm:$0xff]
    %v326 = vld [vmem:[#allocation3 + $0x740] sm:$0xff]
    %v327 = vld [vmem:[#allocation3 + $0x748] sm:$0xff]
    %v328 = vld [vmem:[#allocation3 + $0x750] sm:$0xff]
    %v329 = vld [vmem:[#allocation3 + $0x758] sm:$0xff]
    %v330 = vld [vmem:[#allocation3 + $0x760] sm:$0xff]
    %v331 = vld [vmem:[#allocation3 + $0x768] sm:$0xff]
    %v332 = vld [vmem:[#allocation3 + $0x770] sm:$0xff]
    %v333 = vld [vmem:[#allocation3 + $0x778] sm:$0xff]
    %v334 = vld [vmem:[#allocation3 + $0x780] sm:$0xff]
    %v335 = vld [vmem:[#allocation3 + $0x788] sm:$0xff]
    %v336 = vld [vmem:[#allocation3 + $0x790] sm:$0xff]
    %v337 = vld [vmem:[#allocation3 + $0x798] sm:$0xff]
    %v338 = vld [vmem:[#allocation3 + $0x7a0] sm:$0xff]
    %v339 = vld [vmem:[#allocation3 + $0x7a8] sm:$0xff]
    %v340 = vld [vmem:[#allocation3 + $0x7b0] sm:$0xff]
    %v341 = vld [vmem:[#allocation3 + $0x7b8] sm:$0xff]
    %v342 = vld [vmem:[#allocation3 + $0x7c0] sm:$0xff]
    %v343 = vld [vmem:[#allocation3 + $0x7c8] sm:$0xff]
    %v344 = vld [vmem:[#allocation3 + $0x7d0] sm:$0xff]
    %v345 = vld [vmem:[#allocation3 + $0x7d8] sm:$0xff]
    %v346 = vld [vmem:[#allocation3 + $0x7e0] sm:$0xff]
    %v347 = vld [vmem:[#allocation3 + $0x7e8] sm:$0xff]
    %v348 = vld [vmem:[#allocation3 + $0x7f0] sm:$0xff]
    %v349 = vld [vmem:[#allocation3 + $0x7f8] sm:$0xff]
    %v350 = vld [vmem:[#allocation3 + $0x800] sm:$0xff]
    %v351 = vld [vmem:[#allocation3 + $0x808] sm:$0xff]
    %v352 = vld [vmem:[#allocation3 + $0x810] sm:$0xff]
    %v353 = vld [vmem:[#allocation3 + $0x818] sm:$0xff]
    %v354 = vld [vmem:[#allocation3 + $0x820] sm:$0xff]
    %v355 = vld [vmem:[#allocation3 + $0x828] sm:$0xff]
    %v356 = vld [vmem:[#allocation3 + $0x830] sm:$0xff]
    %v357 = vld [vmem:[#allocation3 + $0x838] sm:$0xff]
    %v358 = vld [vmem:[#allocation3 + $0x840] sm:$0xff]
    %v359 = vld [vmem:[#allocation3 + $0x848] sm:$0xff]
    %v360 = vld [vmem:[#allocation3 + $0x850] sm:$0xff]
    %v361 = vld [vmem:[#allocation3 + $0x858] sm:$0xff]
    %v362 = vld [vmem:[#allocation3 + $0x860] sm:$0xff]
    %v363 = vld [vmem:[#allocation3 + $0x868] sm:$0xff]
    %v364 = vld [vmem:[#allocation3 + $0x870] sm:$0xff]
    %v365 = vld [vmem:[#allocation3 + $0x878] sm:$0xff]
    %v366 = vld [vmem:[#allocation3 + $0x880] sm:$0xff]
    %v367 = vld [vmem:[#allocation3 + $0x888] sm:$0xff]
    %v368 = vld [vmem:[#allocation3 + $0x890] sm:$0xff]
    %v369 = vld [vmem:[#allocation3 + $0x898] sm:$0xff]
    %v370 = vld [vmem:[#allocation3 + $0x8a0] sm:$0xff]
    %v371 = vld [vmem:[#allocation3 + $0x8a8] sm:$0xff]
    %v372 = vld [vmem:[#allocation3 + $0x8b0] sm:$0xff]
    %v373 = vld [vmem:[#allocation3 + $0x8b8] sm:$0xff]
    %v374 = vld [vmem:[#allocation3 + $0x8c0] sm:$0xff]
    %v375 = vld [vmem:[#allocation3 + $0x8c8] sm:$0xff]
    %v376 = vld [vmem:[#allocation3 + $0x8d0] sm:$0xff]
    %v377 = vld [vmem:[#allocation3 + $0x8d8] sm:$0xff]
    %v378 = vld [vmem:[#allocation3 + $0x8e0] sm:$0xff]
    %v379 = vld [vmem:[#allocation3 + $0x8e8] sm:$0xff]
    %v380 = vld [vmem:[#allocation3 + $0x8f0] sm:$0xff]
    %v381 = vld [vmem:[#allocation3 + $0x8f8] sm:$0xff]
    %v382 = vld [vmem:[#allocation3 + $0x900] sm:$0xff]
    %v383 = vld [vmem:[#allocation3 + $0x908] sm:$0xff]
    %v384 = vld [vmem:[#allocation3 + $0x910] sm:$0xff]
    %v385 = vld [vmem:[#allocation3 + $0x918] sm:$0xff]
    %v386 = vld [vmem:[#allocation3 + $0x920] sm:$0xff]
    %v387 = vld [vmem:[#allocation3 + $0x928] sm:$0xff]
    %v388 = vld [vmem:[#allocation3 + $0x930] sm:$0xff]
    %v389 = vld [vmem:[#allocation3 + $0x938] sm:$0xff]
    %v390 = vld [vmem:[#allocation3 + $0x940] sm:$0xff]
    %v391 = vld [vmem:[#allocation3 + $0x948] sm:$0xff]
    %v392 = vld [vmem:[#allocation3 + $0x950] sm:$0xff]
    %v393 = vld [vmem:[#allocation3 + $0x958] sm:$0xff]
    %v397 = vunpack.c.l.b16 %v91
    %v398 = vunpack.c.h.b16 %v91
    %v399 = vunpack.c.l.b16 %v92
    %v400 = vunpack.c.h.b16 %v92
    %v401 = vunpack.c.l.b16 %v93
    %v402 = vpack.c.b16 %v397, %v397
    %v403 = vpack.c.b16 %v398, %v398
    %v404 = vpack.c.b16 %v399, %v399
    %v405 = vpack.c.b16 %v400, %v400
    %v406 = vpack.c.b16 %v401, %v401
    %v711 = vunpack.c.l.b16 %v94
    %v712 = vunpack.c.h.b16 %v94
    %v713 = vunpack.c.l.b16 %v95
    %v714 = vunpack.c.h.b16 %v95
    %v715 = vunpack.c.l.b16 %v96
    %v716 = vunpack.c.h.b16 %v96
    %v717 = vunpack.c.l.b16 %v97
    %v718 = vunpack.c.h.b16 %v97
    %v719 = vunpack.c.l.b16 %v98
    %v720 = vunpack.c.h.b16 %v98
    %v721 = vunpack.c.l.b16 %v99
    %v722 = vunpack.c.h.b16 %v99
    %v723 = vunpack.c.l.b16 %v100
    %v724 = vunpack.c.h.b16 %v100
    %v725 = vunpack.c.l.b16 %v101
    %v726 = vunpack.c.h.b16 %v101
    %v727 = vunpack.c.l.b16 %v102
    %v728 = vunpack.c.h.b16 %v102
    %v729 = vunpack.c.l.b16 %v103
    %v730 = vunpack.c.h.b16 %v103
    %v731 = vunpack.c.l.b16 %v104
    %v732 = vunpack.c.h.b16 %v104
    %v733 = vunpack.c.l.b16 %v105
    %v734 = vunpack.c.h.b16 %v105
    %v735 = vunpack.c.l.b16 %v106
    %v736 = vunpack.c.h.b16 %v106
    %v737 = vunpack.c.l.b16 %v107
    %v738 = vunpack.c.h.b16 %v107
    %v739 = vunpack.c.l.b16 %v108
    %v740 = vunpack.c.h.b16 %v108
    %v741 = vunpack.c.l.b16 %v109
    %v742 = vunpack.c.h.b16 %v109
    %v743 = vunpack.c.l.b16 %v110
    %v744 = vunpack.c.h.b16 %v110
    %v745 = vunpack.c.l.b16 %v111
    %v746 = vunpack.c.h.b16 %v111
    %v747 = vunpack.c.l.b16 %v112
    %v748 = vunpack.c.h.b16 %v112
    %v749 = vunpack.c.l.b16 %v113
    %v750 = vunpack.c.h.b16 %v113
    %v751 = vunpack.c.l.b16 %v114
    %v752 = vunpack.c.h.b16 %v114
    %v753 = vunpack.c.l.b16 %v115
    %v754 = vunpack.c.h.b16 %v115
    %v755 = vunpack.c.l.b16 %v116
    %v756 = vunpack.c.h.b16 %v116
    %v757 = vunpack.c.l.b16 %v117
    %v758 = vunpack.c.h.b16 %v117
    %v759 = vunpack.c.l.b16 %v118
    %v760 = vunpack.c.h.b16 %v118
    %v761 = vunpack.c.l.b16 %v119
    %v762 = vunpack.c.h.b16 %v119
    %v763 = vunpack.c.l.b16 %v120
    %v764 = vunpack.c.h.b16 %v120
    %v765 = vunpack.c.l.b16 %v121
    %v766 = vunpack.c.h.b16 %v121
    %v767 = vunpack.c.l.b16 %v122
    %v768 = vunpack.c.h.b16 %v122
    %v769 = vunpack.c.l.b16 %v123
    %v770 = vunpack.c.h.b16 %v123
    %v771 = vunpack.c.l.b16 %v124
    %v772 = vunpack.c.h.b16 %v124
    %v773 = vunpack.c.l.b16 %v125
    %v774 = vunpack.c.h.b16 %v125
    %v775 = vunpack.c.l.b16 %v126
    %v776 = vunpack.c.h.b16 %v126
    %v777 = vunpack.c.l.b16 %v127
    %v778 = vunpack.c.h.b16 %v127
    %v779 = vunpack.c.l.b16 %v128
    %v780 = vunpack.c.h.b16 %v128
    %v781 = vunpack.c.l.b16 %v129
    %v782 = vunpack.c.h.b16 %v129
    %v783 = vunpack.c.l.b16 %v130
    %v784 = vunpack.c.h.b16 %v130
    %v785 = vunpack.c.l.b16 %v131
    %v786 = vunpack.c.h.b16 %v131
    %v787 = vunpack.c.l.b16 %v132
    %v788 = vunpack.c.h.b16 %v132
    %v789 = vunpack.c.l.b16 %v133
    %v790 = vunpack.c.h.b16 %v133
    %v791 = vunpack.c.l.b16 %v134
    %v792 = vunpack.c.h.b16 %v134
    %v793 = vunpack.c.l.b16 %v135
    %v794 = vunpack.c.h.b16 %v135
    %v795 = vunpack.c.l.b16 %v136
    %v796 = vunpack.c.h.b16 %v136
    %v797 = vunpack.c.l.b16 %v137
    %v798 = vunpack.c.h.b16 %v137
    %v799 = vunpack.c.l.b16 %v138
    %v800 = vunpack.c.h.b16 %v138
    %v801 = vunpack.c.l.b16 %v139
    %v802 = vunpack.c.h.b16 %v139
    %v803 = vunpack.c.l.b16 %v140
    %v804 = vunpack.c.h.b16 %v140
    %v805 = vunpack.c.l.b16 %v141
    %v806 = vunpack.c.h.b16 %v141
    %v807 = vunpack.c.l.b16 %v142
    %v808 = vunpack.c.h.b16 %v142
    %v809 = vunpack.c.l.b16 %v143
    %v810 = vunpack.c.h.b16 %v143
    %v811 = vunpack.c.l.b16 %v144
    %v812 = vunpack.c.h.b16 %v144
    %v813 = vunpack.c.l.b16 %v145
    %v814 = vunpack.c.h.b16 %v145
    %v815 = vunpack.c.l.b16 %v146
    %v816 = vunpack.c.h.b16 %v146
    %v817 = vunpack.c.l.b16 %v147
    %v818 = vunpack.c.h.b16 %v147
    %v819 = vunpack.c.l.b16 %v148
    %v820 = vunpack.c.h.b16 %v148
    %v821 = vunpack.c.l.b16 %v149
    %v822 = vunpack.c.h.b16 %v149
    %v823 = vunpack.c.l.b16 %v150
    %v824 = vunpack.c.h.b16 %v150
    %v825 = vunpack.c.l.b16 %v151
    %v826 = vunpack.c.h.b16 %v151
    %v827 = vunpack.c.l.b16 %v152
    %v828 = vunpack.c.h.b16 %v152
    %v829 = vunpack.c.l.b16 %v153
    %v830 = vunpack.c.h.b16 %v153
    %v831 = vunpack.c.l.b16 %v154
    %v832 = vunpack.c.h.b16 %v154
    %v833 = vunpack.c.l.b16 %v155
    %v834 = vunpack.c.h.b16 %v155
    %v835 = vunpack.c.l.b16 %v156
    %v836 = vunpack.c.h.b16 %v156
    %v837 = vunpack.c.l.b16 %v157
    %v838 = vunpack.c.h.b16 %v157
    %v839 = vunpack.c.l.b16 %v158
    %v840 = vunpack.c.h.b16 %v158
    %v841 = vunpack.c.l.b16 %v159
    %v842 = vunpack.c.h.b16 %v159
    %v843 = vunpack.c.l.b16 %v160
    %v844 = vunpack.c.h.b16 %v160
    %v845 = vunpack.c.l.b16 %v161
    %v846 = vunpack.c.h.b16 %v161
    %v847 = vunpack.c.l.b16 %v162
    %v848 = vunpack.c.h.b16 %v162
    %v849 = vunpack.c.l.b16 %v163
    %v850 = vunpack.c.h.b16 %v163
    %v851 = vunpack.c.l.b16 %v164
    %v852 = vunpack.c.h.b16 %v164
    %v853 = vunpack.c.l.b16 %v165
    %v854 = vunpack.c.h.b16 %v165
    %v855 = vunpack.c.l.b16 %v166
    %v856 = vunpack.c.h.b16 %v166
    %v857 = vunpack.c.l.b16 %v167
    %v858 = vunpack.c.h.b16 %v167
    %v859 = vunpack.c.l.b16 %v168
    %v860 = vunpack.c.h.b16 %v168
    %v861 = vunpack.c.l.b16 %v169
    %v862 = vunpack.c.h.b16 %v169
    %v863 = vunpack.c.l.b16 %v170
    %v864 = vunpack.c.h.b16 %v170
    %v865 = vunpack.c.l.b16 %v171
    %v866 = vunpack.c.h.b16 %v171
    %v867 = vunpack.c.l.b16 %v172
    %v868 = vunpack.c.h.b16 %v172
    %v869 = vunpack.c.l.b16 %v173
    %v870 = vunpack.c.h.b16 %v173
    %v871 = vunpack.c.l.b16 %v174
    %v872 = vunpack.c.h.b16 %v174
    %v873 = vunpack.c.l.b16 %v175
    %v874 = vunpack.c.h.b16 %v175
    %v875 = vunpack.c.l.b16 %v176
    %v876 = vunpack.c.h.b16 %v176
    %v877 = vunpack.c.l.b16 %v177
    %v878 = vunpack.c.h.b16 %v177
    %v879 = vunpack.c.l.b16 %v178
    %v880 = vunpack.c.h.b16 %v178
    %v881 = vunpack.c.l.b16 %v179
    %v882 = vunpack.c.h.b16 %v179
    %v883 = vunpack.c.l.b16 %v180
    %v884 = vunpack.c.h.b16 %v180
    %v885 = vunpack.c.l.b16 %v181
    %v886 = vunpack.c.h.b16 %v181
    %v887 = vunpack.c.l.b16 %v182
    %v888 = vunpack.c.h.b16 %v182
    %v889 = vunpack.c.l.b16 %v183
    %v890 = vunpack.c.h.b16 %v183
    %v891 = vunpack.c.l.b16 %v184
    %v892 = vunpack.c.h.b16 %v184
    %v893 = vunpack.c.l.b16 %v185
    %v894 = vunpack.c.h.b16 %v185
    %v895 = vunpack.c.l.b16 %v186
    %v896 = vunpack.c.h.b16 %v186
    %v897 = vunpack.c.l.b16 %v187
    %v898 = vunpack.c.h.b16 %v187
    %v899 = vunpack.c.l.b16 %v188
    %v900 = vunpack.c.h.b16 %v188
    %v901 = vunpack.c.l.b16 %v189
    %v902 = vunpack.c.h.b16 %v189
    %v903 = vunpack.c.l.b16 %v190
    %v904 = vunpack.c.h.b16 %v190
    %v905 = vunpack.c.l.b16 %v191
    %v906 = vunpack.c.h.b16 %v191
    %v907 = vunpack.c.l.b16 %v192
    %v908 = vunpack.c.h.b16 %v192
    %v909 = vunpack.c.l.b16 %v193
    %v910 = vunpack.c.h.b16 %v193
    %v911 = vunpack.c.l.b16 %v194
    %v912 = vunpack.c.h.b16 %v194
    %v913 = vunpack.c.l.b16 %v195
    %v914 = vunpack.c.h.b16 %v195
    %v915 = vunpack.c.l.b16 %v196
    %v916 = vunpack.c.h.b16 %v196
    %v917 = vunpack.c.l.b16 %v197
    %v918 = vunpack.c.h.b16 %v197
    %v919 = vunpack.c.l.b16 %v198
    %v920 = vunpack.c.h.b16 %v198
    %v921 = vunpack.c.l.b16 %v199
    %v922 = vunpack.c.h.b16 %v199
    %v923 = vunpack.c.l.b16 %v200
    %v924 = vunpack.c.h.b16 %v200
    %v925 = vunpack.c.l.b16 %v201
    %v926 = vunpack.c.h.b16 %v201
    %v927 = vunpack.c.l.b16 %v202
    %v928 = vunpack.c.h.b16 %v202
    %v929 = vunpack.c.l.b16 %v203
    %v930 = vunpack.c.h.b16 %v203
    %v931 = vunpack.c.l.b16 %v204
    %v932 = vunpack.c.h.b16 %v204
    %v933 = vunpack.c.l.b16 %v205
    %v934 = vunpack.c.h.b16 %v205
    %v935 = vunpack.c.l.b16 %v206
    %v936 = vunpack.c.h.b16 %v206
    %v937 = vunpack.c.l.b16 %v207
    %v938 = vunpack.c.h.b16 %v207
    %v939 = vunpack.c.l.b16 %v208
    %v940 = vunpack.c.h.b16 %v208
    %v941 = vunpack.c.l.b16 %v209
    %v942 = vunpack.c.h.b16 %v209
    %v943 = vunpack.c.l.b16 %v210
    %v944 = vunpack.c.h.b16 %v210
    %v945 = vunpack.c.l.b16 %v211
    %v946 = vunpack.c.h.b16 %v211
    %v947 = vunpack.c.l.b16 %v212
    %v948 = vunpack.c.h.b16 %v212
    %v949 = vunpack.c.l.b16 %v213
    %v950 = vunpack.c.h.b16 %v213
    %v951 = vunpack.c.l.b16 %v214
    %v952 = vunpack.c.h.b16 %v214
    %v953 = vunpack.c.l.b16 %v215
    %v954 = vunpack.c.h.b16 %v215
    %v955 = vunpack.c.l.b16 %v216
    %v956 = vunpack.c.h.b16 %v216
    %v957 = vunpack.c.l.b16 %v217
    %v958 = vunpack.c.h.b16 %v217
    %v959 = vunpack.c.l.b16 %v218
    %v960 = vunpack.c.h.b16 %v218
    %v961 = vunpack.c.l.b16 %v219
    %v962 = vunpack.c.h.b16 %v219
    %v963 = vunpack.c.l.b16 %v220
    %v964 = vunpack.c.h.b16 %v220
    %v965 = vunpack.c.l.b16 %v221
    %v966 = vunpack.c.h.b16 %v221
    %v967 = vunpack.c.l.b16 %v222
    %v968 = vunpack.c.h.b16 %v222
    %v969 = vunpack.c.l.b16 %v223
    %v970 = vunpack.c.h.b16 %v223
    %v971 = vunpack.c.l.b16 %v224
    %v972 = vunpack.c.h.b16 %v224
    %v973 = vunpack.c.l.b16 %v225
    %v974 = vunpack.c.h.b16 %v225
    %v975 = vunpack.c.l.b16 %v226
    %v976 = vunpack.c.h.b16 %v226
    %v977 = vunpack.c.l.b16 %v227
    %v978 = vunpack.c.h.b16 %v227
    %v979 = vunpack.c.l.b16 %v228
    %v980 = vunpack.c.h.b16 %v228
    %v981 = vunpack.c.l.b16 %v229
    %v982 = vunpack.c.h.b16 %v229
    %v983 = vunpack.c.l.b16 %v230
    %v984 = vunpack.c.h.b16 %v230
    %v985 = vunpack.c.l.b16 %v231
    %v986 = vunpack.c.h.b16 %v231
    %v987 = vunpack.c.l.b16 %v232
    %v988 = vunpack.c.h.b16 %v232
    %v989 = vunpack.c.l.b16 %v233
    %v990 = vunpack.c.h.b16 %v233
    %v991 = vunpack.c.l.b16 %v234
    %v992 = vunpack.c.h.b16 %v234
    %v993 = vunpack.c.l.b16 %v235
    %v994 = vunpack.c.h.b16 %v235
    %v995 = vunpack.c.l.b16 %v236
    %v996 = vunpack.c.h.b16 %v236
    %v997 = vunpack.c.l.b16 %v237
    %v998 = vunpack.c.h.b16 %v237
    %v999 = vunpack.c.l.b16 %v238
    %v1000 = vunpack.c.h.b16 %v238
    %v1001 = vunpack.c.l.b16 %v239
    %v1002 = vunpack.c.h.b16 %v239
    %v1003 = vunpack.c.l.b16 %v240
    %v1004 = vunpack.c.h.b16 %v240
    %v1005 = vunpack.c.l.b16 %v241
    %v1006 = vunpack.c.h.b16 %v241
    %v1007 = vunpack.c.l.b16 %v242
    %v1008 = vunpack.c.h.b16 %v242
    %v1009 = vunpack.c.l.b16 %v243
    %v1010 = vunpack.c.h.b16 %v243
    %v1011 = vunpack.c.l.b16 %v244
    %v1012 = vunpack.c.h.b16 %v244
    %v1013 = vunpack.c.l.b16 %v245
    %v1014 = vunpack.c.h.b16 %v245
    %v1015 = vunpack.c.l.b16 %v246
    %v1016 = vunpack.c.h.b16 %v246
    %v1017 = vunpack.c.l.b16 %v247
    %v1018 = vunpack.c.h.b16 %v247
    %v1019 = vunpack.c.l.b16 %v248
    %v1020 = vunpack.c.h.b16 %v248
    %v1021 = vunpack.c.l.b16 %v249
    %v1022 = vunpack.c.h.b16 %v249
    %v1023 = vunpack.c.l.b16 %v250
    %v1024 = vunpack.c.h.b16 %v250
    %v1025 = vunpack.c.l.b16 %v251
    %v1026 = vunpack.c.h.b16 %v251
    %v1027 = vunpack.c.l.b16 %v252
    %v1028 = vunpack.c.h.b16 %v252
    %v1029 = vunpack.c.l.b16 %v253
    %v1030 = vunpack.c.h.b16 %v253
    %v1031 = vunpack.c.l.b16 %v254
    %v1032 = vunpack.c.h.b16 %v254
    %v1033 = vunpack.c.l.b16 %v255
    %v1034 = vunpack.c.h.b16 %v255
    %v1035 = vunpack.c.l.b16 %v256
    %v1036 = vunpack.c.h.b16 %v256
    %v1037 = vunpack.c.l.b16 %v257
    %v1038 = vunpack.c.h.b16 %v257
    %v1039 = vunpack.c.l.b16 %v258
    %v1040 = vunpack.c.h.b16 %v258
    %v1041 = vunpack.c.l.b16 %v259
    %v1042 = vunpack.c.h.b16 %v259
    %v1043 = vunpack.c.l.b16 %v260
    %v1044 = vunpack.c.h.b16 %v260
    %v1045 = vunpack.c.l.b16 %v261
    %v1046 = vunpack.c.h.b16 %v261
    %v1047 = vunpack.c.l.b16 %v262
    %v1048 = vunpack.c.h.b16 %v262
    %v1049 = vunpack.c.l.b16 %v263
    %v1050 = vunpack.c.h.b16 %v263
    %v1051 = vunpack.c.l.b16 %v264
    %v1052 = vunpack.c.h.b16 %v264
    %v1053 = vunpack.c.l.b16 %v265
    %v1054 = vunpack.c.h.b16 %v265
    %v1055 = vunpack.c.l.b16 %v266
    %v1056 = vunpack.c.h.b16 %v266
    %v1057 = vunpack.c.l.b16 %v267
    %v1058 = vunpack.c.h.b16 %v267
    %v1059 = vunpack.c.l.b16 %v268
    %v1060 = vunpack.c.h.b16 %v268
    %v1061 = vunpack.c.l.b16 %v269
    %v1062 = vunpack.c.h.b16 %v269
    %v1063 = vunpack.c.l.b16 %v270
    %v1064 = vunpack.c.h.b16 %v270
    %v1065 = vunpack.c.l.b16 %v271
    %v1066 = vunpack.c.h.b16 %v271
    %v1067 = vunpack.c.l.b16 %v272
    %v1068 = vunpack.c.h.b16 %v272
    %v1069 = vunpack.c.l.b16 %v273
    %v1070 = vunpack.c.h.b16 %v273
    %v1071 = vunpack.c.l.b16 %v274
    %v1072 = vunpack.c.h.b16 %v274
    %v1073 = vunpack.c.l.b16 %v275
    %v1074 = vunpack.c.h.b16 %v275
    %v1075 = vunpack.c.l.b16 %v276
    %v1076 = vunpack.c.h.b16 %v276
    %v1077 = vunpack.c.l.b16 %v277
    %v1078 = vunpack.c.h.b16 %v277
    %v1079 = vunpack.c.l.b16 %v278
    %v1080 = vunpack.c.h.b16 %v278
    %v1081 = vunpack.c.l.b16 %v279
    %v1082 = vunpack.c.h.b16 %v279
    %v1083 = vunpack.c.l.b16 %v280
    %v1084 = vunpack.c.h.b16 %v280
    %v1085 = vunpack.c.l.b16 %v281
    %v1086 = vunpack.c.h.b16 %v281
    %v1087 = vunpack.c.l.b16 %v282
    %v1088 = vunpack.c.h.b16 %v282
    %v1089 = vunpack.c.l.b16 %v283
    %v1090 = vunpack.c.h.b16 %v283
    %v1091 = vunpack.c.l.b16 %v284
    %v1092 = vunpack.c.h.b16 %v284
    %v1093 = vunpack.c.l.b16 %v285
    %v1094 = vunpack.c.h.b16 %v285
    %v1095 = vunpack.c.l.b16 %v286
    %v1096 = vunpack.c.h.b16 %v286
    %v1097 = vunpack.c.l.b16 %v287
    %v1098 = vunpack.c.h.b16 %v287
    %v1099 = vunpack.c.l.b16 %v288
    %v1100 = vunpack.c.h.b16 %v288
    %v1101 = vunpack.c.l.b16 %v289
    %v1102 = vunpack.c.h.b16 %v289
    %v1103 = vunpack.c.l.b16 %v290
    %v1104 = vunpack.c.h.b16 %v290
    %v1105 = vunpack.c.l.b16 %v291
    %v1106 = vunpack.c.h.b16 %v291
    %v1107 = vunpack.c.l.b16 %v292
    %v1108 = vunpack.c.h.b16 %v292
    %v1109 = vunpack.c.l.b16 %v293
    %v1110 = vunpack.c.h.b16 %v293
    %v1111 = vunpack.c.l.b16 %v294
    %v1112 = vunpack.c.h.b16 %v294
    %v1113 = vunpack.c.l.b16 %v295
    %v1114 = vunpack.c.h.b16 %v295
    %v1115 = vunpack.c.l.b16 %v296
    %v1116 = vunpack.c.h.b16 %v296
    %v1117 = vunpack.c.l.b16 %v297
    %v1118 = vunpack.c.h.b16 %v297
    %v1119 = vunpack.c.l.b16 %v298
    %v1120 = vunpack.c.h.b16 %v298
    %v1121 = vunpack.c.l.b16 %v299
    %v1122 = vunpack.c.h.b16 %v299
    %v1123 = vunpack.c.l.b16 %v300
    %v1124 = vunpack.c.h.b16 %v300
    %v1125 = vunpack.c.l.b16 %v301
    %v1126 = vunpack.c.h.b16 %v301
    %v1127 = vunpack.c.l.b16 %v302
    %v1128 = vunpack.c.h.b16 %v302
    %v1129 = vunpack.c.l.b16 %v303
    %v1130 = vunpack.c.h.b16 %v303
    %v1131 = vunpack.c.l.b16 %v304
    %v1132 = vunpack.c.h.b16 %v304
    %v1133 = vunpack.c.l.b16 %v305
    %v1134 = vunpack.c.h.b16 %v305
    %v1135 = vunpack.c.l.b16 %v306
    %v1136 = vunpack.c.h.b16 %v306
    %v1137 = vunpack.c.l.b16 %v307
    %v1138 = vunpack.c.h.b16 %v307
    %v1139 = vunpack.c.l.b16 %v308
    %v1140 = vunpack.c.h.b16 %v308
    %v1141 = vunpack.c.l.b16 %v309
    %v1142 = vunpack.c.h.b16 %v309
    %v1143 = vunpack.c.l.b16 %v310
    %v1144 = vunpack.c.h.b16 %v310
    %v1145 = vunpack.c.l.b16 %v311
    %v1146 = vunpack.c.h.b16 %v311
    %v1147 = vunpack.c.l.b16 %v312
    %v1148 = vunpack.c.h.b16 %v312
    %v1149 = vunpack.c.l.b16 %v313
    %v1150 = vunpack.c.h.b16 %v313
    %v1151 = vunpack.c.l.b16 %v314
    %v1152 = vunpack.c.h.b16 %v314
    %v1153 = vunpack.c.l.b16 %v315
    %v1154 = vunpack.c.h.b16 %v315
    %v1155 = vunpack.c.l.b16 %v316
    %v1156 = vunpack.c.h.b16 %v316
    %v1157 = vunpack.c.l.b16 %v317
    %v1158 = vunpack.c.h.b16 %v317
    %v1159 = vunpack.c.l.b16 %v318
    %v1160 = vunpack.c.h.b16 %v318
    %v1161 = vunpack.c.l.b16 %v319
    %v1162 = vunpack.c.h.b16 %v319
    %v1163 = vunpack.c.l.b16 %v320
    %v1164 = vunpack.c.h.b16 %v320
    %v1165 = vunpack.c.l.b16 %v321
    %v1166 = vunpack.c.h.b16 %v321
    %v1167 = vunpack.c.l.b16 %v322
    %v1168 = vunpack.c.h.b16 %v322
    %v1169 = vunpack.c.l.b16 %v323
    %v1170 = vunpack.c.h.b16 %v323
    %v1171 = vunpack.c.l.b16 %v324
    %v1172 = vunpack.c.h.b16 %v324
    %v1173 = vunpack.c.l.b16 %v325
    %v1174 = vunpack.c.h.b16 %v325
    %v1175 = vunpack.c.l.b16 %v326
    %v1176 = vunpack.c.h.b16 %v326
    %v1177 = vunpack.c.l.b16 %v327
    %v1178 = vunpack.c.h.b16 %v327
    %v1179 = vunpack.c.l.b16 %v328
    %v1180 = vunpack.c.h.b16 %v328
    %v1181 = vunpack.c.l.b16 %v329
    %v1182 = vunpack.c.h.b16 %v329
    %v1183 = vunpack.c.l.b16 %v330
    %v1184 = vunpack.c.h.b16 %v330
    %v1185 = vunpack.c.l.b16 %v331
    %v1186 = vunpack.c.h.b16 %v331
    %v1187 = vunpack.c.l.b16 %v332
    %v1188 = vunpack.c.h.b16 %v332
    %v1189 = vunpack.c.l.b16 %v333
    %v1190 = vunpack.c.h.b16 %v333
    %v1191 = vunpack.c.l.b16 %v334
    %v1192 = vunpack.c.h.b16 %v334
    %v1193 = vunpack.c.l.b16 %v335
    %v1194 = vunpack.c.h.b16 %v335
    %v1195 = vunpack.c.l.b16 %v336
    %v1196 = vunpack.c.h.b16 %v336
    %v1197 = vunpack.c.l.b16 %v337
    %v1198 = vunpack.c.h.b16 %v337
    %v1199 = vunpack.c.l.b16 %v338
    %v1200 = vunpack.c.h.b16 %v338
    %v1201 = vunpack.c.l.b16 %v339
    %v1202 = vunpack.c.h.b16 %v339
    %v1203 = vunpack.c.l.b16 %v340
    %v1204 = vunpack.c.h.b16 %v340
    %v1205 = vunpack.c.l.b16 %v341
    %v1206 = vunpack.c.h.b16 %v341
    %v1207 = vunpack.c.l.b16 %v342
    %v1208 = vunpack.c.h.b16 %v342
    %v1209 = vunpack.c.l.b16 %v343
    %v1210 = vunpack.c.h.b16 %v343
    %v1211 = vunpack.c.l.b16 %v344
    %v1212 = vunpack.c.h.b16 %v344
    %v1213 = vunpack.c.l.b16 %v345
    %v1214 = vunpack.c.h.b16 %v345
    %v1215 = vunpack.c.l.b16 %v346
    %v1216 = vunpack.c.h.b16 %v346
    %v1217 = vunpack.c.l.b16 %v347
    %v1218 = vunpack.c.h.b16 %v347
    %v1219 = vunpack.c.l.b16 %v348
    %v1220 = vunpack.c.h.b16 %v348
    %v1221 = vunpack.c.l.b16 %v349
    %v1222 = vunpack.c.h.b16 %v349
    %v1223 = vunpack.c.l.b16 %v350
    %v1224 = vunpack.c.h.b16 %v350
    %v1225 = vunpack.c.l.b16 %v351
    %v1226 = vunpack.c.h.b16 %v351
    %v1227 = vunpack.c.l.b16 %v352
    %v1228 = vunpack.c.h.b16 %v352
    %v1229 = vunpack.c.l.b16 %v353
    %v1230 = vunpack.c.h.b16 %v353
    %v1231 = vunpack.c.l.b16 %v354
    %v1232 = vunpack.c.h.b16 %v354
    %v1233 = vunpack.c.l.b16 %v355
    %v1234 = vunpack.c.h.b16 %v355
    %v1235 = vunpack.c.l.b16 %v356
    %v1236 = vunpack.c.h.b16 %v356
    %v1237 = vunpack.c.l.b16 %v357
    %v1238 = vunpack.c.h.b16 %v357
    %v1239 = vunpack.c.l.b16 %v358
    %v1240 = vunpack.c.h.b16 %v358
    %v1241 = vunpack.c.l.b16 %v359
    %v1242 = vunpack.c.h.b16 %v359
    %v1243 = vunpack.c.l.b16 %v360
    %v1244 = vunpack.c.h.b16 %v360
    %v1245 = vunpack.c.l.b16 %v361
    %v1246 = vunpack.c.h.b16 %v361
    %v1247 = vunpack.c.l.b16 %v362
    %v1248 = vunpack.c.h.b16 %v362
    %v1249 = vunpack.c.l.b16 %v363
    %v1250 = vunpack.c.h.b16 %v363
    %v1251 = vunpack.c.l.b16 %v364
    %v1252 = vunpack.c.h.b16 %v364
    %v1253 = vunpack.c.l.b16 %v365
    %v1254 = vunpack.c.h.b16 %v365
    %v1255 = vunpack.c.l.b16 %v366
    %v1256 = vunpack.c.h.b16 %v366
    %v1257 = vunpack.c.l.b16 %v367
    %v1258 = vunpack.c.h.b16 %v367
    %v1259 = vunpack.c.l.b16 %v368
    %v1260 = vunpack.c.h.b16 %v368
    %v1261 = vunpack.c.l.b16 %v369
    %v1262 = vunpack.c.h.b16 %v369
    %v1263 = vunpack.c.l.b16 %v370
    %v1264 = vunpack.c.h.b16 %v370
    %v1265 = vunpack.c.l.b16 %v371
    %v1266 = vunpack.c.h.b16 %v371
    %v1267 = vunpack.c.l.b16 %v372
    %v1268 = vunpack.c.h.b16 %v372
    %v1269 = vunpack.c.l.b16 %v373
    %v1270 = vunpack.c.h.b16 %v373
    %v1271 = vunpack.c.l.b16 %v374
    %v1272 = vunpack.c.h.b16 %v374
    %v1273 = vunpack.c.l.b16 %v375
    %v1274 = vunpack.c.h.b16 %v375
    %v1275 = vunpack.c.l.b16 %v376
    %v1276 = vunpack.c.h.b16 %v376
    %v1277 = vunpack.c.l.b16 %v377
    %v1278 = vunpack.c.h.b16 %v377
    %v1279 = vunpack.c.l.b16 %v378
    %v1280 = vunpack.c.h.b16 %v378
    %v1281 = vunpack.c.l.b16 %v379
    %v1282 = vunpack.c.h.b16 %v379
    %v1283 = vunpack.c.l.b16 %v380
    %v1284 = vunpack.c.h.b16 %v380
    %v1285 = vunpack.c.l.b16 %v381
    %v1286 = vunpack.c.h.b16 %v381
    %v1287 = vunpack.c.l.b16 %v382
    %v1288 = vunpack.c.h.b16 %v382
    %v1289 = vunpack.c.l.b16 %v383
    %v1290 = vunpack.c.h.b16 %v383
    %v1291 = vunpack.c.l.b16 %v384
    %v1292 = vunpack.c.h.b16 %v384
    %v1293 = vunpack.c.l.b16 %v385
    %v1294 = vunpack.c.h.b16 %v385
    %v1295 = vunpack.c.l.b16 %v386
    %v1296 = vunpack.c.h.b16 %v386
    %v1297 = vunpack.c.l.b16 %v387
    %v1298 = vunpack.c.h.b16 %v387
    %v1299 = vunpack.c.l.b16 %v388
    %v1300 = vunpack.c.h.b16 %v388
    %v1301 = vunpack.c.l.b16 %v389
    %v1302 = vunpack.c.h.b16 %v389
    %v1303 = vunpack.c.l.b16 %v390
    %v1304 = vunpack.c.h.b16 %v390
    %v1305 = vunpack.c.l.b16 %v391
    %v1306 = vunpack.c.h.b16 %v391
    %v1307 = vunpack.c.l.b16 %v392
    %v1308 = vunpack.c.h.b16 %v392
    %v1309 = vunpack.c.l.b16 %v393
    %v1310 = vunpack.c.h.b16 %v393
    %v1311 = vpack.c.b16 %v719, %v711
    %v1312 = vpack.c.b16 %v720, %v712
    %v1313 = vpack.c.b16 %v721, %v713
    %v1314 = vpack.c.b16 %v722, %v714
    %v1315 = vpack.c.b16 %v723, %v715
    %v1316 = vpack.c.b16 %v724, %v716
    %v1317 = vpack.c.b16 %v725, %v717
    %v1318 = vpack.c.b16 %v726, %v718
    %v1319 = vpack.c.b16 %v735, %v727
    %v1320 = vpack.c.b16 %v736, %v728
    %v1321 = vpack.c.b16 %v737, %v729
    %v1322 = vpack.c.b16 %v738, %v730
    %v1323 = vpack.c.b16 %v739, %v731
    %v1324 = vpack.c.b16 %v740, %v732
    %v1325 = vpack.c.b16 %v741, %v733
    %v1326 = vpack.c.b16 %v742, %v734
    %v1327 = vpack.c.b16 %v751, %v743
    %v1328 = vpack.c.b16 %v752, %v744
    %v1329 = vpack.c.b16 %v753, %v745
    %v1330 = vpack.c.b16 %v754, %v746
    %v1331 = vpack.c.b16 %v755, %v747
    %v1332 = vpack.c.b16 %v756, %v748
    %v1333 = vpack.c.b16 %v757, %v749
    %v1334 = vpack.c.b16 %v758, %v750
    %v1335 = vpack.c.b16 %v767, %v759
    %v1336 = vpack.c.b16 %v768, %v760
    %v1337 = vpack.c.b16 %v769, %v761
    %v1338 = vpack.c.b16 %v770, %v762
    %v1339 = vpack.c.b16 %v771, %v763
    %v1340 = vpack.c.b16 %v772, %v764
    %v1341 = vpack.c.b16 %v773, %v765
    %v1342 = vpack.c.b16 %v774, %v766
    %v1343 = vpack.c.b16 %v783, %v775
    %v1344 = vpack.c.b16 %v784, %v776
    %v1345 = vpack.c.b16 %v785, %v777
    %v1346 = vpack.c.b16 %v786, %v778
    %v1347 = vpack.c.b16 %v787, %v779
    %v1348 = vpack.c.b16 %v788, %v780
    %v1349 = vpack.c.b16 %v789, %v781
    %v1350 = vpack.c.b16 %v790, %v782
    %v1351 = vpack.c.b16 %v799, %v791
    %v1352 = vpack.c.b16 %v800, %v792
    %v1353 = vpack.c.b16 %v801, %v793
    %v1354 = vpack.c.b16 %v802, %v794
    %v1355 = vpack.c.b16 %v803, %v795
    %v1356 = vpack.c.b16 %v804, %v796
    %v1357 = vpack.c.b16 %v805, %v797
    %v1358 = vpack.c.b16 %v806, %v798
    %v1359 = vpack.c.b16 %v815, %v807
    %v1360 = vpack.c.b16 %v816, %v808
    %v1361 = vpack.c.b16 %v817, %v809
    %v1362 = vpack.c.b16 %v818, %v810
    %v1363 = vpack.c.b16 %v819, %v811
    %v1364 = vpack.c.b16 %v820, %v812
    %v1365 = vpack.c.b16 %v821, %v813
    %v1366 = vpack.c.b16 %v822, %v814
    %v1367 = vpack.c.b16 %v831, %v823
    %v1368 = vpack.c.b16 %v832, %v824
    %v1369 = vpack.c.b16 %v833, %v825
    %v1370 = vpack.c.b16 %v834, %v826
    %v1371 = vpack.c.b16 %v835, %v827
    %v1372 = vpack.c.b16 %v836, %v828
    %v1373 = vpack.c.b16 %v837, %v829
    %v1374 = vpack.c.b16 %v838, %v830
    %v1375 = vpack.c.b16 %v847, %v839
    %v1376 = vpack.c.b16 %v848, %v840
    %v1377 = vpack.c.b16 %v849, %v841
    %v1378 = vpack.c.b16 %v850, %v842
    %v1379 = vpack.c.b16 %v851, %v843
    %v1380 = vpack.c.b16 %v852, %v844
    %v1381 = vpack.c.b16 %v853, %v845
    %v1382 = vpack.c.b16 %v854, %v846
    %v1383 = vpack.c.b16 %v863, %v855
    %v1384 = vpack.c.b16 %v864, %v856
    %v1385 = vpack.c.b16 %v865, %v857
    %v1386 = vpack.c.b16 %v866, %v858
    %v1387 = vpack.c.b16 %v867, %v859
    %v1388 = vpack.c.b16 %v868, %v860
    %v1389 = vpack.c.b16 %v869, %v861
    %v1390 = vpack.c.b16 %v870, %v862
    %v1391 = vpack.c.b16 %v879, %v871
    %v1392 = vpack.c.b16 %v880, %v872
    %v1393 = vpack.c.b16 %v881, %v873
    %v1394 = vpack.c.b16 %v882, %v874
    %v1395 = vpack.c.b16 %v883, %v875
    %v1396 = vpack.c.b16 %v884, %v876
    %v1397 = vpack.c.b16 %v885, %v877
    %v1398 = vpack.c.b16 %v886, %v878
    %v1399 = vpack.c.b16 %v895, %v887
    %v1400 = vpack.c.b16 %v896, %v888
    %v1401 = vpack.c.b16 %v897, %v889
    %v1402 = vpack.c.b16 %v898, %v890
    %v1403 = vpack.c.b16 %v899, %v891
    %v1404 = vpack.c.b16 %v900, %v892
    %v1405 = vpack.c.b16 %v901, %v893
    %v1406 = vpack.c.b16 %v902, %v894
    %v1407 = vpack.c.b16 %v911, %v903
    %v1408 = vpack.c.b16 %v912, %v904
    %v1409 = vpack.c.b16 %v913, %v905
    %v1410 = vpack.c.b16 %v914, %v906
    %v1411 = vpack.c.b16 %v915, %v907
    %v1412 = vpack.c.b16 %v916, %v908
    %v1413 = vpack.c.b16 %v917, %v909
    %v1414 = vpack.c.b16 %v918, %v910
    %v1415 = vpack.c.b16 %v927, %v919
    %v1416 = vpack.c.b16 %v928, %v920
    %v1417 = vpack.c.b16 %v929, %v921
    %v1418 = vpack.c.b16 %v930, %v922
    %v1419 = vpack.c.b16 %v931, %v923
    %v1420 = vpack.c.b16 %v932, %v924
    %v1421 = vpack.c.b16 %v933, %v925
    %v1422 = vpack.c.b16 %v934, %v926
    %v1423 = vpack.c.b16 %v943, %v935
    %v1424 = vpack.c.b16 %v944, %v936
    %v1425 = vpack.c.b16 %v945, %v937
    %v1426 = vpack.c.b16 %v946, %v938
    %v1427 = vpack.c.b16 %v947, %v939
    %v1428 = vpack.c.b16 %v948, %v940
    %v1429 = vpack.c.b16 %v949, %v941
    %v1430 = vpack.c.b16 %v950, %v942
    %v1431 = vpack.c.b16 %v959, %v951
    %v1432 = vpack.c.b16 %v960, %v952
    %v1433 = vpack.c.b16 %v961, %v953
    %v1434 = vpack.c.b16 %v962, %v954
    %v1435 = vpack.c.b16 %v963, %v955
    %v1436 = vpack.c.b16 %v964, %v956
    %v1437 = vpack.c.b16 %v965, %v957
    %v1438 = vpack.c.b16 %v966, %v958
    %v1439 = vpack.c.b16 %v975, %v967
    %v1440 = vpack.c.b16 %v976, %v968
    %v1441 = vpack.c.b16 %v977, %v969
    %v1442 = vpack.c.b16 %v978, %v970
    %v1443 = vpack.c.b16 %v979, %v971
    %v1444 = vpack.c.b16 %v980, %v972
    %v1445 = vpack.c.b16 %v981, %v973
    %v1446 = vpack.c.b16 %v982, %v974
    %v1447 = vpack.c.b16 %v991, %v983
    %v1448 = vpack.c.b16 %v992, %v984
    %v1449 = vpack.c.b16 %v993, %v985
    %v1450 = vpack.c.b16 %v994, %v986
    %v1451 = vpack.c.b16 %v995, %v987
    %v1452 = vpack.c.b16 %v996, %v988
    %v1453 = vpack.c.b16 %v997, %v989
    %v1454 = vpack.c.b16 %v998, %v990
    %v1455 = vpack.c.b16 %v1007, %v999
    %v1456 = vpack.c.b16 %v1008, %v1000
    %v1457 = vpack.c.b16 %v1009, %v1001
    %v1458 = vpack.c.b16 %v1010, %v1002
    %v1459 = vpack.c.b16 %v1011, %v1003
    %v1460 = vpack.c.b16 %v1012, %v1004
    %v1461 = vpack.c.b16 %v1013, %v1005
    %v1462 = vpack.c.b16 %v1014, %v1006
    %v1463 = vpack.c.b16 %v1023, %v1015
    %v1464 = vpack.c.b16 %v1024, %v1016
    %v1465 = vpack.c.b16 %v1025, %v1017
    %v1466 = vpack.c.b16 %v1026, %v1018
    %v1467 = vpack.c.b16 %v1027, %v1019
    %v1468 = vpack.c.b16 %v1028, %v1020
    %v1469 = vpack.c.b16 %v1029, %v1021
    %v1470 = vpack.c.b16 %v1030, %v1022
    %v1471 = vpack.c.b16 %v1039, %v1031
    %v1472 = vpack.c.b16 %v1040, %v1032
    %v1473 = vpack.c.b16 %v1041, %v1033
    %v1474 = vpack.c.b16 %v1042, %v1034
    %v1475 = vpack.c.b16 %v1043, %v1035
    %v1476 = vpack.c.b16 %v1044, %v1036
    %v1477 = vpack.c.b16 %v1045, %v1037
    %v1478 = vpack.c.b16 %v1046, %v1038
    %v1479 = vpack.c.b16 %v1055, %v1047
    %v1480 = vpack.c.b16 %v1056, %v1048
    %v1481 = vpack.c.b16 %v1057, %v1049
    %v1482 = vpack.c.b16 %v1058, %v1050
    %v1483 = vpack.c.b16 %v1059, %v1051
    %v1484 = vpack.c.b16 %v1060, %v1052
    %v1485 = vpack.c.b16 %v1061, %v1053
    %v1486 = vpack.c.b16 %v1062, %v1054
    %v1487 = vpack.c.b16 %v1071, %v1063
    %v1488 = vpack.c.b16 %v1072, %v1064
    %v1489 = vpack.c.b16 %v1073, %v1065
    %v1490 = vpack.c.b16 %v1074, %v1066
    %v1491 = vpack.c.b16 %v1075, %v1067
    %v1492 = vpack.c.b16 %v1076, %v1068
    %v1493 = vpack.c.b16 %v1077, %v1069
    %v1494 = vpack.c.b16 %v1078, %v1070
    %v1495 = vpack.c.b16 %v1087, %v1079
    %v1496 = vpack.c.b16 %v1088, %v1080
    %v1497 = vpack.c.b16 %v1089, %v1081
    %v1498 = vpack.c.b16 %v1090, %v1082
    %v1499 = vpack.c.b16 %v1091, %v1083
    %v1500 = vpack.c.b16 %v1092, %v1084
    %v1501 = vpack.c.b16 %v1093, %v1085
    %v1502 = vpack.c.b16 %v1094, %v1086
    %v1503 = vpack.c.b16 %v1103, %v1095
    %v1504 = vpack.c.b16 %v1104, %v1096
    %v1505 = vpack.c.b16 %v1105, %v1097
    %v1506 = vpack.c.b16 %v1106, %v1098
    %v1507 = vpack.c.b16 %v1107, %v1099
    %v1508 = vpack.c.b16 %v1108, %v1100
    %v1509 = vpack.c.b16 %v1109, %v1101
    %v1510 = vpack.c.b16 %v1110, %v1102
    %v1511 = vpack.c.b16 %v1119, %v1111
    %v1512 = vpack.c.b16 %v1120, %v1112
    %v1513 = vpack.c.b16 %v1121, %v1113
    %v1514 = vpack.c.b16 %v1122, %v1114
    %v1515 = vpack.c.b16 %v1123, %v1115
    %v1516 = vpack.c.b16 %v1124, %v1116
    %v1517 = vpack.c.b16 %v1125, %v1117
    %v1518 = vpack.c.b16 %v1126, %v1118
    %v1519 = vpack.c.b16 %v1135, %v1127
    %v1520 = vpack.c.b16 %v1136, %v1128
    %v1521 = vpack.c.b16 %v1137, %v1129
    %v1522 = vpack.c.b16 %v1138, %v1130
    %v1523 = vpack.c.b16 %v1139, %v1131
    %v1524 = vpack.c.b16 %v1140, %v1132
    %v1525 = vpack.c.b16 %v1141, %v1133
    %v1526 = vpack.c.b16 %v1142, %v1134
    %v1527 = vpack.c.b16 %v1151, %v1143
    %v1528 = vpack.c.b16 %v1152, %v1144
    %v1529 = vpack.c.b16 %v1153, %v1145
    %v1530 = vpack.c.b16 %v1154, %v1146
    %v1531 = vpack.c.b16 %v1155, %v1147
    %v1532 = vpack.c.b16 %v1156, %v1148
    %v1533 = vpack.c.b16 %v1157, %v1149
    %v1534 = vpack.c.b16 %v1158, %v1150
    %v1535 = vpack.c.b16 %v1167, %v1159
    %v1536 = vpack.c.b16 %v1168, %v1160
    %v1537 = vpack.c.b16 %v1169, %v1161
    %v1538 = vpack.c.b16 %v1170, %v1162
    %v1539 = vpack.c.b16 %v1171, %v1163
    %v1540 = vpack.c.b16 %v1172, %v1164
    %v1541 = vpack.c.b16 %v1173, %v1165
    %v1542 = vpack.c.b16 %v1174, %v1166
    %v1543 = vpack.c.b16 %v1183, %v1175
    %v1544 = vpack.c.b16 %v1184, %v1176
    %v1545 = vpack.c.b16 %v1185, %v1177
    %v1546 = vpack.c.b16 %v1186, %v1178
    %v1547 = vpack.c.b16 %v1187, %v1179
    %v1548 = vpack.c.b16 %v1188, %v1180
    %v1549 = vpack.c.b16 %v1189, %v1181
    %v1550 = vpack.c.b16 %v1190, %v1182
    %v1551 = vpack.c.b16 %v1199, %v1191
    %v1552 = vpack.c.b16 %v1200, %v1192
    %v1553 = vpack.c.b16 %v1201, %v1193
    %v1554 = vpack.c.b16 %v1202, %v1194
    %v1555 = vpack.c.b16 %v1203, %v1195
    %v1556 = vpack.c.b16 %v1204, %v1196
    %v1557 = vpack.c.b16 %v1205, %v1197
    %v1558 = vpack.c.b16 %v1206, %v1198
    %v1559 = vpack.c.b16 %v1215, %v1207
    %v1560 = vpack.c.b16 %v1216, %v1208
    %v1561 = vpack.c.b16 %v1217, %v1209
    %v1562 = vpack.c.b16 %v1218, %v1210
    %v1563 = vpack.c.b16 %v1219, %v1211
    %v1564 = vpack.c.b16 %v1220, %v1212
    %v1565 = vpack.c.b16 %v1221, %v1213
    %v1566 = vpack.c.b16 %v1222, %v1214
    %v1567 = vpack.c.b16 %v1231, %v1223
    %v1568 = vpack.c.b16 %v1232, %v1224
    %v1569 = vpack.c.b16 %v1233, %v1225
    %v1570 = vpack.c.b16 %v1234, %v1226
    %v1571 = vpack.c.b16 %v1235, %v1227
    %v1572 = vpack.c.b16 %v1236, %v1228
    %v1573 = vpack.c.b16 %v1237, %v1229
    %v1574 = vpack.c.b16 %v1238, %v1230
    %v1575 = vpack.c.b16 %v1247, %v1239
    %v1576 = vpack.c.b16 %v1248, %v1240
    %v1577 = vpack.c.b16 %v1249, %v1241
    %v1578 = vpack.c.b16 %v1250, %v1242
    %v1579 = vpack.c.b16 %v1251, %v1243
    %v1580 = vpack.c.b16 %v1252, %v1244
    %v1581 = vpack.c.b16 %v1253, %v1245
    %v1582 = vpack.c.b16 %v1254, %v1246
    %v1583 = vpack.c.b16 %v1263, %v1255
    %v1584 = vpack.c.b16 %v1264, %v1256
    %v1585 = vpack.c.b16 %v1265, %v1257
    %v1586 = vpack.c.b16 %v1266, %v1258
    %v1587 = vpack.c.b16 %v1267, %v1259
    %v1588 = vpack.c.b16 %v1268, %v1260
    %v1589 = vpack.c.b16 %v1269, %v1261
    %v1590 = vpack.c.b16 %v1270, %v1262
    %v1591 = vpack.c.b16 %v1279, %v1271
    %v1592 = vpack.c.b16 %v1280, %v1272
    %v1593 = vpack.c.b16 %v1281, %v1273
    %v1594 = vpack.c.b16 %v1282, %v1274
    %v1595 = vpack.c.b16 %v1283, %v1275
    %v1596 = vpack.c.b16 %v1284, %v1276
    %v1597 = vpack.c.b16 %v1285, %v1277
    %v1598 = vpack.c.b16 %v1286, %v1278
    %v1599 = vpack.c.b16 %v1295, %v1287
    %v1600 = vpack.c.b16 %v1296, %v1288
    %v1601 = vpack.c.b16 %v1297, %v1289
    %v1602 = vpack.c.b16 %v1298, %v1290
    %v1603 = vpack.c.b16 %v1299, %v1291
    %v1604 = vpack.c.b16 %v1300, %v1292
    %v1605 = vpack.c.b16 %v1301, %v1293
    %v1606 = vpack.c.b16 %v1302, %v1294
    %v1607 = vpack.c.b16 %v1303, %v1303
    %v1608 = vpack.c.b16 %v1304, %v1304
    %v1609 = vpack.c.b16 %v1305, %v1305
    %v1610 = vpack.c.b16 %v1306, %v1306
    %v1611 = vpack.c.b16 %v1307, %v1307
    %v1612 = vpack.c.b16 %v1308, %v1308
    %v1613 = vpack.c.b16 %v1309, %v1309
    %v1614 = vpack.c.b16 %v1310, %v1310
    %vm1911 = vcmask 719872
    %v1913 = vsel %vm1911, %v406, 0
    %vm1915 = vcmask 1043456
    %v1917 = vsel %vm1915, %v1607, 0
    %v1920 = vsel %vm1915, %v1608, 0
    %v1923 = vsel %vm1915, %v1609, 0
    %v1926 = vsel %vm1915, %v1610, 0
    %v1929 = vsel %vm1915, %v1611, 0
    %v1932 = vsel %vm1915, %v1612, 0
    %v1935 = vsel %vm1915, %v1613, 0
    %v1938 = vsel %vm1915, %v1614, 0
    %1940 = vmatprep.subr.bf16.mxu0 %v1312
    %1941 = vmatpush1.bf16.msra.mxu0 %v1311
    %1942 = vmatprep.subr.bf16.mxu0 %v1320
    %1943 = vmatpush1.bf16.msra.mxu0 %v1319
    %1944 = vmatprep.subr.bf16.mxu0 %v1328
    %1945 = vmatpush1.bf16.msra.mxu0 %v1327
    %1946 = vmatprep.subr.bf16.mxu0 %v1336
    %1947 = vmatpush1.bf16.msra.mxu0 %v1335
    %1948 = vmatprep.subr.bf16.mxu0 %v1344
    %1949 = vmatpush1.bf16.msra.mxu0 %v1343
    %1950 = vmatprep.subr.bf16.mxu0 %v1352
    %1951 = vmatpush1.bf16.msra.mxu0 %v1351
    %1952 = vmatprep.subr.bf16.mxu0 %v1360
    %1953 = vmatpush1.bf16.msra.mxu0 %v1359
    %1954 = vmatprep.subr.bf16.mxu0 %v1368
    %1955 = vmatpush1.bf16.msra.mxu0 %v1367
    %1956 = vmatprep.subr.bf16.mxu0 %v1376
    %1957 = vmatpush1.bf16.msra.mxu0 %v1375
    %1958 = vmatprep.subr.bf16.mxu0 %v1384
    %1959 = vmatpush1.bf16.msra.mxu0 %v1383
    %1960 = vmatprep.subr.bf16.mxu0 %v1392
    %1961 = vmatpush1.bf16.msra.mxu0 %v1391
    %1962 = vmatprep.subr.bf16.mxu0 %v1400
    %1963 = vmatpush1.bf16.msra.mxu0 %v1399
    %1964 = vmatprep.subr.bf16.mxu0 %v1408
    %1965 = vmatpush1.bf16.msra.mxu0 %v1407
    %1966 = vmatprep.subr.bf16.mxu0 %v1416
    %1967 = vmatpush1.bf16.msra.mxu0 %v1415
    %1968 = vmatprep.subr.bf16.mxu0 %v1424
    %1969 = vmatpush1.bf16.msra.mxu0 %v1423
    %1970 = vmatprep.subr.bf16.mxu0 %v1432
    %1971 = vmatpush1.bf16.msra.mxu0 %v1431
    %1972 = vmatprep.mubr.bf16.mxu0 %v403
    %1973 = vmatmul.mubr.bf16.gmra.mrb[0].mxu0 %v402
    %v1974 = vpop.f32.mrb[0].mxu0
    %v1975 = vadd.f32 0.0, %v1974
    %v1976 = vpop.f32.mrb[0].mxu0
    %v1977 = vadd.f32 0.0, %v1976
    %v1978 = vpop.f32.mrb[0].mxu0
    %v1979 = vpop.f32.mrb[0].mxu0
    %1980 = vdwg.mxu0
    %1981 = vmatprep.subr.bf16.mxu0 %v1440
    %1982 = vmatpush1.bf16.msra.mxu0 %v1439
    %1983 = vmatprep.subr.bf16.mxu0 %v1448
    %1984 = vmatpush1.bf16.msra.mxu0 %v1447
    %1985 = vmatprep.subr.bf16.mxu0 %v1456
    %1986 = vmatpush1.bf16.msra.mxu0 %v1455
    %1987 = vmatprep.subr.bf16.mxu0 %v1464
    %1988 = vmatpush1.bf16.msra.mxu0 %v1463
    %1989 = vmatprep.subr.bf16.mxu0 %v1472
    %1990 = vmatpush1.bf16.msra.mxu0 %v1471
    %1991 = vmatprep.subr.bf16.mxu0 %v1480
    %1992 = vmatpush1.bf16.msra.mxu0 %v1479
    %1993 = vmatprep.subr.bf16.mxu0 %v1488
    %1994 = vmatpush1.bf16.msra.mxu0 %v1487
    %1995 = vmatprep.subr.bf16.mxu0 %v1496
    %1996 = vmatpush1.bf16.msra.mxu0 %v1495
    %1997 = vmatprep.subr.bf16.mxu0 %v1504
    %1998 = vmatpush1.bf16.msra.mxu0 %v1503
    %1999 = vmatprep.subr.bf16.mxu0 %v1512
    %2000 = vmatpush1.bf16.msra.mxu0 %v1511
    %2001 = vmatprep.subr.bf16.mxu0 %v1520
    %2002 = vmatpush1.bf16.msra.mxu0 %v1519
    %2003 = vmatprep.subr.bf16.mxu0 %v1528
    %2004 = vmatpush1.bf16.msra.mxu0 %v1527
    %2005 = vmatprep.subr.bf16.mxu0 %v1536
    %2006 = vmatpush1.bf16.msra.mxu0 %v1535
    %2007 = vmatprep.subr.bf16.mxu0 %v1544
    %2008 = vmatpush1.bf16.msra.mxu0 %v1543
    %2009 = vmatprep.subr.bf16.mxu0 %v1552
    %2010 = vmatpush1.bf16.msra.mxu0 %v1551
    %2011 = vmatprep.subr.bf16.mxu0 %v1560
    %2012 = vmatpush1.bf16.msra.mxu0 %v1559
    %2013 = vmatprep.mubr.bf16.mxu0 %v405
    %2014 = vmatmul.mubr.bf16.gmra.mrb[0].mxu0 %v404
    %v2015 = vpop.f32.mrb[0].mxu0
    %v2016 = vadd.f32 %v1975, %v2015
    %v2017 = vpop.f32.mrb[0].mxu0
    %v2018 = vadd.f32 %v1977, %v2017
    %v2019 = vpop.f32.mrb[0].mxu0
    %v2020 = vpop.f32.mrb[0].mxu0
    %2021 = vdwg.mxu0
    %2022 = vmatprep.subr.bf16.mxu0 %v1568
    %2023 = vmatpush1.bf16.msra.mxu0 %v1567
    %2024 = vmatprep.subr.bf16.mxu0 %v1576
    %2025 = vmatpush1.bf16.msra.mxu0 %v1575
    %2026 = vmatprep.subr.bf16.mxu0 %v1584
    %2027 = vmatpush1.bf16.msra.mxu0 %v1583
    %2028 = vmatprep.subr.bf16.mxu0 %v1592
    %2029 = vmatpush1.bf16.msra.mxu0 %v1591
    %2030 = vmatprep.subr.bf16.mxu0 %v1600
    %2031 = vmatpush1.bf16.msra.mxu0 %v1599
    %2032 = vmatprep.subr.bf16.mxu0 %v1920
    %2033 = vmatpush1.bf16.msra.mxu0 %v1917
    %2034 = vmatprep.subr.bf16.mxu0 0
    %2035 = vmatpush1.bf16.msra.mxu0 0
    %2036 = vmatprep.subr.bf16.mxu0 0
    %2037 = vmatpush1.bf16.msra.mxu0 0
    %2038 = vmatprep.subr.bf16.mxu0 0
    %2039 = vmatpush1.bf16.msra.mxu0 0
    %2040 = vmatprep.subr.bf16.mxu0 0
    %2041 = vmatpush1.bf16.msra.mxu0 0
    %2042 = vmatprep.subr.bf16.mxu0 0
    %2043 = vmatpush1.bf16.msra.mxu0 0
    %2044 = vmatprep.subr.bf16.mxu0 0
    %2045 = vmatpush1.bf16.msra.mxu0 0
    %2046 = vmatprep.subr.bf16.mxu0 0
    %2047 = vmatpush1.bf16.msra.mxu0 0
    %2048 = vmatprep.subr.bf16.mxu0 0
    %2049 = vmatpush1.bf16.msra.mxu0 0
    %2050 = vmatprep.subr.bf16.mxu0 0
    %2051 = vmatpush1.bf16.msra.mxu0 0
    %2052 = vmatprep.subr.bf16.mxu0 0
    %2053 = vmatpush1.bf16.msra.mxu0 0
    %2054 = vmatprep.mubr.bf16.mxu0 0
    %2055 = vmatmul.mubr.bf16.gmra.mrb[0].mxu0 %v1913
    %v2056 = vpop.f32.mrb[0].mxu0
    %v2057 = vadd.f32 %v2016, %v2056
    %v2058 = vpop.f32.mrb[0].mxu0
    %v2059 = vadd.f32 %v2018, %v2058
    %v2060 = vpop.f32.mrb[0].mxu0
    %v2061 = vpop.f32.mrb[0].mxu0
    %2062 = vdwg.mxu0
    %2063 = vmatprep.subr.bf16.mxu0 %v1314
    %2064 = vmatpush1.bf16.msra.mxu0 %v1313
    %2065 = vmatprep.subr.bf16.mxu0 %v1322
    %2066 = vmatpush1.bf16.msra.mxu0 %v1321
    %2067 = vmatprep.subr.bf16.mxu0 %v1330
    %2068 = vmatpush1.bf16.msra.mxu0 %v1329
    %2069 = vmatprep.subr.bf16.mxu0 %v1338
    %2070 = vmatpush1.bf16.msra.mxu0 %v1337
    %2071 = vmatprep.subr.bf16.mxu0 %v1346
    %2072 = vmatpush1.bf16.msra.mxu0 %v1345
    %2073 = vmatprep.subr.bf16.mxu0 %v1354
    %2074 = vmatpush1.bf16.msra.mxu0 %v1353
    %2075 = vmatprep.subr.bf16.mxu0 %v1362
    %2076 = vmatpush1.bf16.msra.mxu0 %v1361
    %2077 = vmatprep.subr.bf16.mxu0 %v1370
    %2078 = vmatpush1.bf16.msra.mxu0 %v1369
    %2079 = vmatprep.subr.bf16.mxu0 %v1378
    %2080 = vmatpush1.bf16.msra.mxu0 %v1377
    %2081 = vmatprep.subr.bf16.mxu0 %v1386
    %2082 = vmatpush1.bf16.msra.mxu0 %v1385
    %2083 = vmatprep.subr.bf16.mxu0 %v1394
    %2084 = vmatpush1.bf16.msra.mxu0 %v1393
    %2085 = vmatprep.subr.bf16.mxu0 %v1402
    %2086 = vmatpush1.bf16.msra.mxu0 %v1401
    %2087 = vmatprep.subr.bf16.mxu0 %v1410
    %2088 = vmatpush1.bf16.msra.mxu0 %v1409
    %2089 = vmatprep.subr.bf16.mxu0 %v1418
    %2090 = vmatpush1.bf16.msra.mxu0 %v1417
    %2091 = vmatprep.subr.bf16.mxu0 %v1426
    %2092 = vmatpush1.bf16.msra.mxu0 %v1425
    %2093 = vmatprep.subr.bf16.mxu0 %v1434
    %2094 = vmatpush1.bf16.msra.mxu0 %v1433
    %2095 = vmatprep.mubr.bf16.mxu0 %v403
    %2096 = vmatmul.mubr.bf16.gmra.mrb[0].mxu0 %v402
    %v2097 = vpop.f32.mrb[0].mxu0
    %v2098 = vadd.f32 0.0, %v2097
    %v2099 = vpop.f32.mrb[0].mxu0
    %v2100 = vadd.f32 0.0, %v2099
    %v2101 = vpop.f32.mrb[0].mxu0
    %v2102 = vpop.f32.mrb[0].mxu0
    %2103 = vdwg.mxu0
    %2104 = vmatprep.subr.bf16.mxu0 %v1442
    %2105 = vmatpush1.bf16.msra.mxu0 %v1441
    %2106 = vmatprep.subr.bf16.mxu0 %v1450
    %2107 = vmatpush1.bf16.msra.mxu0 %v1449
    %2108 = vmatprep.subr.bf16.mxu0 %v1458
    %2109 = vmatpush1.bf16.msra.mxu0 %v1457
    %2110 = vmatprep.subr.bf16.mxu0 %v1466
    %2111 = vmatpush1.bf16.msra.mxu0 %v1465
    %2112 = vmatprep.subr.bf16.mxu0 %v1474
    %2113 = vmatpush1.bf16.msra.mxu0 %v1473
    %2114 = vmatprep.subr.bf16.mxu0 %v1482
    %2115 = vmatpush1.bf16.msra.mxu0 %v1481
    %2116 = vmatprep.subr.bf16.mxu0 %v1490
    %2117 = vmatpush1.bf16.msra.mxu0 %v1489
    %2118 = vmatprep.subr.bf16.mxu0 %v1498
    %2119 = vmatpush1.bf16.msra.mxu0 %v1497
    %2120 = vmatprep.subr.bf16.mxu0 %v1506
    %2121 = vmatpush1.bf16.msra.mxu0 %v1505
    %2122 = vmatprep.subr.bf16.mxu0 %v1514
    %2123 = vmatpush1.bf16.msra.mxu0 %v1513
    %2124 = vmatprep.subr.bf16.mxu0 %v1522
    %2125 = vmatpush1.bf16.msra.mxu0 %v1521
    %2126 = vmatprep.subr.bf16.mxu0 %v1530
    %2127 = vmatpush1.bf16.msra.mxu0 %v1529
    %2128 = vmatprep.subr.bf16.mxu0 %v1538
    %2129 = vmatpush1.bf16.msra.mxu0 %v1537
    %2130 = vmatprep.subr.bf16.mxu0 %v1546
    %2131 = vmatpush1.bf16.msra.mxu0 %v1545
    %2132 = vmatprep.subr.bf16.mxu0 %v1554
    %2133 = vmatpush1.bf16.msra.mxu0 %v1553
    %2134 = vmatprep.subr.bf16.mxu0 %v1562
    %2135 = vmatpush1.bf16.msra.mxu0 %v1561
    %2136 = vmatprep.mubr.bf16.mxu0 %v405
    %2137 = vmatmul.mubr.bf16.gmra.mrb[0].mxu0 %v404
    %v2138 = vpop.f32.mrb[0].mxu0
    %v2139 = vadd.f32 %v2098, %v2138
    %v2140 = vpop.f32.mrb[0].mxu0
    %v2141 = vadd.f32 %v2100, %v2140
    %v2142 = vpop.f32.mrb[0].mxu0
    %v2143 = vpop.f32.mrb[0].mxu0
    %2144 = vdwg.mxu0
    %2145 = vmatprep.subr.bf16.mxu0 %v1570
    %2146 = vmatpush1.bf16.msra.mxu0 %v1569
    %2147 = vmatprep.subr.bf16.mxu0 %v1578
    %2148 = vmatpush1.bf16.msra.mxu0 %v1577
    %2149 = vmatprep.subr.bf16.mxu0 %v1586
    %2150 = vmatpush1.bf16.msra.mxu0 %v1585
    %2151 = vmatprep.subr.bf16.mxu0 %v1594
    %2152 = vmatpush1.bf16.msra.mxu0 %v1593
    %2153 = vmatprep.subr.bf16.mxu0 %v1602
    %2154 = vmatpush1.bf16.msra.mxu0 %v1601
    %2155 = vmatprep.subr.bf16.mxu0 %v1926
    %2156 = vmatpush1.bf16.msra.mxu0 %v1923
    %2157 = vmatprep.subr.bf16.mxu0 0
    %2158 = vmatpush1.bf16.msra.mxu0 0
    %2159 = vmatprep.subr.bf16.mxu0 0
    %2160 = vmatpush1.bf16.msra.mxu0 0
    %2161 = vmatprep.subr.bf16.mxu0 0
    %2162 = vmatpush1.bf16.msra.mxu0 0
    %2163 = vmatprep.subr.bf16.mxu0 0
    %2164 = vmatpush1.bf16.msra.mxu0 0
    %2165 = vmatprep.subr.bf16.mxu0 0
    %2166 = vmatpush1.bf16.msra.mxu0 0
    %2167 = vmatprep.subr.bf16.mxu0 0
    %2168 = vmatpush1.bf16.msra.mxu0 0
    %2169 = vmatprep.subr.bf16.mxu0 0
    %2170 = vmatpush1.bf16.msra.mxu0 0
    %2171 = vmatprep.subr.bf16.mxu0 0
    %2172 = vmatpush1.bf16.msra.mxu0 0
    %2173 = vmatprep.subr.bf16.mxu0 0
    %2174 = vmatpush1.bf16.msra.mxu0 0
    %2175 = vmatprep.subr.bf16.mxu0 0
    %2176 = vmatpush1.bf16.msra.mxu0 0
    %2177 = vmatprep.mubr.bf16.mxu0 0
    %2178 = vmatmul.mubr.bf16.gmra.mrb[0].mxu0 %v1913
    %v2179 = vpop.f32.mrb[0].mxu0
    %v2180 = vadd.f32 %v2139, %v2179
    %v2181 = vpop.f32.mrb[0].mxu0
    %v2182 = vadd.f32 %v2141, %v2181
    %v2183 = vpop.f32.mrb[0].mxu0
    %v2184 = vpop.f32.mrb[0].mxu0
    %2185 = vdwg.mxu0
    %2186 = vmatprep.subr.bf16.mxu0 %v1316
    %2187 = vmatpush1.bf16.msra.mxu0 %v1315
    %2188 = vmatprep.subr.bf16.mxu0 %v1324
    %2189 = vmatpush1.bf16.msra.mxu0 %v1323
    %2190 = vmatprep.subr.bf16.mxu0 %v1332
    %2191 = vmatpush1.bf16.msra.mxu0 %v1331
    %2192 = vmatprep.subr.bf16.mxu0 %v1340
    %2193 = vmatpush1.bf16.msra.mxu0 %v1339
    %2194 = vmatprep.subr.bf16.mxu0 %v1348
    %2195 = vmatpush1.bf16.msra.mxu0 %v1347
    %2196 = vmatprep.subr.bf16.mxu0 %v1356
    %2197 = vmatpush1.bf16.msra.mxu0 %v1355
    %2198 = vmatprep.subr.bf16.mxu0 %v1364
    %2199 = vmatpush1.bf16.msra.mxu0 %v1363
    %2200 = vmatprep.subr.bf16.mxu0 %v1372
    %2201 = vmatpush1.bf16.msra.mxu0 %v1371
    %2202 = vmatprep.subr.bf16.mxu0 %v1380
    %2203 = vmatpush1.bf16.msra.mxu0 %v1379
    %2204 = vmatprep.subr.bf16.mxu0 %v1388
    %2205 = vmatpush1.bf16.msra.mxu0 %v1387
    %2206 = vmatprep.subr.bf16.mxu0 %v1396
    %2207 = vmatpush1.bf16.msra.mxu0 %v1395
    %2208 = vmatprep.subr.bf16.mxu0 %v1404
    %2209 = vmatpush1.bf16.msra.mxu0 %v1403
    %2210 = vmatprep.subr.bf16.mxu0 %v1412
    %2211 = vmatpush1.bf16.msra.mxu0 %v1411
    %2212 = vmatprep.subr.bf16.mxu0 %v1420
    %2213 = vmatpush1.bf16.msra.mxu0 %v1419
    %2214 = vmatprep.subr.bf16.mxu0 %v1428
    %2215 = vmatpush1.bf16.msra.mxu0 %v1427
    %2216 = vmatprep.subr.bf16.mxu0 %v1436
    %2217 = vmatpush1.bf16.msra.mxu0 %v1435
    %2218 = vmatprep.mubr.bf16.mxu0 %v403
    %2219 = vmatmul.mubr.bf16.gmra.mrb[0].mxu0 %v402
    %v2220 = vpop.f32.mrb[0].mxu0
    %v2221 = vadd.f32 0.0, %v2220
    %v2222 = vpop.f32.mrb[0].mxu0
    %v2223 = vadd.f32 0.0, %v2222
    %v2224 = vpop.f32.mrb[0].mxu0
    %v2225 = vpop.f32.mrb[0].mxu0
    %2226 = vdwg.mxu0
    %2227 = vmatprep.subr.bf16.mxu0 %v1444
    %2228 = vmatpush1.bf16.msra.mxu0 %v1443
    %2229 = vmatprep.subr.bf16.mxu0 %v1452
    %2230 = vmatpush1.bf16.msra.mxu0 %v1451
    %2231 = vmatprep.subr.bf16.mxu0 %v1460
    %2232 = vmatpush1.bf16.msra.mxu0 %v1459
    %2233 = vmatprep.subr.bf16.mxu0 %v1468
    %2234 = vmatpush1.bf16.msra.mxu0 %v1467
    %2235 = vmatprep.subr.bf16.mxu0 %v1476
    %2236 = vmatpush1.bf16.msra.mxu0 %v1475
    %2237 = vmatprep.subr.bf16.mxu0 %v1484
    %2238 = vmatpush1.bf16.msra.mxu0 %v1483
    %2239 = vmatprep.subr.bf16.mxu0 %v1492
    %2240 = vmatpush1.bf16.msra.mxu0 %v1491
    %2241 = vmatprep.subr.bf16.mxu0 %v1500
    %2242 = vmatpush1.bf16.msra.mxu0 %v1499
    %2243 = vmatprep.subr.bf16.mxu0 %v1508
    %2244 = vmatpush1.bf16.msra.mxu0 %v1507
    %2245 = vmatprep.subr.bf16.mxu0 %v1516
    %2246 = vmatpush1.bf16.msra.mxu0 %v1515
    %2247 = vmatprep.subr.bf16.mxu0 %v1524
    %2248 = vmatpush1.bf16.msra.mxu0 %v1523
    %2249 = vmatprep.subr.bf16.mxu0 %v1532
    %2250 = vmatpush1.bf16.msra.mxu0 %v1531
    %2251 = vmatprep.subr.bf16.mxu0 %v1540
    %2252 = vmatpush1.bf16.msra.mxu0 %v1539
    %2253 = vmatprep.subr.bf16.mxu0 %v1548
    %2254 = vmatpush1.bf16.msra.mxu0 %v1547
    %2255 = vmatprep.subr.bf16.mxu0 %v1556
    %2256 = vmatpush1.bf16.msra.mxu0 %v1555
    %2257 = vmatprep.subr.bf16.mxu0 %v1564
    %2258 = vmatpush1.bf16.msra.mxu0 %v1563
    %2259 = vmatprep.mubr.bf16.mxu0 %v405
    %2260 = vmatmul.mubr.bf16.gmra.mrb[0].mxu0 %v404
    %v2261 = vpop.f32.mrb[0].mxu0
    %v2262 = vadd.f32 %v2221, %v2261
    %v2263 = vpop.f32.mrb[0].mxu0
    %v2264 = vadd.f32 %v2223, %v2263
    %v2265 = vpop.f32.mrb[0].mxu0
    %v2266 = vpop.f32.mrb[0].mxu0
    %2267 = vdwg.mxu0
    %2268 = vmatprep.subr.bf16.mxu0 %v1572
    %2269 = vmatpush1.bf16.msra.mxu0 %v1571
    %2270 = vmatprep.subr.bf16.mxu0 %v1580
    %2271 = vmatpush1.bf16.msra.mxu0 %v1579
    %2272 = vmatprep.subr.bf16.mxu0 %v1588
    %2273 = vmatpush1.bf16.msra.mxu0 %v1587
    %2274 = vmatprep.subr.bf16.mxu0 %v1596
    %2275 = vmatpush1.bf16.msra.mxu0 %v1595
    %2276 = vmatprep.subr.bf16.mxu0 %v1604
    %2277 = vmatpush1.bf16.msra.mxu0 %v1603
    %2278 = vmatprep.subr.bf16.mxu0 %v1932
    %2279 = vmatpush1.bf16.msra.mxu0 %v1929
    %2280 = vmatprep.subr.bf16.mxu0 0
    %2281 = vmatpush1.bf16.msra.mxu0 0
    %2282 = vmatprep.subr.bf16.mxu0 0
    %2283 = vmatpush1.bf16.msra.mxu0 0
    %2284 = vmatprep.subr.bf16.mxu0 0
    %2285 = vmatpush1.bf16.msra.mxu0 0
    %2286 = vmatprep.subr.bf16.mxu0 0
    %2287 = vmatpush1.bf16.msra.mxu0 0
    %2288 = vmatprep.subr.bf16.mxu0 0
    %2289 = vmatpush1.bf16.msra.mxu0 0
    %2290 = vmatprep.subr.bf16.mxu0 0
    %2291 = vmatpush1.bf16.msra.mxu0 0
    %2292 = vmatprep.subr.bf16.mxu0 0
    %2293 = vmatpush1.bf16.msra.mxu0 0
    %2294 = vmatprep.subr.bf16.mxu0 0
    %2295 = vmatpush1.bf16.msra.mxu0 0
    %2296 = vmatprep.subr.bf16.mxu0 0
    %2297 = vmatpush1.bf16.msra.mxu0 0
    %2298 = vmatprep.subr.bf16.mxu0 0
    %2299 = vmatpush1.bf16.msra.mxu0 0
    %2300 = vmatprep.mubr.bf16.mxu0 0
    %2301 = vmatmul.mubr.bf16.gmra.mrb[0].mxu0 %v1913
    %v2302 = vpop.f32.mrb[0].mxu0
    %v2303 = vadd.f32 %v2262, %v2302
    %v2304 = vpop.f32.mrb[0].mxu0
    %v2305 = vadd.f32 %v2264, %v2304
    %v2306 = vpop.f32.mrb[0].mxu0
    %v2307 = vpop.f32.mrb[0].mxu0
    %2308 = vdwg.mxu0
    %2309 = vmatprep.subr.bf16.mxu0 %v1318
    %2310 = vmatpush1.bf16.msra.mxu0 %v1317
    %2311 = vmatprep.subr.bf16.mxu0 %v1326
    %2312 = vmatpush1.bf16.msra.mxu0 %v1325
    %2313 = vmatprep.subr.bf16.mxu0 %v1334
    %2314 = vmatpush1.bf16.msra.mxu0 %v1333
    %2315 = vmatprep.subr.bf16.mxu0 %v1342
    %2316 = vmatpush1.bf16.msra.mxu0 %v1341
    %2317 = vmatprep.subr.bf16.mxu0 %v1350
    %2318 = vmatpush1.bf16.msra.mxu0 %v1349
    %2319 = vmatprep.subr.bf16.mxu0 %v1358
    %2320 = vmatpush1.bf16.msra.mxu0 %v1357
    %2321 = vmatprep.subr.bf16.mxu0 %v1366
    %2322 = vmatpush1.bf16.msra.mxu0 %v1365
    %2323 = vmatprep.subr.bf16.mxu0 %v1374
    %2324 = vmatpush1.bf16.msra.mxu0 %v1373
    %2325 = vmatprep.subr.bf16.mxu0 %v1382
    %2326 = vmatpush1.bf16.msra.mxu0 %v1381
    %2327 = vmatprep.subr.bf16.mxu0 %v1390
    %2328 = vmatpush1.bf16.msra.mxu0 %v1389
    %2329 = vmatprep.subr.bf16.mxu0 %v1398
    %2330 = vmatpush1.bf16.msra.mxu0 %v1397
    %2331 = vmatprep.subr.bf16.mxu0 %v1406
    %2332 = vmatpush1.bf16.msra.mxu0 %v1405
    %2333 = vmatprep.subr.bf16.mxu0 %v1414
    %2334 = vmatpush1.bf16.msra.mxu0 %v1413
    %2335 = vmatprep.subr.bf16.mxu0 %v1422
    %2336 = vmatpush1.bf16.msra.mxu0 %v1421
    %2337 = vmatprep.subr.bf16.mxu0 %v1430
    %2338 = vmatpush1.bf16.msra.mxu0 %v1429
    %2339 = vmatprep.subr.bf16.mxu0 %v1438
    %2340 = vmatpush1.bf16.msra.mxu0 %v1437
    %2341 = vmatprep.mubr.bf16.mxu0 %v403
    %2342 = vmatmul.mubr.bf16.gmra.mrb[0].mxu0 %v402
    %v2343 = vpop.f32.mrb[0].mxu0
    %v2344 = vadd.f32 0.0, %v2343
    %v2345 = vpop.f32.mrb[0].mxu0
    %v2346 = vadd.f32 0.0, %v2345
    %v2347 = vpop.f32.mrb[0].mxu0
    %v2348 = vpop.f32.mrb[0].mxu0
    %2349 = vdwg.mxu0
    %2350 = vmatprep.subr.bf16.mxu0 %v1446
    %2351 = vmatpush1.bf16.msra.mxu0 %v1445
    %2352 = vmatprep.subr.bf16.mxu0 %v1454
    %2353 = vmatpush1.bf16.msra.mxu0 %v1453
    %2354 = vmatprep.subr.bf16.mxu0 %v1462
    %2355 = vmatpush1.bf16.msra.mxu0 %v1461
    %2356 = vmatprep.subr.bf16.mxu0 %v1470
    %2357 = vmatpush1.bf16.msra.mxu0 %v1469
    %2358 = vmatprep.subr.bf16.mxu0 %v1478
    %2359 = vmatpush1.bf16.msra.mxu0 %v1477
    %2360 = vmatprep.subr.bf16.mxu0 %v1486
    %2361 = vmatpush1.bf16.msra.mxu0 %v1485
    %2362 = vmatprep.subr.bf16.mxu0 %v1494
    %2363 = vmatpush1.bf16.msra.mxu0 %v1493
    %2364 = vmatprep.subr.bf16.mxu0 %v1502
    %2365 = vmatpush1.bf16.msra.mxu0 %v1501
    %2366 = vmatprep.subr.bf16.mxu0 %v1510
    %2367 = vmatpush1.bf16.msra.mxu0 %v1509
    %2368 = vmatprep.subr.bf16.mxu0 %v1518
    %2369 = vmatpush1.bf16.msra.mxu0 %v1517
    %2370 = vmatprep.subr.bf16.mxu0 %v1526
    %2371 = vmatpush1.bf16.msra.mxu0 %v1525
    %2372 = vmatprep.subr.bf16.mxu0 %v1534
    %2373 = vmatpush1.bf16.msra.mxu0 %v1533
    %2374 = vmatprep.subr.bf16.mxu0 %v1542
    %2375 = vmatpush1.bf16.msra.mxu0 %v1541
    %2376 = vmatprep.subr.bf16.mxu0 %v1550
    %2377 = vmatpush1.bf16.msra.mxu0 %v1549
    %2378 = vmatprep.subr.bf16.mxu0 %v1558
    %2379 = vmatpush1.bf16.msra.mxu0 %v1557
    %2380 = vmatprep.subr.bf16.mxu0 %v1566
    %2381 = vmatpush1.bf16.msra.mxu0 %v1565
    %2382 = vmatprep.mubr.bf16.mxu0 %v405
    %2383 = vmatmul.mubr.bf16.gmra.mrb[0].mxu0 %v404
    %v2384 = vpop.f32.mrb[0].mxu0
    %v2385 = vadd.f32 %v2344, %v2384
    %v2386 = vpop.f32.mrb[0].mxu0
    %v2387 = vadd.f32 %v2346, %v2386
    %v2388 = vpop.f32.mrb[0].mxu0
    %v2389 = vpop.f32.mrb[0].mxu0
    %2390 = vdwg.mxu0
    %2391 = vmatprep.subr.bf16.mxu0 %v1574
    %2392 = vmatpush1.bf16.msra.mxu0 %v1573
    %2393 = vmatprep.subr.bf16.mxu0 %v1582
    %2394 = vmatpush1.bf16.msra.mxu0 %v1581
    %2395 = vmatprep.subr.bf16.mxu0 %v1590
    %2396 = vmatpush1.bf16.msra.mxu0 %v1589
    %2397 = vmatprep.subr.bf16.mxu0 %v1598
    %2398 = vmatpush1.bf16.msra.mxu0 %v1597
    %2399 = vmatprep.subr.bf16.mxu0 %v1606
    %2400 = vmatpush1.bf16.msra.mxu0 %v1605
    %2401 = vmatprep.subr.bf16.mxu0 %v1938
    %2402 = vmatpush1.bf16.msra.mxu0 %v1935
    %2403 = vmatprep.subr.bf16.mxu0 0
    %2404 = vmatpush1.bf16.msra.mxu0 0
    %2405 = vmatprep.subr.bf16.mxu0 0
    %2406 = vmatpush1.bf16.msra.mxu0 0
    %2407 = vmatprep.subr.bf16.mxu0 0
    %2408 = vmatpush1.bf16.msra.mxu0 0
    %2409 = vmatprep.subr.bf16.mxu0 0
    %2410 = vmatpush1.bf16.msra.mxu0 0
    %2411 = vmatprep.subr.bf16.mxu0 0
    %2412 = vmatpush1.bf16.msra.mxu0 0
    %2413 = vmatprep.subr.bf16.mxu0 0
    %2414 = vmatpush1.bf16.msra.mxu0 0
    %2415 = vmatprep.subr.bf16.mxu0 0
    %2416 = vmatpush1.bf16.msra.mxu0 0
    %2417 = vmatprep.subr.bf16.mxu0 0
    %2418 = vmatpush1.bf16.msra.mxu0 0
    %2419 = vmatprep.subr.bf16.mxu0 0
    %2420 = vmatpush1.bf16.msra.mxu0 0
    %2421 = vmatprep.subr.bf16.mxu0 0
    %2422 = vmatpush1.bf16.msra.mxu0 0
    %2423 = vmatprep.mubr.bf16.mxu0 0
    %2424 = vmatmul.mubr.bf16.gmra.mrb[0].mxu0 %v1913
    %v2425 = vpop.f32.mrb[0].mxu0
    %v2426 = vadd.f32 %v2385, %v2425
    %v2427 = vpop.f32.mrb[0].mxu0
    %v2428 = vadd.f32 %v2387, %v2427
    %v2429 = vpop.f32.mrb[0].mxu0
    %v2430 = vpop.f32.mrb[0].mxu0
    %2431 = vdwg.mxu0
    %s2432 = sld [smem:[#allocation8]]
    %s2433 = sld [smem:[#allocation8 + $0x1]]
    %s2434 = sld [smem:[#allocation8 + $0x2]]
    %s2435 = sld [smem:[#allocation9]]
    %s2436 = sld [smem:[#allocation9 + $0x1]]
    %s2437 = sld [smem:[#allocation9 + $0x2]]
    %s2438 = sld [smem:[#allocation11]]
    %s2439 = sld [smem:[#allocation11 + $0x1]]
    %s2440 = sld [smem:[#allocation11 + $0x2]]
    %2441 = vrot.lane.b32.xlu0 %v2057, 31
    %v2442 = vpop.permute.xlu0 %2441
    %2443 = vrot.lane.b32.xlu0 %v2059, 31
    %v2444 = vpop.permute.xlu0 %2443
    %2445 = vrot.lane.b32.xlu0 %v2180, 31
    %v2446 = vpop.permute.xlu0 %2445
    %2447 = vrot.lane.b32.xlu0 %v2182, 31
    %v2448 = vpop.permute.xlu0 %2447
    %2449 = vrot.lane.b32.xlu0 %v2303, 31
    %v2450 = vpop.permute.xlu0 %2449
    %2451 = vrot.lane.b32.xlu0 %v2305, 31
    %v2452 = vpop.permute.xlu0 %2451
    %2453 = vrot.lane.b32.xlu0 %v2426, 31
    %v2454 = vpop.permute.xlu0 %2453
    %2455 = vrot.lane.b32.xlu0 %v2428, 31
    %v2456 = vpop.permute.xlu0 %2455
    %v2457 = vlaneseq
    %v2458 = vand.u32 %v2457, 127
    %vm2459 = vcmp.lt.s32.totalorder %v2458, 31
    %v2460 = vsel %vm2459, %v2454, %v2456
    %v2461 = vsel %vm2459, %v2452, %v2454
    %v2462 = vsel %vm2459, %v2450, %v2452
    %v2463 = vsel %vm2459, %v2448, %v2450
    %v2464 = vsel %vm2459, %v2446, %v2448
    %v2465 = vsel %vm2459, %v2444, %v2446
    %v2466 = vsel %vm2459, %v2442, %v2444
    %v2467 = vsel %vm2459, %v2456, %v2442
    %v2468 = vld [vmem:[%s3] sm:$0xff]
    %2470 = vset.pattern.permute.xlu0 0
    %2471 = vperm.xlu0 %2470, %v2468
    %v2472 = vpop.permute.xlu0 %2471
    %v2474 = vmul.f32 %v2472, %v2467
    %v2475 = vmul.f32 %v2472, %v2466
    %v2476 = vmul.f32 %v2472, %v2465
    %v2477 = vmul.f32 %v2472, %v2464
    %v2478 = vmul.f32 %v2472, %v2463
    %v2479 = vmul.f32 %v2472, %v2462
    %v2480 = vmul.f32 %v2472, %v2461
    %v2481 = vmul.f32 %v2472, %v2460
    %s2482 = scalar_lea.vmem %s3, 8
    %v2483 = vld [vmem:[%s2482] sm:$0xff]
    %2485 = vset.pattern.permute.xlu0 0
    %2486 = vperm.xlu0 %2485, %v2483
    %v2487 = vpop.permute.xlu0 %2486
    %v2489 = vmul.f32 %v2487, %v2467
    %v2490 = vmul.f32 %v2487, %v2466
    %v2491 = vmul.f32 %v2487, %v2465
    %v2492 = vmul.f32 %v2487, %v2464
    %v2493 = vmul.f32 %v2487, %v2463
    %v2494 = vmul.f32 %v2487, %v2462
    %v2495 = vmul.f32 %v2487, %v2461
    %v2496 = vmul.f32 %v2487, %v2460
    %s2497 = scalar_lea.vmem %s3, 16
    %v2498 = vld [vmem:[%s2497] sm:$0xff]
    %2500 = vset.pattern.permute.xlu0 0
    %2501 = vperm.xlu0 %2500, %v2498
    %v2502 = vpop.permute.xlu0 %2501
    %v2504 = vmul.f32 %v2502, %v2467
    %v2505 = vmul.f32 %v2502, %v2466
    %v2506 = vmul.f32 %v2502, %v2465
    %v2507 = vmul.f32 %v2502, %v2464
    %v2508 = vmul.f32 %v2502, %v2463
    %v2509 = vmul.f32 %v2502, %v2462
    %v2510 = vmul.f32 %v2502, %v2461
    %v2511 = vmul.f32 %v2502, %v2460
    %2512 = vrot.lane.b32.xlu0 %v2057, 30
    %v2513 = vpop.permute.xlu0 %2512
    %2514 = vrot.lane.b32.xlu0 %v2059, 30
    %v2515 = vpop.permute.xlu0 %2514
    %2516 = vrot.lane.b32.xlu0 %v2180, 30
    %v2517 = vpop.permute.xlu0 %2516
    %2518 = vrot.lane.b32.xlu0 %v2182, 30
    %v2519 = vpop.permute.xlu0 %2518
    %2520 = vrot.lane.b32.xlu0 %v2303, 30
    %v2521 = vpop.permute.xlu0 %2520
    %2522 = vrot.lane.b32.xlu0 %v2305, 30
    %v2523 = vpop.permute.xlu0 %2522
    %2524 = vrot.lane.b32.xlu0 %v2426, 30
    %v2525 = vpop.permute.xlu0 %2524
    %2526 = vrot.lane.b32.xlu0 %v2428, 30
    %v2527 = vpop.permute.xlu0 %2526
    %vm2528 = vcmp.lt.s32.totalorder %v2458, 30
    %v2529 = vsel %vm2528, %v2525, %v2527
    %v2530 = vsel %vm2528, %v2523, %v2525
    %v2531 = vsel %vm2528, %v2521, %v2523
    %v2532 = vsel %vm2528, %v2519, %v2521
    %v2533 = vsel %vm2528, %v2517, %v2519
    %v2534 = vsel %vm2528, %v2515, %v2517
    %v2535 = vsel %vm2528, %v2513, %v2515
    %v2536 = vsel %vm2528, %v2527, %v2513
    %s2537 = scalar_lea.vmem %s3, 24
    %v2538 = vld [vmem:[%s2537] sm:$0xff]
    %2540 = vset.pattern.permute.xlu0 0
    %2541 = vperm.xlu0 %2540, %v2538
    %v2542 = vpop.permute.xlu0 %2541
    %v2544 = vmul.f32 %v2542, %v2536
    %v2545 = vmul.f32 %v2542, %v2535
    %v2546 = vmul.f32 %v2542, %v2534
    %v2547 = vmul.f32 %v2542, %v2533
    %v2548 = vmul.f32 %v2542, %v2532
    %v2549 = vmul.f32 %v2542, %v2531
    %v2550 = vmul.f32 %v2542, %v2530
    %v2551 = vmul.f32 %v2542, %v2529
    %v2552 = vadd.f32 %v2474, %v2544
    %v2553 = vadd.f32 %v2475, %v2545
    %v2554 = vadd.f32 %v2476, %v2546
    %v2555 = vadd.f32 %v2477, %v2547
    %v2556 = vadd.f32 %v2478, %v2548
    %v2557 = vadd.f32 %v2479, %v2549
    %v2558 = vadd.f32 %v2480, %v2550
    %v2559 = vadd.f32 %v2481, %v2551
    %s2560 = scalar_lea.vmem %s3, 32
    %v2561 = vld [vmem:[%s2560] sm:$0xff]
    %2563 = vset.pattern.permute.xlu0 0
    %2564 = vperm.xlu0 %2563, %v2561
    %v2565 = vpop.permute.xlu0 %2564
    %v2567 = vmul.f32 %v2565, %v2536
    %v2568 = vmul.f32 %v2565, %v2535
    %v2569 = vmul.f32 %v2565, %v2534
    %v2570 = vmul.f32 %v2565, %v2533
    %v2571 = vmul.f32 %v2565, %v2532
    %v2572 = vmul.f32 %v2565, %v2531
    %v2573 = vmul.f32 %v2565, %v2530
    %v2574 = vmul.f32 %v2565, %v2529
    %v2575 = vadd.f32 %v2489, %v2567
    %v2576 = vadd.f32 %v2490, %v2568
    %v2577 = vadd.f32 %v2491, %v2569
    %v2578 = vadd.f32 %v2492, %v2570
    %v2579 = vadd.f32 %v2493, %v2571
    %v2580 = vadd.f32 %v2494, %v2572
    %v2581 = vadd.f32 %v2495, %v2573
    %v2582 = vadd.f32 %v2496, %v2574
    %s2583 = scalar_lea.vmem %s3, 40
    %v2584 = vld [vmem:[%s2583] sm:$0xff]
    %2586 = vset.pattern.permute.xlu0 0
    %2587 = vperm.xlu0 %2586, %v2584
    %v2588 = vpop.permute.xlu0 %2587
    %v2590 = vmul.f32 %v2588, %v2536
    %v2591 = vmul.f32 %v2588, %v2535
    %v2592 = vmul.f32 %v2588, %v2534
    %v2593 = vmul.f32 %v2588, %v2533
    %v2594 = vmul.f32 %v2588, %v2532
    %v2595 = vmul.f32 %v2588, %v2531
    %v2596 = vmul.f32 %v2588, %v2530
    %v2597 = vmul.f32 %v2588, %v2529
    %v2598 = vadd.f32 %v2504, %v2590
    %v2599 = vadd.f32 %v2505, %v2591
    %v2600 = vadd.f32 %v2506, %v2592
    %v2601 = vadd.f32 %v2507, %v2593
    %v2602 = vadd.f32 %v2508, %v2594
    %v2603 = vadd.f32 %v2509, %v2595
    %v2604 = vadd.f32 %v2510, %v2596
    %v2605 = vadd.f32 %v2511, %v2597
    %2606 = vrot.lane.b32.xlu0 %v2057, 29
    %v2607 = vpop.permute.xlu0 %2606
    %2608 = vrot.lane.b32.xlu0 %v2059, 29
    %v2609 = vpop.permute.xlu0 %2608
    %2610 = vrot.lane.b32.xlu0 %v2180, 29
    %v2611 = vpop.permute.xlu0 %2610
    %2612 = vrot.lane.b32.xlu0 %v2182, 29
    %v2613 = vpop.permute.xlu0 %2612
    %2614 = vrot.lane.b32.xlu0 %v2303, 29
    %v2615 = vpop.permute.xlu0 %2614
    %2616 = vrot.lane.b32.xlu0 %v2305, 29
    %v2617 = vpop.permute.xlu0 %2616
    %2618 = vrot.lane.b32.xlu0 %v2426, 29
    %v2619 = vpop.permute.xlu0 %2618
    %2620 = vrot.lane.b32.xlu0 %v2428, 29
    %v2621 = vpop.permute.xlu0 %2620
    %vm2622 = vcmp.lt.s32.totalorder %v2458, 29
    %v2623 = vsel %vm2622, %v2619, %v2621
    %v2624 = vsel %vm2622, %v2617, %v2619
    %v2625 = vsel %vm2622, %v2615, %v2617
    %v2626 = vsel %vm2622, %v2613, %v2615
    %v2627 = vsel %vm2622, %v2611, %v2613
    %v2628 = vsel %vm2622, %v2609, %v2611
    %v2629 = vsel %vm2622, %v2607, %v2609
    %v2630 = vsel %vm2622, %v2621, %v2607
    %s2631 = scalar_lea.vmem %s3, 48
    %v2632 = vld [vmem:[%s2631] sm:$0xff]
    %2634 = vset.pattern.permute.xlu0 0
    %2635 = vperm.xlu0 %2634, %v2632
    %v2636 = vpop.permute.xlu0 %2635
    %v2638 = vmul.f32 %v2636, %v2630
    %v2639 = vmul.f32 %v2636, %v2629
    %v2640 = vmul.f32 %v2636, %v2628
    %v2641 = vmul.f32 %v2636, %v2627
    %v2642 = vmul.f32 %v2636, %v2626
    %v2643 = vmul.f32 %v2636, %v2625
    %v2644 = vmul.f32 %v2636, %v2624
    %v2645 = vmul.f32 %v2636, %v2623
    %v2646 = vadd.f32 %v2552, %v2638
    %v2647 = vadd.f32 %v2553, %v2639
    %v2648 = vadd.f32 %v2554, %v2640
    %v2649 = vadd.f32 %v2555, %v2641
    %v2650 = vadd.f32 %v2556, %v2642
    %v2651 = vadd.f32 %v2557, %v2643
    %v2652 = vadd.f32 %v2558, %v2644
    %v2653 = vadd.f32 %v2559, %v2645
    %s2654 = scalar_lea.vmem %s3, 56
    %v2655 = vld [vmem:[%s2654] sm:$0xff]
    %2657 = vset.pattern.permute.xlu0 0
    %2658 = vperm.xlu0 %2657, %v2655
    %v2659 = vpop.permute.xlu0 %2658
    %v2661 = vmul.f32 %v2659, %v2630
    %v2662 = vmul.f32 %v2659, %v2629
    %v2663 = vmul.f32 %v2659, %v2628
    %v2664 = vmul.f32 %v2659, %v2627
    %v2665 = vmul.f32 %v2659, %v2626
    %v2666 = vmul.f32 %v2659, %v2625
    %v2667 = vmul.f32 %v2659, %v2624
    %v2668 = vmul.f32 %v2659, %v2623
    %v2669 = vadd.f32 %v2575, %v2661
    %v2670 = vadd.f32 %v2576, %v2662
    %v2671 = vadd.f32 %v2577, %v2663
    %v2672 = vadd.f32 %v2578, %v2664
    %v2673 = vadd.f32 %v2579, %v2665
    %v2674 = vadd.f32 %v2580, %v2666
    %v2675 = vadd.f32 %v2581, %v2667
    %v2676 = vadd.f32 %v2582, %v2668
    %s2677 = scalar_lea.vmem %s3, 64
    %v2678 = vld [vmem:[%s2677] sm:$0xff]
    %2680 = vset.pattern.permute.xlu0 0
    %2681 = vperm.xlu0 %2680, %v2678
    %v2682 = vpop.permute.xlu0 %2681
    %v2684 = vmul.f32 %v2682, %v2630
    %v2685 = vmul.f32 %v2682, %v2629
    %v2686 = vmul.f32 %v2682, %v2628
    %v2687 = vmul.f32 %v2682, %v2627
    %v2688 = vmul.f32 %v2682, %v2626
    %v2689 = vmul.f32 %v2682, %v2625
    %v2690 = vmul.f32 %v2682, %v2624
    %v2691 = vmul.f32 %v2682, %v2623
    %v2692 = vadd.f32 %v2598, %v2684
    %v2693 = vadd.f32 %v2599, %v2685
    %v2694 = vadd.f32 %v2600, %v2686
    %v2695 = vadd.f32 %v2601, %v2687
    %v2696 = vadd.f32 %v2602, %v2688
    %v2697 = vadd.f32 %v2603, %v2689
    %v2698 = vadd.f32 %v2604, %v2690
    %v2699 = vadd.f32 %v2605, %v2691
    %2700 = vrot.lane.b32.xlu0 %v2057, 1
    %v2701 = vpop.permute.xlu0 %2700
    %2702 = vrot.lane.b32.xlu0 %v2059, 1
    %v2703 = vpop.permute.xlu0 %2702
    %2704 = vrot.lane.b32.xlu0 %v2180, 1
    %v2705 = vpop.permute.xlu0 %2704
    %2706 = vrot.lane.b32.xlu0 %v2182, 1
    %v2707 = vpop.permute.xlu0 %2706
    %2708 = vrot.lane.b32.xlu0 %v2303, 1
    %v2709 = vpop.permute.xlu0 %2708
    %2710 = vrot.lane.b32.xlu0 %v2305, 1
    %v2711 = vpop.permute.xlu0 %2710
    %2712 = vrot.lane.b32.xlu0 %v2426, 1
    %v2713 = vpop.permute.xlu0 %2712
    %2714 = vrot.lane.b32.xlu0 %v2428, 1
    %v2715 = vpop.permute.xlu0 %2714
    %vm2716 = vcmp.lt.s32.totalorder %v2458, 1
    %v2717 = vsel %vm2716, %v2713, %v2715
    %v2718 = vsel %vm2716, %v2711, %v2713
    %v2719 = vsel %vm2716, %v2709, %v2711
    %v2720 = vsel %vm2716, %v2707, %v2709
    %v2721 = vsel %vm2716, %v2705, %v2707
    %v2722 = vsel %vm2716, %v2703, %v2705
    %v2723 = vsel %vm2716, %v2701, %v2703
    %v2724 = vsel %vm2716, %v2715, %v2701
    %s2725 = scalar_lea.vmem %s3, 72
    %v2726 = vld [vmem:[%s2725] sm:$0xff]
    %2728 = vset.pattern.permute.xlu0 0
    %2729 = vperm.xlu0 %2728, %v2726
    %v2730 = vpop.permute.xlu0 %2729
    %v2732 = vmul.f32 %v2730, %v2724
    %v2733 = vmul.f32 %v2730, %v2723
    %v2734 = vmul.f32 %v2730, %v2722
    %v2735 = vmul.f32 %v2730, %v2721
    %v2736 = vmul.f32 %v2730, %v2720
    %v2737 = vmul.f32 %v2730, %v2719
    %v2738 = vmul.f32 %v2730, %v2718
    %v2739 = vmul.f32 %v2730, %v2717
    %v2740 = vadd.f32 %v2646, %v2732
    %v2741 = vadd.f32 %v2647, %v2733
    %v2742 = vadd.f32 %v2648, %v2734
    %v2743 = vadd.f32 %v2649, %v2735
    %v2744 = vadd.f32 %v2650, %v2736
    %v2745 = vadd.f32 %v2651, %v2737
    %v2746 = vadd.f32 %v2652, %v2738
    %v2747 = vadd.f32 %v2653, %v2739
    %s2748 = scalar_lea.vmem %s3, 80
    %v2749 = vld [vmem:[%s2748] sm:$0xff]
    %2751 = vset.pattern.permute.xlu0 0
    %2752 = vperm.xlu0 %2751, %v2749
    %v2753 = vpop.permute.xlu0 %2752
    %v2755 = vmul.f32 %v2753, %v2724
    %v2756 = vmul.f32 %v2753, %v2723
    %v2757 = vmul.f32 %v2753, %v2722
    %v2758 = vmul.f32 %v2753, %v2721
    %v2759 = vmul.f32 %v2753, %v2720
    %v2760 = vmul.f32 %v2753, %v2719
    %v2761 = vmul.f32 %v2753, %v2718
    %v2762 = vmul.f32 %v2753, %v2717
    %v2763 = vadd.f32 %v2669, %v2755
    %v2764 = vadd.f32 %v2670, %v2756
    %v2765 = vadd.f32 %v2671, %v2757
    %v2766 = vadd.f32 %v2672, %v2758
    %v2767 = vadd.f32 %v2673, %v2759
    %v2768 = vadd.f32 %v2674, %v2760
    %v2769 = vadd.f32 %v2675, %v2761
    %v2770 = vadd.f32 %v2676, %v2762
    %s2771 = scalar_lea.vmem %s3, 88
    %v2772 = vld [vmem:[%s2771] sm:$0xff]
    %2774 = vset.pattern.permute.xlu0 0
    %2775 = vperm.xlu0 %2774, %v2772
    %v2776 = vpop.permute.xlu0 %2775
    %v2778 = vmul.f32 %v2776, %v2724
    %v2779 = vmul.f32 %v2776, %v2723
    %v2780 = vmul.f32 %v2776, %v2722
    %v2781 = vmul.f32 %v2776, %v2721
    %v2782 = vmul.f32 %v2776, %v2720
    %v2783 = vmul.f32 %v2776, %v2719
    %v2784 = vmul.f32 %v2776, %v2718
    %v2785 = vmul.f32 %v2776, %v2717
    %v2786 = vadd.f32 %v2692, %v2778
    %v2787 = vadd.f32 %v2693, %v2779
    %v2788 = vadd.f32 %v2694, %v2780
    %v2789 = vadd.f32 %v2695, %v2781
    %v2790 = vadd.f32 %v2696, %v2782
    %v2791 = vadd.f32 %v2697, %v2783
    %v2792 = vadd.f32 %v2698, %v2784
    %v2793 = vadd.f32 %v2699, %v2785
    %s2794 = scalar_lea.vmem %s3, 96
    %v2795 = vld [vmem:[%s2794] sm:$0xff]
    %2797 = vset.pattern.permute.xlu0 0
    %2798 = vperm.xlu0 %2797, %v2795
    %v2799 = vpop.permute.xlu0 %2798
    %v2801 = vmul.f32 %v2799, %v2057
    %v2802 = vmul.f32 %v2799, %v2059
    %v2803 = vmul.f32 %v2799, %v2180
    %v2804 = vmul.f32 %v2799, %v2182
    %v2805 = vmul.f32 %v2799, %v2303
    %v2806 = vmul.f32 %v2799, %v2305
    %v2807 = vmul.f32 %v2799, %v2426
    %v2808 = vmul.f32 %v2799, %v2428
    %v2809 = vadd.f32 %v2740, %v2801
    %v2810 = vadd.f32 %v2741, %v2802
    %v2811 = vadd.f32 %v2742, %v2803
    %v2812 = vadd.f32 %v2743, %v2804
    %v2813 = vadd.f32 %v2744, %v2805
    %v2814 = vadd.f32 %v2745, %v2806
    %v2815 = vadd.f32 %v2746, %v2807
    %v2816 = vadd.f32 %v2747, %v2808
    %s2817 = scalar_lea.vmem %s3, 104
    %v2818 = vld [vmem:[%s2817] sm:$0xff]
    %2820 = vset.pattern.permute.xlu0 0
    %2821 = vperm.xlu0 %2820, %v2818
    %v2822 = vpop.permute.xlu0 %2821
    %v2824 = vmul.f32 %v2822, %v2057
    %v2825 = vmul.f32 %v2822, %v2059
    %v2826 = vmul.f32 %v2822, %v2180
    %v2827 = vmul.f32 %v2822, %v2182
    %v2828 = vmul.f32 %v2822, %v2303
    %v2829 = vmul.f32 %v2822, %v2305
    %v2830 = vmul.f32 %v2822, %v2426
    %v2831 = vmul.f32 %v2822, %v2428
    %v2832 = vadd.f32 %v2763, %v2824
    %v2833 = vadd.f32 %v2764, %v2825
    %v2834 = vadd.f32 %v2765, %v2826
    %v2835 = vadd.f32 %v2766, %v2827
    %v2836 = vadd.f32 %v2767, %v2828
    %v2837 = vadd.f32 %v2768, %v2829
    %v2838 = vadd.f32 %v2769, %v2830
    %v2839 = vadd.f32 %v2770, %v2831
    %s2840 = scalar_lea.vmem %s3, 112
    %v2841 = vld [vmem:[%s2840] sm:$0xff]
    %2843 = vset.pattern.permute.xlu0 0
    %2844 = vperm.xlu0 %2843, %v2841
    %v2845 = vpop.permute.xlu0 %2844
    %v2847 = vmul.f32 %v2845, %v2057
    %v2848 = vmul.f32 %v2845, %v2059
    %v2849 = vmul.f32 %v2845, %v2180
    %v2850 = vmul.f32 %v2845, %v2182
    %v2851 = vmul.f32 %v2845, %v2303
    %v2852 = vmul.f32 %v2845, %v2305
    %v2853 = vmul.f32 %v2845, %v2426
    %v2854 = vmul.f32 %v2845, %v2428
    %v2855 = vadd.f32 %v2786, %v2847
    %v2856 = vadd.f32 %v2787, %v2848
    %v2857 = vadd.f32 %v2788, %v2849
    %v2858 = vadd.f32 %v2789, %v2850
    %v2859 = vadd.f32 %v2790, %v2851
    %v2860 = vadd.f32 %v2791, %v2852
    %v2861 = vadd.f32 %v2792, %v2853
    %v2862 = vadd.f32 %v2793, %v2854
    %2863 = vrot.lane.b32.xlu0 %v2057, 127
    %v2864 = vpop.permute.xlu0 %2863
    %2865 = vrot.lane.b32.xlu0 %v2059, 127
    %v2866 = vpop.permute.xlu0 %2865
    %2867 = vrot.lane.b32.xlu0 %v2180, 127
    %v2868 = vpop.permute.xlu0 %2867
    %2869 = vrot.lane.b32.xlu0 %v2182, 127
    %v2870 = vpop.permute.xlu0 %2869
    %2871 = vrot.lane.b32.xlu0 %v2303, 127
    %v2872 = vpop.permute.xlu0 %2871
    %2873 = vrot.lane.b32.xlu0 %v2305, 127
    %v2874 = vpop.permute.xlu0 %2873
    %2875 = vrot.lane.b32.xlu0 %v2426, 127
    %v2876 = vpop.permute.xlu0 %2875
    %2877 = vrot.lane.b32.xlu0 %v2428, 127
    %v2878 = vpop.permute.xlu0 %2877
    %vm2879 = vcmp.lt.s32.totalorder %v2458, 127
    %v2880 = vsel %vm2879, %v2876, %v2878
    %v2881 = vsel %vm2879, %v2874, %v2876
    %v2882 = vsel %vm2879, %v2872, %v2874
    %v2883 = vsel %vm2879, %v2870, %v2872
    %v2884 = vsel %vm2879, %v2868, %v2870
    %v2885 = vsel %vm2879, %v2866, %v2868
    %v2886 = vsel %vm2879, %v2864, %v2866
    %v2887 = vsel %vm2879, %v2878, %v2864
    %s2888 = scalar_lea.vmem %s3, 120
    %v2889 = vld [vmem:[%s2888] sm:$0xff]
    %2891 = vset.pattern.permute.xlu0 0
    %2892 = vperm.xlu0 %2891, %v2889
    %v2893 = vpop.permute.xlu0 %2892
    %v2895 = vmul.f32 %v2893, %v2886
    %v2896 = vmul.f32 %v2893, %v2885
    %v2897 = vmul.f32 %v2893, %v2884
    %v2898 = vmul.f32 %v2893, %v2883
    %v2899 = vmul.f32 %v2893, %v2882
    %v2900 = vmul.f32 %v2893, %v2881
    %v2901 = vmul.f32 %v2893, %v2880
    %v2902 = vmul.f32 %v2893, %v2887
    %v2903 = vadd.f32 %v2809, %v2895
    %v2904 = vadd.f32 %v2810, %v2896
    %v2905 = vadd.f32 %v2811, %v2897
    %v2906 = vadd.f32 %v2812, %v2898
    %v2907 = vadd.f32 %v2813, %v2899
    %v2908 = vadd.f32 %v2814, %v2900
    %v2909 = vadd.f32 %v2815, %v2901
    %v2910 = vadd.f32 %v2816, %v2902
    %s2911 = scalar_lea.vmem %s3, 128
    %v2912 = vld [vmem:[%s2911] sm:$0xff]
    %2914 = vset.pattern.permute.xlu0 0
    %2915 = vperm.xlu0 %2914, %v2912
    %v2916 = vpop.permute.xlu0 %2915
    %v2918 = vmul.f32 %v2916, %v2886
    %v2919 = vmul.f32 %v2916, %v2885
    %v2920 = vmul.f32 %v2916, %v2884
    %v2921 = vmul.f32 %v2916, %v2883
    %v2922 = vmul.f32 %v2916, %v2882
    %v2923 = vmul.f32 %v2916, %v2881
    %v2924 = vmul.f32 %v2916, %v2880
    %v2925 = vmul.f32 %v2916, %v2887
    %v2926 = vadd.f32 %v2832, %v2918
    %v2927 = vadd.f32 %v2833, %v2919
    %v2928 = vadd.f32 %v2834, %v2920
    %v2929 = vadd.f32 %v2835, %v2921
    %v2930 = vadd.f32 %v2836, %v2922
    %v2931 = vadd.f32 %v2837, %v2923
    %v2932 = vadd.f32 %v2838, %v2924
    %v2933 = vadd.f32 %v2839, %v2925
    %s2934 = scalar_lea.vmem %s3, 136
    %v2935 = vld [vmem:[%s2934] sm:$0xff]
    %2937 = vset.pattern.permute.xlu0 0
    %2938 = vperm.xlu0 %2937, %v2935
    %v2939 = vpop.permute.xlu0 %2938
    %v2941 = vmul.f32 %v2939, %v2886
    %v2942 = vmul.f32 %v2939, %v2885
    %v2943 = vmul.f32 %v2939, %v2884
    %v2944 = vmul.f32 %v2939, %v2883
    %v2945 = vmul.f32 %v2939, %v2882
    %v2946 = vmul.f32 %v2939, %v2881
    %v2947 = vmul.f32 %v2939, %v2880
    %v2948 = vmul.f32 %v2939, %v2887
    %v2949 = vadd.f32 %v2855, %v2941
    %v2950 = vadd.f32 %v2856, %v2942
    %v2951 = vadd.f32 %v2857, %v2943
    %v2952 = vadd.f32 %v2858, %v2944
    %v2953 = vadd.f32 %v2859, %v2945
    %v2954 = vadd.f32 %v2860, %v2946
    %v2955 = vadd.f32 %v2861, %v2947
    %v2956 = vadd.f32 %v2862, %v2948
    %2957 = vrot.lane.b32.xlu0 %v2057, 99
    %v2958 = vpop.permute.xlu0 %2957
    %2959 = vrot.lane.b32.xlu0 %v2059, 99
    %v2960 = vpop.permute.xlu0 %2959
    %2961 = vrot.lane.b32.xlu0 %v2180, 99
    %v2962 = vpop.permute.xlu0 %2961
    %2963 = vrot.lane.b32.xlu0 %v2182, 99
    %v2964 = vpop.permute.xlu0 %2963
    %2965 = vrot.lane.b32.xlu0 %v2303, 99
    %v2966 = vpop.permute.xlu0 %2965
    %2967 = vrot.lane.b32.xlu0 %v2305, 99
    %v2968 = vpop.permute.xlu0 %2967
    %2969 = vrot.lane.b32.xlu0 %v2426, 99
    %v2970 = vpop.permute.xlu0 %2969
    %2971 = vrot.lane.b32.xlu0 %v2428, 99
    %v2972 = vpop.permute.xlu0 %2971
    %vm2973 = vcmp.lt.s32.totalorder %v2458, 99
    %v2974 = vsel %vm2973, %v2970, %v2972
    %v2975 = vsel %vm2973, %v2968, %v2970
    %v2976 = vsel %vm2973, %v2966, %v2968
    %v2977 = vsel %vm2973, %v2964, %v2966
    %v2978 = vsel %vm2973, %v2962, %v2964
    %v2979 = vsel %vm2973, %v2960, %v2962
    %v2980 = vsel %vm2973, %v2958, %v2960
    %v2981 = vsel %vm2973, %v2972, %v2958
    %s2982 = scalar_lea.vmem %s3, 144
    %v2983 = vld [vmem:[%s2982] sm:$0xff]
    %2985 = vset.pattern.permute.xlu0 0
    %2986 = vperm.xlu0 %2985, %v2983
    %v2987 = vpop.permute.xlu0 %2986
    %v2989 = vmul.f32 %v2987, %v2980
    %v2990 = vmul.f32 %v2987, %v2979
    %v2991 = vmul.f32 %v2987, %v2978
    %v2992 = vmul.f32 %v2987, %v2977
    %v2993 = vmul.f32 %v2987, %v2976
    %v2994 = vmul.f32 %v2987, %v2975
    %v2995 = vmul.f32 %v2987, %v2974
    %v2996 = vmul.f32 %v2987, %v2981
    %v2997 = vadd.f32 %v2903, %v2989
    %v2998 = vadd.f32 %v2904, %v2990
    %v2999 = vadd.f32 %v2905, %v2991
    %v3000 = vadd.f32 %v2906, %v2992
    %v3001 = vadd.f32 %v2907, %v2993
    %v3002 = vadd.f32 %v2908, %v2994
    %v3003 = vadd.f32 %v2909, %v2995
    %v3004 = vadd.f32 %v2910, %v2996
    %s3005 = scalar_lea.vmem %s3, 152
    %v3006 = vld [vmem:[%s3005] sm:$0xff]
    %3008 = vset.pattern.permute.xlu0 0
    %3009 = vperm.xlu0 %3008, %v3006
    %v3010 = vpop.permute.xlu0 %3009
    %v3012 = vmul.f32 %v3010, %v2980
    %v3013 = vmul.f32 %v3010, %v2979
    %v3014 = vmul.f32 %v3010, %v2978
    %v3015 = vmul.f32 %v3010, %v2977
    %v3016 = vmul.f32 %v3010, %v2976
    %v3017 = vmul.f32 %v3010, %v2975
    %v3018 = vmul.f32 %v3010, %v2974
    %v3019 = vmul.f32 %v3010, %v2981
    %v3020 = vadd.f32 %v2926, %v3012
    %v3021 = vadd.f32 %v2927, %v3013
    %v3022 = vadd.f32 %v2928, %v3014
    %v3023 = vadd.f32 %v2929, %v3015
    %v3024 = vadd.f32 %v2930, %v3016
    %v3025 = vadd.f32 %v2931, %v3017
    %v3026 = vadd.f32 %v2932, %v3018
    %v3027 = vadd.f32 %v2933, %v3019
    %s3028 = scalar_lea.vmem %s3, 160
    %v3029 = vld [vmem:[%s3028] sm:$0xff]
    %3031 = vset.pattern.permute.xlu0 0
    %3032 = vperm.xlu0 %3031, %v3029
    %v3033 = vpop.permute.xlu0 %3032
    %v3035 = vmul.f32 %v3033, %v2980
    %v3036 = vmul.f32 %v3033, %v2979
    %v3037 = vmul.f32 %v3033, %v2978
    %v3038 = vmul.f32 %v3033, %v2977
    %v3039 = vmul.f32 %v3033, %v2976
    %v3040 = vmul.f32 %v3033, %v2975
    %v3041 = vmul.f32 %v3033, %v2974
    %v3042 = vmul.f32 %v3033, %v2981
    %v3043 = vadd.f32 %v2949, %v3035
    %v3044 = vadd.f32 %v2950, %v3036
    %v3045 = vadd.f32 %v2951, %v3037
    %v3046 = vadd.f32 %v2952, %v3038
    %v3047 = vadd.f32 %v2953, %v3039
    %v3048 = vadd.f32 %v2954, %v3040
    %v3049 = vadd.f32 %v2955, %v3041
    %v3050 = vadd.f32 %v2956, %v3042
    %3051 = vrot.lane.b32.xlu0 %v2057, 98
    %v3052 = vpop.permute.xlu0 %3051
    %3053 = vrot.lane.b32.xlu0 %v2059, 98
    %v3054 = vpop.permute.xlu0 %3053
    %3055 = vrot.lane.b32.xlu0 %v2180, 98
    %v3056 = vpop.permute.xlu0 %3055
    %3057 = vrot.lane.b32.xlu0 %v2182, 98
    %v3058 = vpop.permute.xlu0 %3057
    %3059 = vrot.lane.b32.xlu0 %v2303, 98
    %v3060 = vpop.permute.xlu0 %3059
    %3061 = vrot.lane.b32.xlu0 %v2305, 98
    %v3062 = vpop.permute.xlu0 %3061
    %3063 = vrot.lane.b32.xlu0 %v2426, 98
    %v3064 = vpop.permute.xlu0 %3063
    %3065 = vrot.lane.b32.xlu0 %v2428, 98
    %v3066 = vpop.permute.xlu0 %3065
    %vm3067 = vcmp.lt.s32.totalorder %v2458, 98
    %v3068 = vsel %vm3067, %v3064, %v3066
    %v3069 = vsel %vm3067, %v3062, %v3064
    %v3070 = vsel %vm3067, %v3060, %v3062
    %v3071 = vsel %vm3067, %v3058, %v3060
    %v3072 = vsel %vm3067, %v3056, %v3058
    %v3073 = vsel %vm3067, %v3054, %v3056
    %v3074 = vsel %vm3067, %v3052, %v3054
    %v3075 = vsel %vm3067, %v3066, %v3052
    %s3076 = scalar_lea.vmem %s3, 168
    %v3077 = vld [vmem:[%s3076] sm:$0xff]
    %3079 = vset.pattern.permute.xlu0 0
    %3080 = vperm.xlu0 %3079, %v3077
    %v3081 = vpop.permute.xlu0 %3080
    %v3083 = vmul.f32 %v3081, %v3074
    %v3084 = vmul.f32 %v3081, %v3073
    %v3085 = vmul.f32 %v3081, %v3072
    %v3086 = vmul.f32 %v3081, %v3071
    %v3087 = vmul.f32 %v3081, %v3070
    %v3088 = vmul.f32 %v3081, %v3069
    %v3089 = vmul.f32 %v3081, %v3068
    %v3090 = vmul.f32 %v3081, %v3075
    %v3091 = vadd.f32 %v2997, %v3083
    %v3092 = vadd.f32 %v2998, %v3084
    %v3093 = vadd.f32 %v2999, %v3085
    %v3094 = vadd.f32 %v3000, %v3086
    %v3095 = vadd.f32 %v3001, %v3087
    %v3096 = vadd.f32 %v3002, %v3088
    %v3097 = vadd.f32 %v3003, %v3089
    %v3098 = vadd.f32 %v3004, %v3090
    %s3099 = scalar_lea.vmem %s3, 176
    %v3100 = vld [vmem:[%s3099] sm:$0xff]
    %3102 = vset.pattern.permute.xlu0 0
    %3103 = vperm.xlu0 %3102, %v3100
    %v3104 = vpop.permute.xlu0 %3103
    %v3106 = vmul.f32 %v3104, %v3074
    %v3107 = vmul.f32 %v3104, %v3073
    %v3108 = vmul.f32 %v3104, %v3072
    %v3109 = vmul.f32 %v3104, %v3071
    %v3110 = vmul.f32 %v3104, %v3070
    %v3111 = vmul.f32 %v3104, %v3069
    %v3112 = vmul.f32 %v3104, %v3068
    %v3113 = vmul.f32 %v3104, %v3075
    %v3114 = vadd.f32 %v3020, %v3106
    %v3115 = vadd.f32 %v3021, %v3107
    %v3116 = vadd.f32 %v3022, %v3108
    %v3117 = vadd.f32 %v3023, %v3109
    %v3118 = vadd.f32 %v3024, %v3110
    %v3119 = vadd.f32 %v3025, %v3111
    %v3120 = vadd.f32 %v3026, %v3112
    %v3121 = vadd.f32 %v3027, %v3113
    %s3122 = scalar_lea.vmem %s3, 184
    %v3123 = vld [vmem:[%s3122] sm:$0xff]
    %3125 = vset.pattern.permute.xlu0 0
    %3126 = vperm.xlu0 %3125, %v3123
    %v3127 = vpop.permute.xlu0 %3126
    %v3129 = vmul.f32 %v3127, %v3074
    %v3130 = vmul.f32 %v3127, %v3073
    %v3131 = vmul.f32 %v3127, %v3072
    %v3132 = vmul.f32 %v3127, %v3071
    %v3133 = vmul.f32 %v3127, %v3070
    %v3134 = vmul.f32 %v3127, %v3069
    %v3135 = vmul.f32 %v3127, %v3068
    %v3136 = vmul.f32 %v3127, %v3075
    %v3137 = vadd.f32 %v3043, %v3129
    %v3138 = vadd.f32 %v3044, %v3130
    %v3139 = vadd.f32 %v3045, %v3131
    %v3140 = vadd.f32 %v3046, %v3132
    %v3141 = vadd.f32 %v3047, %v3133
    %v3142 = vadd.f32 %v3048, %v3134
    %v3143 = vadd.f32 %v3049, %v3135
    %v3144 = vadd.f32 %v3050, %v3136
    %3145 = vrot.lane.b32.xlu0 %v2057, 97
    %v3146 = vpop.permute.xlu0 %3145
    %3147 = vrot.lane.b32.xlu0 %v2059, 97
    %v3148 = vpop.permute.xlu0 %3147
    %3149 = vrot.lane.b32.xlu0 %v2180, 97
    %v3150 = vpop.permute.xlu0 %3149
    %3151 = vrot.lane.b32.xlu0 %v2182, 97
    %v3152 = vpop.permute.xlu0 %3151
    %3153 = vrot.lane.b32.xlu0 %v2303, 97
    %v3154 = vpop.permute.xlu0 %3153
    %3155 = vrot.lane.b32.xlu0 %v2305, 97
    %v3156 = vpop.permute.xlu0 %3155
    %3157 = vrot.lane.b32.xlu0 %v2426, 97
    %v3158 = vpop.permute.xlu0 %3157
    %3159 = vrot.lane.b32.xlu0 %v2428, 97
    %v3160 = vpop.permute.xlu0 %3159
    %vm3161 = vcmp.lt.s32.totalorder %v2458, 97
    %v3162 = vsel %vm3161, %v3158, %v3160
    %v3163 = vsel %vm3161, %v3156, %v3158
    %v3164 = vsel %vm3161, %v3154, %v3156
    %v3165 = vsel %vm3161, %v3152, %v3154
    %v3166 = vsel %vm3161, %v3150, %v3152
    %v3167 = vsel %vm3161, %v3148, %v3150
    %v3168 = vsel %vm3161, %v3146, %v3148
    %v3169 = vsel %vm3161, %v3160, %v3146
    %s3170 = scalar_lea.vmem %s3, 192
    %v3171 = vld [vmem:[%s3170] sm:$0xff]
    %3173 = vset.pattern.permute.xlu0 0
    %3174 = vperm.xlu0 %3173, %v3171
    %v3175 = vpop.permute.xlu0 %3174
    %v3177 = vmul.f32 %v3175, %v3168
    %v3178 = vmul.f32 %v3175, %v3167
    %v3179 = vmul.f32 %v3175, %v3166
    %v3180 = vmul.f32 %v3175, %v3165
    %v3181 = vmul.f32 %v3175, %v3164
    %v3182 = vmul.f32 %v3175, %v3163
    %v3183 = vmul.f32 %v3175, %v3162
    %v3184 = vmul.f32 %v3175, %v3169
    %v3185 = vadd.f32 %v3091, %v3177
    %v3186 = vadd.f32 %v3092, %v3178
    %v3187 = vadd.f32 %v3093, %v3179
    %v3188 = vadd.f32 %v3094, %v3180
    %v3189 = vadd.f32 %v3095, %v3181
    %v3190 = vadd.f32 %v3096, %v3182
    %v3191 = vadd.f32 %v3097, %v3183
    %v3192 = vadd.f32 %v3098, %v3184
    %s3193 = scalar_lea.vmem %s3, 200
    %v3194 = vld [vmem:[%s3193] sm:$0xff]
    %3196 = vset.pattern.permute.xlu0 0
    %3197 = vperm.xlu0 %3196, %v3194
    %v3198 = vpop.permute.xlu0 %3197
    %v3200 = vmul.f32 %v3198, %v3168
    %v3201 = vmul.f32 %v3198, %v3167
    %v3202 = vmul.f32 %v3198, %v3166
    %v3203 = vmul.f32 %v3198, %v3165
    %v3204 = vmul.f32 %v3198, %v3164
    %v3205 = vmul.f32 %v3198, %v3163
    %v3206 = vmul.f32 %v3198, %v3162
    %v3207 = vmul.f32 %v3198, %v3169
    %v3208 = vadd.f32 %v3114, %v3200
    %v3209 = vadd.f32 %v3115, %v3201
    %v3210 = vadd.f32 %v3116, %v3202
    %v3211 = vadd.f32 %v3117, %v3203
    %v3212 = vadd.f32 %v3118, %v3204
    %v3213 = vadd.f32 %v3119, %v3205
    %v3214 = vadd.f32 %v3120, %v3206
    %v3215 = vadd.f32 %v3121, %v3207
    %s3216 = scalar_lea.vmem %s3, 208
    %v3217 = vld [vmem:[%s3216] sm:$0xff]
    %3219 = vset.pattern.permute.xlu0 0
    %3220 = vperm.xlu0 %3219, %v3217
    %v3221 = vpop.permute.xlu0 %3220
    %v3223 = vmul.f32 %v3221, %v3168
    %v3224 = vmul.f32 %v3221, %v3167
    %v3225 = vmul.f32 %v3221, %v3166
    %v3226 = vmul.f32 %v3221, %v3165
    %v3227 = vmul.f32 %v3221, %v3164
    %v3228 = vmul.f32 %v3221, %v3163
    %v3229 = vmul.f32 %v3221, %v3162
    %v3230 = vmul.f32 %v3221, %v3169
    %v3231 = vadd.f32 %v3137, %v3223
    %v3232 = vadd.f32 %v3138, %v3224
    %v3233 = vadd.f32 %v3139, %v3225
    %v3234 = vadd.f32 %v3140, %v3226
    %v3235 = vadd.f32 %v3141, %v3227
    %v3236 = vadd.f32 %v3142, %v3228
    %v3237 = vadd.f32 %v3143, %v3229
    %v3238 = vadd.f32 %v3144, %v3230
    %v3247 = vrot.slane %v3185, 2
    %v3248 = vrot.slane %v3186, 2
    %v3249 = vrot.slane %v3187, 2
    %v3250 = vrot.slane %v3188, 2
    %v3251 = vrot.slane %v3189, 2
    %v3252 = vrot.slane %v3190, 2
    %v3253 = vrot.slane %v3191, 2
    %v3254 = vrot.slane %v3192, 2
    %v3263 = vadd.f32 %v3185, %v3247
    %v3264 = vadd.f32 %v3186, %v3248
    %v3265 = vadd.f32 %v3187, %v3249
    %v3266 = vadd.f32 %v3188, %v3250
    %v3267 = vadd.f32 %v3189, %v3251
    %v3268 = vadd.f32 %v3190, %v3252
    %v3269 = vadd.f32 %v3191, %v3253
    %v3270 = vadd.f32 %v3192, %v3254
    %v3271 = vrot.slane %v3185, 4
    %v3272 = vrot.slane %v3186, 4
    %v3273 = vrot.slane %v3187, 4
    %v3274 = vrot.slane %v3188, 4
    %v3275 = vrot.slane %v3189, 4
    %v3276 = vrot.slane %v3190, 4
    %v3277 = vrot.slane %v3191, 4
    %v3278 = vrot.slane %v3192, 4
    %v3287 = vadd.f32 %v3263, %v3271
    %v3288 = vadd.f32 %v3264, %v3272
    %v3289 = vadd.f32 %v3265, %v3273
    %v3290 = vadd.f32 %v3266, %v3274
    %v3291 = vadd.f32 %v3267, %v3275
    %v3292 = vadd.f32 %v3268, %v3276
    %v3293 = vadd.f32 %v3269, %v3277
    %v3294 = vadd.f32 %v3270, %v3278
    %v3295 = vstv %s2432
    %v3296 = vadd.f32 %v3287, %v3295
    %v3297 = vadd.f32 %v3288, %v3295
    %v3298 = vadd.f32 %v3289, %v3295
    %v3299 = vadd.f32 %v3290, %v3295
    %v3300 = vadd.f32 %v3291, %v3295
    %v3301 = vadd.f32 %v3292, %v3295
    %v3302 = vadd.f32 %v3293, %v3295
    %v3303 = vadd.f32 %v3294, %v3295
    %v3304 = vmul.f32 %v3296, 0.1
    %v3305 = vmul.f32 %v3297, 0.1
    %v3306 = vmul.f32 %v3298, 0.1
    %v3307 = vmul.f32 %v3299, 0.1
    %v3308 = vmul.f32 %v3300, 0.1
    %v3309 = vmul.f32 %v3301, 0.1
    %v3310 = vmul.f32 %v3302, 0.1
    %v3311 = vmul.f32 %v3303, 0.1
    %v3312 = vmax.f32 %v3296, %v3304
    %v3313 = vmax.f32 %v3297, %v3305
    %v3314 = vmax.f32 %v3298, %v3306
    %v3315 = vmax.f32 %v3299, %v3307
    %v3316 = vmax.f32 %v3300, %v3308
    %v3317 = vmax.f32 %v3301, %v3309
    %v3318 = vmax.f32 %v3302, %v3310
    %v3319 = vmax.f32 %v3303, %v3311
    %v3320 = vadd.f32 %v2057, %v3312
    %v3321 = vadd.f32 %v2059, %v3313
    %v3322 = vadd.f32 %v2180, %v3314
    %v3323 = vadd.f32 %v2182, %v3315
    %v3324 = vadd.f32 %v2303, %v3316
    %v3325 = vadd.f32 %v2305, %v3317
    %v3326 = vadd.f32 %v2426, %v3318
    %v3327 = vadd.f32 %v2428, %v3319
    %v3336 = vrot.slane %v3208, 2
    %v3337 = vrot.slane %v3209, 2
    %v3338 = vrot.slane %v3210, 2
    %v3339 = vrot.slane %v3211, 2
    %v3340 = vrot.slane %v3212, 2
    %v3341 = vrot.slane %v3213, 2
    %v3342 = vrot.slane %v3214, 2
    %v3343 = vrot.slane %v3215, 2
    %v3352 = vadd.f32 %v3208, %v3336
    %v3353 = vadd.f32 %v3209, %v3337
    %v3354 = vadd.f32 %v3210, %v3338
    %v3355 = vadd.f32 %v3211, %v3339
    %v3356 = vadd.f32 %v3212, %v3340
    %v3357 = vadd.f32 %v3213, %v3341
    %v3358 = vadd.f32 %v3214, %v3342
    %v3359 = vadd.f32 %v3215, %v3343
    %v3360 = vrot.slane %v3208, 4
    %v3361 = vrot.slane %v3209, 4
    %v3362 = vrot.slane %v3210, 4
    %v3363 = vrot.slane %v3211, 4
    %v3364 = vrot.slane %v3212, 4
    %v3365 = vrot.slane %v3213, 4
    %v3366 = vrot.slane %v3214, 4
    %v3367 = vrot.slane %v3215, 4
    %v3376 = vadd.f32 %v3352, %v3360
    %v3377 = vadd.f32 %v3353, %v3361
    %v3378 = vadd.f32 %v3354, %v3362
    %v3379 = vadd.f32 %v3355, %v3363
    %v3380 = vadd.f32 %v3356, %v3364
    %v3381 = vadd.f32 %v3357, %v3365
    %v3382 = vadd.f32 %v3358, %v3366
    %v3383 = vadd.f32 %v3359, %v3367
    %v3384 = vstv %s2433
    %v3385 = vadd.f32 %v3376, %v3384
    %v3386 = vadd.f32 %v3377, %v3384
    %v3387 = vadd.f32 %v3378, %v3384
    %v3388 = vadd.f32 %v3379, %v3384
    %v3389 = vadd.f32 %v3380, %v3384
    %v3390 = vadd.f32 %v3381, %v3384
    %v3391 = vadd.f32 %v3382, %v3384
    %v3392 = vadd.f32 %v3383, %v3384
    %v3393 = vmul.f32 %v3385, 0.1
    %v3394 = vmul.f32 %v3386, 0.1
    %v3395 = vmul.f32 %v3387, 0.1
    %v3396 = vmul.f32 %v3388, 0.1
    %v3397 = vmul.f32 %v3389, 0.1
    %v3398 = vmul.f32 %v3390, 0.1
    %v3399 = vmul.f32 %v3391, 0.1
    %v3400 = vmul.f32 %v3392, 0.1
    %v3401 = vmax.f32 %v3385, %v3393
    %v3402 = vmax.f32 %v3386, %v3394
    %v3403 = vmax.f32 %v3387, %v3395
    %v3404 = vmax.f32 %v3388, %v3396
    %v3405 = vmax.f32 %v3389, %v3397
    %v3406 = vmax.f32 %v3390, %v3398
    %v3407 = vmax.f32 %v3391, %v3399
    %v3408 = vmax.f32 %v3392, %v3400
    %v3417 = vrot.slane %v3401, 6
    %v3418 = vrot.slane %v3402, 6
    %v3419 = vrot.slane %v3403, 6
    %v3420 = vrot.slane %v3404, 6
    %v3421 = vrot.slane %v3405, 6
    %v3422 = vrot.slane %v3406, 6
    %v3423 = vrot.slane %v3407, 6
    %v3424 = vrot.slane %v3408, 6
    %v3433 = vadd.f32 %v2057, %v3417
    %v3434 = vadd.f32 %v2059, %v3418
    %v3435 = vadd.f32 %v2180, %v3419
    %v3436 = vadd.f32 %v2182, %v3420
    %v3437 = vadd.f32 %v2303, %v3421
    %v3438 = vadd.f32 %v2305, %v3422
    %v3439 = vadd.f32 %v2426, %v3423
    %v3440 = vadd.f32 %v2428, %v3424
    %v3449 = vrot.slane %v3231, 2
    %v3450 = vrot.slane %v3232, 2
    %v3451 = vrot.slane %v3233, 2
    %v3452 = vrot.slane %v3234, 2
    %v3453 = vrot.slane %v3235, 2
    %v3454 = vrot.slane %v3236, 2
    %v3455 = vrot.slane %v3237, 2
    %v3456 = vrot.slane %v3238, 2
    %v3465 = vadd.f32 %v3231, %v3449
    %v3466 = vadd.f32 %v3232, %v3450
    %v3467 = vadd.f32 %v3233, %v3451
    %v3468 = vadd.f32 %v3234, %v3452
    %v3469 = vadd.f32 %v3235, %v3453
    %v3470 = vadd.f32 %v3236, %v3454
    %v3471 = vadd.f32 %v3237, %v3455
    %v3472 = vadd.f32 %v3238, %v3456
    %v3473 = vrot.slane %v3231, 4
    %v3474 = vrot.slane %v3232, 4
    %v3475 = vrot.slane %v3233, 4
    %v3476 = vrot.slane %v3234, 4
    %v3477 = vrot.slane %v3235, 4
    %v3478 = vrot.slane %v3236, 4
    %v3479 = vrot.slane %v3237, 4
    %v3480 = vrot.slane %v3238, 4
    %v3489 = vadd.f32 %v3465, %v3473
    %v3490 = vadd.f32 %v3466, %v3474
    %v3491 = vadd.f32 %v3467, %v3475
    %v3492 = vadd.f32 %v3468, %v3476
    %v3493 = vadd.f32 %v3469, %v3477
    %v3494 = vadd.f32 %v3470, %v3478
    %v3495 = vadd.f32 %v3471, %v3479
    %v3496 = vadd.f32 %v3472, %v3480
    %v3497 = vstv %s2434
    %v3498 = vadd.f32 %v3489, %v3497
    %v3499 = vadd.f32 %v3490, %v3497
    %v3500 = vadd.f32 %v3491, %v3497
    %v3501 = vadd.f32 %v3492, %v3497
    %v3502 = vadd.f32 %v3493, %v3497
    %v3503 = vadd.f32 %v3494, %v3497
    %v3504 = vadd.f32 %v3495, %v3497
    %v3505 = vadd.f32 %v3496, %v3497
    %v3506 = vmul.f32 %v3498, 0.1
    %v3507 = vmul.f32 %v3499, 0.1
    %v3508 = vmul.f32 %v3500, 0.1
    %v3509 = vmul.f32 %v3501, 0.1
    %v3510 = vmul.f32 %v3502, 0.1
    %v3511 = vmul.f32 %v3503, 0.1
    %v3512 = vmul.f32 %v3504, 0.1
    %v3513 = vmul.f32 %v3505, 0.1
    %v3514 = vmax.f32 %v3498, %v3506
    %v3515 = vmax.f32 %v3499, %v3507
    %v3516 = vmax.f32 %v3500, %v3508
    %v3517 = vmax.f32 %v3501, %v3509
    %v3518 = vmax.f32 %v3502, %v3510
    %v3519 = vmax.f32 %v3503, %v3511
    %v3520 = vmax.f32 %v3504, %v3512
    %v3521 = vmax.f32 %v3505, %v3513
    %v3530 = vrot.slane %v3514, 4
    %v3531 = vrot.slane %v3515, 4
    %v3532 = vrot.slane %v3516, 4
    %v3533 = vrot.slane %v3517, 4
    %v3534 = vrot.slane %v3518, 4
    %v3535 = vrot.slane %v3519, 4
    %v3536 = vrot.slane %v3520, 4
    %v3537 = vrot.slane %v3521, 4
    %v3546 = vadd.f32 %v2057, %v3530
    %v3547 = vadd.f32 %v2059, %v3531
    %v3548 = vadd.f32 %v2180, %v3532
    %v3549 = vadd.f32 %v2182, %v3533
    %v3550 = vadd.f32 %v2303, %v3534
    %v3551 = vadd.f32 %v2305, %v3535
    %v3552 = vadd.f32 %v2426, %v3536
    %v3553 = vadd.f32 %v2428, %v3537
    %vm3554 = vcmask 1041408
    %v3555 = vsel %vm3554, %v3320, %v3433
    %v3556 = vsel %vm3554, %v3321, %v3434
    %v3557 = vsel %vm3554, %v3322, %v3435
    %v3558 = vsel %vm3554, %v3323, %v3436
    %v3559 = vsel %vm3554, %v3324, %v3437
    %v3560 = vsel %vm3554, %v3325, %v3438
    %v3561 = vsel %vm3554, %v3326, %v3439
    %v3562 = vsel %vm3554, %v3327, %v3440
    %v3563 = vsel %vm1915, %v3555, %v3546
    %v3564 = vsel %vm1915, %v3556, %v3547
    %v3565 = vsel %vm1915, %v3557, %v3548
    %v3566 = vsel %vm1915, %v3558, %v3549
    %v3567 = vsel %vm1915, %v3559, %v3550
    %v3568 = vsel %vm1915, %v3560, %v3551
    %v3569 = vsel %vm1915, %v3561, %v3552
    %v3570 = vsel %vm1915, %v3562, %v3553
    %vm3571 = vcmask 1045504
    %v3572 = vsel %vm3571, %v3563, 0.0
    %v3573 = vsel %vm3571, %v3564, 0.0
    %v3574 = vsel %vm3571, %v3565, 0.0
    %v3575 = vsel %vm3571, %v3566, 0.0
    %v3576 = vsel %vm3571, %v3567, 0.0
    %v3577 = vsel %vm3571, %v3568, 0.0
    %v3578 = vsel %vm3571, %v3569, 0.0
    %v3579 = vsel %vm3571, %v3570, 0.0
    %v3581 = vlaneseq
    %v3582 = vshrl.u32 %v3581, 7
    %v3583 = vsub.s32 0, %v3582
    %v3584 = vrot.slane %v90, %v3583
    %v3585 = vlaneseq
    %v3586 = vshrl.u32 %v3585, 7
    %v3587 = vsub.s32 1, %v3586
    %v3588 = vrot.slane %v90, %v3587
    %v3589 = vlaneseq
    %v3590 = vshrl.u32 %v3589, 7
    %v3591 = vsub.s32 2, %v3590
    %v3592 = vrot.slane %v90, %v3591
    %v3593 = vlaneseq
    %v3594 = vshrl.u32 %v3593, 7
    %v3595 = vsub.s32 3, %v3594
    %v3596 = vrot.slane %v90, %v3595
    %v3597 = vlaneseq
    %v3598 = vshrl.u32 %v3597, 7
    %v3599 = vsub.s32 4, %v3598
    %v3600 = vrot.slane %v90, %v3599
    %v3601 = vlaneseq
    %v3602 = vshrl.u32 %v3601, 7
    %v3603 = vsub.s32 5, %v3602
    %v3604 = vrot.slane %v90, %v3603
    %v3605 = vlaneseq
    %v3606 = vshrl.u32 %v3605, 7
    %v3607 = vsub.s32 6, %v3606
    %v3608 = vrot.slane %v90, %v3607
    %v3609 = vlaneseq
    %v3610 = vshrl.u32 %v3609, 7
    %v3611 = vsub.s32 7, %v3610
    %v3612 = vrot.slane %v90, %v3611
    %v3621 = vmul.f32 %v3572, %v3584
    %v3622 = vmul.f32 %v3573, %v3588
    %v3623 = vmul.f32 %v3574, %v3592
    %v3624 = vmul.f32 %v3575, %v3596
    %v3625 = vmul.f32 %v3576, %v3600
    %v3626 = vmul.f32 %v3577, %v3604
    %v3627 = vmul.f32 %v3578, %v3608
    %v3628 = vmul.f32 %v3579, %v3612
    %v3629 = vadd.f32 %v3621, %v3622
    %v3630 = vadd.f32 %v3629, %v3623
    %v3631 = vadd.f32 %v3630, %v3624
    %v3632 = vadd.f32 %v3631, %v3625
    %v3633 = vadd.f32 %v3632, %v3626
    %v3634 = vadd.f32 %v3633, %v3627
    %v3635 = vadd.f32 %v3634, %v3628
    %3636 = vadd.xlane.f32.xlu0 %v3635
    %v3637 = vpop.xlane.xlu0 %3636
    %v3638 = vmul.f32 %v3621, %v3621
    %v3639 = vmul.f32 %v3622, %v3622
    %v3640 = vmul.f32 %v3623, %v3623
    %v3641 = vmul.f32 %v3624, %v3624
    %v3642 = vmul.f32 %v3625, %v3625
    %v3643 = vmul.f32 %v3626, %v3626
    %v3644 = vmul.f32 %v3627, %v3627
    %v3645 = vmul.f32 %v3628, %v3628
    %v3646 = vadd.f32 %v3638, %v3639
    %v3647 = vadd.f32 %v3646, %v3640
    %v3648 = vadd.f32 %v3647, %v3641
    %v3649 = vadd.f32 %v3648, %v3642
    %v3650 = vadd.f32 %v3649, %v3643
    %v3651 = vadd.f32 %v3650, %v3644
    %v3652 = vadd.f32 %v3651, %v3645
    %3653 = vadd.xlane.f32.xlu0 %v3652
    %v3654 = vpop.xlane.xlu0 %3653
    %vm3655 = vcmask 1024
    %v3656 = vsel %vm3655, %v3637, 0.0
    %3657 = vadd.xlane.f32.xlu0 %v3656
    %v3658 = vpop.xlane.xlu0 %3657
    %v3659 = vrot.slane %v3658, 4
    %v3660 = vadd.f32 %v3658, %v3659
    %v3661 = vrot.slane %v3660, 2
    %v3662 = vadd.f32 %v3660, %v3661
    %v3663 = vrot.slane %v3662, 1
    %v3664 = vadd.f32 %v3662, %v3663
    %s3665 = vtos %v3664
    %v3666 = vsel %vm3655, %v3654, 0.0
    %3667 = vadd.xlane.f32.xlu0 %v3666
    %v3668 = vpop.xlane.xlu0 %3667
    %v3669 = vrot.slane %v3668, 4
    %v3670 = vadd.f32 %v3668, %v3669
    %v3671 = vrot.slane %v3670, 2
    %v3672 = vadd.f32 %v3670, %v3671
    %v3673 = vrot.slane %v3672, 1
    %v3674 = vadd.f32 %v3672, %v3673
    %s3675 = vtos %v3674
    %v3676 = vrcp.pop 1352.0
    %s3677 = vtos %v3676
    %s3678 = smul.f32 %s3665, %s3677
    %v3679 = vrcp.pop 1352.0
    %s3680 = vtos %v3679
    %s3681 = smul.f32 %s3675, %s3680
    %s3682 = smul.f32 %s3678, %s3678
    %s3683 = ssub.f32 %s3681, %s3682
    %s3684 = sadd.f32 %s3683, 1e-05
    %v3685 = vstv %s3684
    %v3686 = vrsqrt.pop %v3685
    %s3687 = vtos %v3686
    %s3688 = smul.f32 %s2435, %s3687
    %s3689 = smul.f32 %s3678, %s3688
    %s3690 = ssub.f32 %s2438, %s3689
    %v3691 = vstv %s3688
    %v3692 = vstv %s3690
    %v3694 = vrot.slane %v3637, 2
    %v3696 = vsel %vm3655, %v3694, 0.0
    %3697 = vadd.xlane.f32.xlu0 %v3696
    %v3698 = vpop.xlane.xlu0 %3697
    %v3699 = vrot.slane %v3698, 4
    %v3700 = vadd.f32 %v3698, %v3699
    %v3701 = vrot.slane %v3700, 2
    %v3702 = vadd.f32 %v3700, %v3701
    %v3703 = vrot.slane %v3702, 1
    %v3704 = vadd.f32 %v3702, %v3703
    %s3705 = vtos %v3704
    %v3707 = vrot.slane %v3654, 2
    %v3709 = vsel %vm3655, %v3707, 0.0
    %3710 = vadd.xlane.f32.xlu0 %v3709
    %v3711 = vpop.xlane.xlu0 %3710
    %v3712 = vrot.slane %v3711, 4
    %v3713 = vadd.f32 %v3711, %v3712
    %v3714 = vrot.slane %v3713, 2
    %v3715 = vadd.f32 %v3713, %v3714
    %v3716 = vrot.slane %v3715, 1
    %v3717 = vadd.f32 %v3715, %v3716
    %s3718 = vtos %v3717
    %v3719 = vrcp.pop 1352.0
    %s3720 = vtos %v3719
    %s3721 = smul.f32 %s3705, %s3720
    %v3722 = vrcp.pop 1352.0
    %s3723 = vtos %v3722
    %s3724 = smul.f32 %s3718, %s3723
    %s3725 = smul.f32 %s3721, %s3721
    %s3726 = ssub.f32 %s3724, %s3725
    %s3727 = sadd.f32 %s3726, 1e-05
    %v3728 = vstv %s3727
    %v3729 = vrsqrt.pop %v3728
    %s3730 = vtos %v3729
    %s3731 = smul.f32 %s2436, %s3730
    %s3732 = smul.f32 %s3721, %s3731
    %s3733 = ssub.f32 %s2439, %s3732
    %v3734 = vstv %s3731
    %v3735 = vstv %s3733
    %v3736 = vrot.slane %v3637, 4
    %v3738 = vsel %vm3655, %v3736, 0.0
    %3739 = vadd.xlane.f32.xlu0 %v3738
    %v3740 = vpop.xlane.xlu0 %3739
    %v3741 = vrot.slane %v3740, 4
    %v3742 = vadd.f32 %v3740, %v3741
    %v3743 = vrot.slane %v3742, 2
    %v3744 = vadd.f32 %v3742, %v3743
    %v3745 = vrot.slane %v3744, 1
    %v3746 = vadd.f32 %v3744, %v3745
    %s3747 = vtos %v3746
    %v3748 = vrot.slane %v3654, 4
    %v3750 = vsel %vm3655, %v3748, 0.0
    %3751 = vadd.xlane.f32.xlu0 %v3750
    %v3752 = vpop.xlane.xlu0 %3751
    %v3753 = vrot.slane %v3752, 4
    %v3754 = vadd.f32 %v3752, %v3753
    %v3755 = vrot.slane %v3754, 2
    %v3756 = vadd.f32 %v3754, %v3755
    %v3757 = vrot.slane %v3756, 1
    %v3758 = vadd.f32 %v3756, %v3757
    %s3759 = vtos %v3758
    %v3760 = vrcp.pop 1352.0
    %s3761 = vtos %v3760
    %s3762 = smul.f32 %s3747, %s3761
    %v3763 = vrcp.pop 1352.0
    %s3764 = vtos %v3763
    %s3765 = smul.f32 %s3759, %s3764
    %s3766 = smul.f32 %s3762, %s3762
    %s3767 = ssub.f32 %s3765, %s3766
    %s3768 = sadd.f32 %s3767, 1e-05
    %v3769 = vstv %s3768
    %v3770 = vrsqrt.pop %v3769
    %s3771 = vtos %v3770
    %s3772 = smul.f32 %s2437, %s3771
    %s3773 = smul.f32 %s3762, %s3772
    %s3774 = ssub.f32 %s2440, %s3773
    %v3775 = vstv %s3772
    %v3776 = vstv %s3774
    %v3777 = vsel %vm3554, %v3691, %v3734
    %v3778 = vsel %vm1915, %v3777, %v3775
    %v3779 = vsel %vm3571, %v3778, 0.0
    %v3780 = vsel %vm3554, %v3692, %v3735
    %v3781 = vsel %vm1915, %v3780, %v3776
    %v3782 = vsel %vm3571, %v3781, 0.0
    %3784 = vset.pattern.permute.xlu0 0
    %3785 = vperm.xlu0 %3784, %v3779
    %v3786 = vpop.permute.xlu0 %3785
    %v3788 = vmul.f32 %v3572, %v3786
    %v3789 = vmul.f32 %v3573, %v3786
    %v3790 = vmul.f32 %v3574, %v3786
    %v3791 = vmul.f32 %v3575, %v3786
    %v3792 = vmul.f32 %v3576, %v3786
    %v3793 = vmul.f32 %v3577, %v3786
    %v3794 = vmul.f32 %v3578, %v3786
    %v3795 = vmul.f32 %v3579, %v3786
    %3797 = vset.pattern.permute.xlu0 0
    %3798 = vperm.xlu0 %3797, %v3782
    %v3799 = vpop.permute.xlu0 %3798
    %v3801 = vadd.f32 %v3788, %v3799
    %v3802 = vadd.f32 %v3789, %v3799
    %v3803 = vadd.f32 %v3790, %v3799
    %v3804 = vadd.f32 %v3791, %v3799
    %v3805 = vadd.f32 %v3792, %v3799
    %v3806 = vadd.f32 %v3793, %v3799
    %v3807 = vadd.f32 %v3794, %v3799
    %v3808 = vadd.f32 %v3795, %v3799
    %v3809 = vmul.f32 %v3801, %v3584
    %v3810 = vmul.f32 %v3802, %v3588
    %v3811 = vmul.f32 %v3803, %v3592
    %v3812 = vmul.f32 %v3804, %v3596
    %v3813 = vmul.f32 %v3805, %v3600
    %v3814 = vmul.f32 %v3806, %v3604
    %v3815 = vmul.f32 %v3807, %v3608
    %v3816 = vmul.f32 %v3808, %v3612
    %s3817 = sld [smem:[#allocation8 + $0x80]]
    %s3818 = sld [smem:[#allocation8 + $0x81]]
    %s3819 = sld [smem:[#allocation8 + $0x82]]
    %s3820 = sld [smem:[#allocation9 + $0x80]]
    %s3821 = sld [smem:[#allocation9 + $0x81]]
    %s3822 = sld [smem:[#allocation9 + $0x82]]
    %s3823 = sld [smem:[#allocation11 + $0x80]]
    %s3824 = sld [smem:[#allocation11 + $0x81]]
    %s3825 = sld [smem:[#allocation11 + $0x82]]
    %3826 = vrot.lane.b32.xlu0 %v3809, 31
    %v3827 = vpop.permute.xlu0 %3826
    %3828 = vrot.lane.b32.xlu0 %v3810, 31
    %v3829 = vpop.permute.xlu0 %3828
    %3830 = vrot.lane.b32.xlu0 %v3811, 31
    %v3831 = vpop.permute.xlu0 %3830
    %3832 = vrot.lane.b32.xlu0 %v3812, 31
    %v3833 = vpop.permute.xlu0 %3832
    %3834 = vrot.lane.b32.xlu0 %v3813, 31
    %v3835 = vpop.permute.xlu0 %3834
    %3836 = vrot.lane.b32.xlu0 %v3814, 31
    %v3837 = vpop.permute.xlu0 %3836
    %3838 = vrot.lane.b32.xlu0 %v3815, 31
    %v3839 = vpop.permute.xlu0 %3838
    %3840 = vrot.lane.b32.xlu0 %v3816, 31
    %v3841 = vpop.permute.xlu0 %3840
    %v3842 = vsel %vm2459, %v3839, %v3841
    %v3843 = vsel %vm2459, %v3837, %v3839
    %v3844 = vsel %vm2459, %v3835, %v3837
    %v3845 = vsel %vm2459, %v3833, %v3835
    %v3846 = vsel %vm2459, %v3831, %v3833
    %v3847 = vsel %vm2459, %v3829, %v3831
    %v3848 = vsel %vm2459, %v3827, %v3829
    %v3849 = vsel %vm2459, %v3841, %v3827
    %s3850 = scalar_lea.vmem %s3, 216
    %v3851 = vld [vmem:[%s3850] sm:$0xff]
    %3853 = vset.pattern.permute.xlu0 0
    %3854 = vperm.xlu0 %3853, %v3851
    %v3855 = vpop.permute.xlu0 %3854
    %v3857 = vmul.f32 %v3855, %v3849
    %v3858 = vmul.f32 %v3855, %v3848
    %v3859 = vmul.f32 %v3855, %v3847
    %v3860 = vmul.f32 %v3855, %v3846
    %v3861 = vmul.f32 %v3855, %v3845
    %v3862 = vmul.f32 %v3855, %v3844
    %v3863 = vmul.f32 %v3855, %v3843
    %v3864 = vmul.f32 %v3855, %v3842
    %s3865 = scalar_lea.vmem %s3, 224
    %v3866 = vld [vmem:[%s3865] sm:$0xff]
    %3868 = vset.pattern.permute.xlu0 0
    %3869 = vperm.xlu0 %3868, %v3866
    %v3870 = vpop.permute.xlu0 %3869
    %v3872 = vmul.f32 %v3870, %v3849
    %v3873 = vmul.f32 %v3870, %v3848
    %v3874 = vmul.f32 %v3870, %v3847
    %v3875 = vmul.f32 %v3870, %v3846
    %v3876 = vmul.f32 %v3870, %v3845
    %v3877 = vmul.f32 %v3870, %v3844
    %v3878 = vmul.f32 %v3870, %v3843
    %v3879 = vmul.f32 %v3870, %v3842
    %s3880 = scalar_lea.vmem %s3, 232
    %v3881 = vld [vmem:[%s3880] sm:$0xff]
    %3883 = vset.pattern.permute.xlu0 0
    %3884 = vperm.xlu0 %3883, %v3881
    %v3885 = vpop.permute.xlu0 %3884
    %v3887 = vmul.f32 %v3885, %v3849
    %v3888 = vmul.f32 %v3885, %v3848
    %v3889 = vmul.f32 %v3885, %v3847
    %v3890 = vmul.f32 %v3885, %v3846
    %v3891 = vmul.f32 %v3885, %v3845
    %v3892 = vmul.f32 %v3885, %v3844
    %v3893 = vmul.f32 %v3885, %v3843
    %v3894 = vmul.f32 %v3885, %v3842
    %3895 = vrot.lane.b32.xlu0 %v3809, 30
    %v3896 = vpop.permute.xlu0 %3895
    %3897 = vrot.lane.b32.xlu0 %v3810, 30
    %v3898 = vpop.permute.xlu0 %3897
    %3899 = vrot.lane.b32.xlu0 %v3811, 30
    %v3900 = vpop.permute.xlu0 %3899
    %3901 = vrot.lane.b32.xlu0 %v3812, 30
    %v3902 = vpop.permute.xlu0 %3901
    %3903 = vrot.lane.b32.xlu0 %v3813, 30
    %v3904 = vpop.permute.xlu0 %3903
    %3905 = vrot.lane.b32.xlu0 %v3814, 30
    %v3906 = vpop.permute.xlu0 %3905
    %3907 = vrot.lane.b32.xlu0 %v3815, 30
    %v3908 = vpop.permute.xlu0 %3907
    %3909 = vrot.lane.b32.xlu0 %v3816, 30
    %v3910 = vpop.permute.xlu0 %3909
    %v3911 = vsel %vm2528, %v3908, %v3910
    %v3912 = vsel %vm2528, %v3906, %v3908
    %v3913 = vsel %vm2528, %v3904, %v3906
    %v3914 = vsel %vm2528, %v3902, %v3904
    %v3915 = vsel %vm2528, %v3900, %v3902
    %v3916 = vsel %vm2528, %v3898, %v3900
    %v3917 = vsel %vm2528, %v3896, %v3898
    %v3918 = vsel %vm2528, %v3910, %v3896
    %s3919 = scalar_lea.vmem %s3, 240
    %v3920 = vld [vmem:[%s3919] sm:$0xff]
    %3922 = vset.pattern.permute.xlu0 0
    %3923 = vperm.xlu0 %3922, %v3920
    %v3924 = vpop.permute.xlu0 %3923
    %v3926 = vmul.f32 %v3924, %v3918
    %v3927 = vmul.f32 %v3924, %v3917
    %v3928 = vmul.f32 %v3924, %v3916
    %v3929 = vmul.f32 %v3924, %v3915
    %v3930 = vmul.f32 %v3924, %v3914
    %v3931 = vmul.f32 %v3924, %v3913
    %v3932 = vmul.f32 %v3924, %v3912
    %v3933 = vmul.f32 %v3924, %v3911
    %v3934 = vadd.f32 %v3857, %v3926
    %v3935 = vadd.f32 %v3858, %v3927
    %v3936 = vadd.f32 %v3859, %v3928
    %v3937 = vadd.f32 %v3860, %v3929
    %v3938 = vadd.f32 %v3861, %v3930
    %v3939 = vadd.f32 %v3862, %v3931
    %v3940 = vadd.f32 %v3863, %v3932
    %v3941 = vadd.f32 %v3864, %v3933
    %s3942 = scalar_lea.vmem %s3, 248
    %v3943 = vld [vmem:[%s3942] sm:$0xff]
    %3945 = vset.pattern.permute.xlu0 0
    %3946 = vperm.xlu0 %3945, %v3943
    %v3947 = vpop.permute.xlu0 %3946
    %v3949 = vmul.f32 %v3947, %v3918
    %v3950 = vmul.f32 %v3947, %v3917
    %v3951 = vmul.f32 %v3947, %v3916
    %v3952 = vmul.f32 %v3947, %v3915
    %v3953 = vmul.f32 %v3947, %v3914
    %v3954 = vmul.f32 %v3947, %v3913
    %v3955 = vmul.f32 %v3947, %v3912
    %v3956 = vmul.f32 %v3947, %v3911
    %v3957 = vadd.f32 %v3872, %v3949
    %v3958 = vadd.f32 %v3873, %v3950
    %v3959 = vadd.f32 %v3874, %v3951
    %v3960 = vadd.f32 %v3875, %v3952
    %v3961 = vadd.f32 %v3876, %v3953
    %v3962 = vadd.f32 %v3877, %v3954
    %v3963 = vadd.f32 %v3878, %v3955
    %v3964 = vadd.f32 %v3879, %v3956
    %s3965 = scalar_lea.vmem %s3, 256
    %v3966 = vld [vmem:[%s3965] sm:$0xff]
    %3968 = vset.pattern.permute.xlu0 0
    %3969 = vperm.xlu0 %3968, %v3966
    %v3970 = vpop.permute.xlu0 %3969
    %v3972 = vmul.f32 %v3970, %v3918
    %v3973 = vmul.f32 %v3970, %v3917
    %v3974 = vmul.f32 %v3970, %v3916
    %v3975 = vmul.f32 %v3970, %v3915
    %v3976 = vmul.f32 %v3970, %v3914
    %v3977 = vmul.f32 %v3970, %v3913
    %v3978 = vmul.f32 %v3970, %v3912
    %v3979 = vmul.f32 %v3970, %v3911
    %v3980 = vadd.f32 %v3887, %v3972
    %v3981 = vadd.f32 %v3888, %v3973
    %v3982 = vadd.f32 %v3889, %v3974
    %v3983 = vadd.f32 %v3890, %v3975
    %v3984 = vadd.f32 %v3891, %v3976
    %v3985 = vadd.f32 %v3892, %v3977
    %v3986 = vadd.f32 %v3893, %v3978
    %v3987 = vadd.f32 %v3894, %v3979
    %3988 = vrot.lane.b32.xlu0 %v3809, 29
    %v3989 = vpop.permute.xlu0 %3988
    %3990 = vrot.lane.b32.xlu0 %v3810, 29
    %v3991 = vpop.permute.xlu0 %3990
    %3992 = vrot.lane.b32.xlu0 %v3811, 29
    %v3993 = vpop.permute.xlu0 %3992
    %3994 = vrot.lane.b32.xlu0 %v3812, 29
    %v3995 = vpop.permute.xlu0 %3994
    %3996 = vrot.lane.b32.xlu0 %v3813, 29
    %v3997 = vpop.permute.xlu0 %3996
    %3998 = vrot.lane.b32.xlu0 %v3814, 29
    %v3999 = vpop.permute.xlu0 %3998
    %4000 = vrot.lane.b32.xlu0 %v3815, 29
    %v4001 = vpop.permute.xlu0 %4000
    %4002 = vrot.lane.b32.xlu0 %v3816, 29
    %v4003 = vpop.permute.xlu0 %4002
    %v4004 = vsel %vm2622, %v4001, %v4003
    %v4005 = vsel %vm2622, %v3999, %v4001
    %v4006 = vsel %vm2622, %v3997, %v3999
    %v4007 = vsel %vm2622, %v3995, %v3997
    %v4008 = vsel %vm2622, %v3993, %v3995
    %v4009 = vsel %vm2622, %v3991, %v3993
    %v4010 = vsel %vm2622, %v3989, %v3991
    %v4011 = vsel %vm2622, %v4003, %v3989
    %s4012 = scalar_lea.vmem %s3, 264
    %v4013 = vld [vmem:[%s4012] sm:$0xff]
    %4015 = vset.pattern.permute.xlu0 0
    %4016 = vperm.xlu0 %4015, %v4013
    %v4017 = vpop.permute.xlu0 %4016
    %v4019 = vmul.f32 %v4017, %v4011
    %v4020 = vmul.f32 %v4017, %v4010
    %v4021 = vmul.f32 %v4017, %v4009
    %v4022 = vmul.f32 %v4017, %v4008
    %v4023 = vmul.f32 %v4017, %v4007
    %v4024 = vmul.f32 %v4017, %v4006
    %v4025 = vmul.f32 %v4017, %v4005
    %v4026 = vmul.f32 %v4017, %v4004
    %v4027 = vadd.f32 %v3934, %v4019
    %v4028 = vadd.f32 %v3935, %v4020
    %v4029 = vadd.f32 %v3936, %v4021
    %v4030 = vadd.f32 %v3937, %v4022
    %v4031 = vadd.f32 %v3938, %v4023
    %v4032 = vadd.f32 %v3939, %v4024
    %v4033 = vadd.f32 %v3940, %v4025
    %v4034 = vadd.f32 %v3941, %v4026
    %s4035 = scalar_lea.vmem %s3, 272
    %v4036 = vld [vmem:[%s4035] sm:$0xff]
    %4038 = vset.pattern.permute.xlu0 0
    %4039 = vperm.xlu0 %4038, %v4036
    %v4040 = vpop.permute.xlu0 %4039
    %v4042 = vmul.f32 %v4040, %v4011
    %v4043 = vmul.f32 %v4040, %v4010
    %v4044 = vmul.f32 %v4040, %v4009
    %v4045 = vmul.f32 %v4040, %v4008
    %v4046 = vmul.f32 %v4040, %v4007
    %v4047 = vmul.f32 %v4040, %v4006
    %v4048 = vmul.f32 %v4040, %v4005
    %v4049 = vmul.f32 %v4040, %v4004
    %v4050 = vadd.f32 %v3957, %v4042
    %v4051 = vadd.f32 %v3958, %v4043
    %v4052 = vadd.f32 %v3959, %v4044
    %v4053 = vadd.f32 %v3960, %v4045
    %v4054 = vadd.f32 %v3961, %v4046
    %v4055 = vadd.f32 %v3962, %v4047
    %v4056 = vadd.f32 %v3963, %v4048
    %v4057 = vadd.f32 %v3964, %v4049
    %s4058 = scalar_lea.vmem %s3, 280
    %v4059 = vld [vmem:[%s4058] sm:$0xff]
    %4061 = vset.pattern.permute.xlu0 0
    %4062 = vperm.xlu0 %4061, %v4059
    %v4063 = vpop.permute.xlu0 %4062
    %v4065 = vmul.f32 %v4063, %v4011
    %v4066 = vmul.f32 %v4063, %v4010
    %v4067 = vmul.f32 %v4063, %v4009
    %v4068 = vmul.f32 %v4063, %v4008
    %v4069 = vmul.f32 %v4063, %v4007
    %v4070 = vmul.f32 %v4063, %v4006
    %v4071 = vmul.f32 %v4063, %v4005
    %v4072 = vmul.f32 %v4063, %v4004
    %v4073 = vadd.f32 %v3980, %v4065
    %v4074 = vadd.f32 %v3981, %v4066
    %v4075 = vadd.f32 %v3982, %v4067
    %v4076 = vadd.f32 %v3983, %v4068
    %v4077 = vadd.f32 %v3984, %v4069
    %v4078 = vadd.f32 %v3985, %v4070
    %v4079 = vadd.f32 %v3986, %v4071
    %v4080 = vadd.f32 %v3987, %v4072
    %4081 = vrot.lane.b32.xlu0 %v3809, 1
    %v4082 = vpop.permute.xlu0 %4081
    %4083 = vrot.lane.b32.xlu0 %v3810, 1
    %v4084 = vpop.permute.xlu0 %4083
    %4085 = vrot.lane.b32.xlu0 %v3811, 1
    %v4086 = vpop.permute.xlu0 %4085
    %4087 = vrot.lane.b32.xlu0 %v3812, 1
    %v4088 = vpop.permute.xlu0 %4087
    %4089 = vrot.lane.b32.xlu0 %v3813, 1
    %v4090 = vpop.permute.xlu0 %4089
    %4091 = vrot.lane.b32.xlu0 %v3814, 1
    %v4092 = vpop.permute.xlu0 %4091
    %4093 = vrot.lane.b32.xlu0 %v3815, 1
    %v4094 = vpop.permute.xlu0 %4093
    %4095 = vrot.lane.b32.xlu0 %v3816, 1
    %v4096 = vpop.permute.xlu0 %4095
    %v4097 = vsel %vm2716, %v4094, %v4096
    %v4098 = vsel %vm2716, %v4092, %v4094
    %v4099 = vsel %vm2716, %v4090, %v4092
    %v4100 = vsel %vm2716, %v4088, %v4090
    %v4101 = vsel %vm2716, %v4086, %v4088
    %v4102 = vsel %vm2716, %v4084, %v4086
    %v4103 = vsel %vm2716, %v4082, %v4084
    %v4104 = vsel %vm2716, %v4096, %v4082
    %s4105 = scalar_lea.vmem %s3, 288
    %v4106 = vld [vmem:[%s4105] sm:$0xff]
    %4108 = vset.pattern.permute.xlu0 0
    %4109 = vperm.xlu0 %4108, %v4106
    %v4110 = vpop.permute.xlu0 %4109
    %v4112 = vmul.f32 %v4110, %v4104
    %v4113 = vmul.f32 %v4110, %v4103
    %v4114 = vmul.f32 %v4110, %v4102
    %v4115 = vmul.f32 %v4110, %v4101
    %v4116 = vmul.f32 %v4110, %v4100
    %v4117 = vmul.f32 %v4110, %v4099
    %v4118 = vmul.f32 %v4110, %v4098
    %v4119 = vmul.f32 %v4110, %v4097
    %v4120 = vadd.f32 %v4027, %v4112
    %v4121 = vadd.f32 %v4028, %v4113
    %v4122 = vadd.f32 %v4029, %v4114
    %v4123 = vadd.f32 %v4030, %v4115
    %v4124 = vadd.f32 %v4031, %v4116
    %v4125 = vadd.f32 %v4032, %v4117
    %v4126 = vadd.f32 %v4033, %v4118
    %v4127 = vadd.f32 %v4034, %v4119
    %s4128 = scalar_lea.vmem %s3, 296
    %v4129 = vld [vmem:[%s4128] sm:$0xff]
    %4131 = vset.pattern.permute.xlu0 0
    %4132 = vperm.xlu0 %4131, %v4129
    %v4133 = vpop.permute.xlu0 %4132
    %v4135 = vmul.f32 %v4133, %v4104
    %v4136 = vmul.f32 %v4133, %v4103
    %v4137 = vmul.f32 %v4133, %v4102
    %v4138 = vmul.f32 %v4133, %v4101
    %v4139 = vmul.f32 %v4133, %v4100
    %v4140 = vmul.f32 %v4133, %v4099
    %v4141 = vmul.f32 %v4133, %v4098
    %v4142 = vmul.f32 %v4133, %v4097
    %v4143 = vadd.f32 %v4050, %v4135
    %v4144 = vadd.f32 %v4051, %v4136
    %v4145 = vadd.f32 %v4052, %v4137
    %v4146 = vadd.f32 %v4053, %v4138
    %v4147 = vadd.f32 %v4054, %v4139
    %v4148 = vadd.f32 %v4055, %v4140
    %v4149 = vadd.f32 %v4056, %v4141
    %v4150 = vadd.f32 %v4057, %v4142
    %s4151 = scalar_lea.vmem %s3, 304
    %v4152 = vld [vmem:[%s4151] sm:$0xff]
    %4154 = vset.pattern.permute.xlu0 0
    %4155 = vperm.xlu0 %4154, %v4152
    %v4156 = vpop.permute.xlu0 %4155
    %v4158 = vmul.f32 %v4156, %v4104
    %v4159 = vmul.f32 %v4156, %v4103
    %v4160 = vmul.f32 %v4156, %v4102
    %v4161 = vmul.f32 %v4156, %v4101
    %v4162 = vmul.f32 %v4156, %v4100
    %v4163 = vmul.f32 %v4156, %v4099
    %v4164 = vmul.f32 %v4156, %v4098
    %v4165 = vmul.f32 %v4156, %v4097
    %v4166 = vadd.f32 %v4073, %v4158
    %v4167 = vadd.f32 %v4074, %v4159
    %v4168 = vadd.f32 %v4075, %v4160
    %v4169 = vadd.f32 %v4076, %v4161
    %v4170 = vadd.f32 %v4077, %v4162
    %v4171 = vadd.f32 %v4078, %v4163
    %v4172 = vadd.f32 %v4079, %v4164
    %v4173 = vadd.f32 %v4080, %v4165
    %s4174 = scalar_lea.vmem %s3, 312
    %v4175 = vld [vmem:[%s4174] sm:$0xff]
    %4177 = vset.pattern.permute.xlu0 0
    %4178 = vperm.xlu0 %4177, %v4175
    %v4179 = vpop.permute.xlu0 %4178
    %v4181 = vmul.f32 %v4179, %v3809
    %v4182 = vmul.f32 %v4179, %v3810
    %v4183 = vmul.f32 %v4179, %v3811
    %v4184 = vmul.f32 %v4179, %v3812
    %v4185 = vmul.f32 %v4179, %v3813
    %v4186 = vmul.f32 %v4179, %v3814
    %v4187 = vmul.f32 %v4179, %v3815
    %v4188 = vmul.f32 %v4179, %v3816
    %v4189 = vadd.f32 %v4120, %v4181
    %v4190 = vadd.f32 %v4121, %v4182
    %v4191 = vadd.f32 %v4122, %v4183
    %v4192 = vadd.f32 %v4123, %v4184
    %v4193 = vadd.f32 %v4124, %v4185
    %v4194 = vadd.f32 %v4125, %v4186
    %v4195 = vadd.f32 %v4126, %v4187
    %v4196 = vadd.f32 %v4127, %v4188
    %s4197 = scalar_lea.vmem %s3, 320
    %v4198 = vld [vmem:[%s4197] sm:$0xff]
    %4200 = vset.pattern.permute.xlu0 0
    %4201 = vperm.xlu0 %4200, %v4198
    %v4202 = vpop.permute.xlu0 %4201
    %v4204 = vmul.f32 %v4202, %v3809
    %v4205 = vmul.f32 %v4202, %v3810
    %v4206 = vmul.f32 %v4202, %v3811
    %v4207 = vmul.f32 %v4202, %v3812
    %v4208 = vmul.f32 %v4202, %v3813
    %v4209 = vmul.f32 %v4202, %v3814
    %v4210 = vmul.f32 %v4202, %v3815
    %v4211 = vmul.f32 %v4202, %v3816
    %v4212 = vadd.f32 %v4143, %v4204
    %v4213 = vadd.f32 %v4144, %v4205
    %v4214 = vadd.f32 %v4145, %v4206
    %v4215 = vadd.f32 %v4146, %v4207
    %v4216 = vadd.f32 %v4147, %v4208
    %v4217 = vadd.f32 %v4148, %v4209
    %v4218 = vadd.f32 %v4149, %v4210
    %v4219 = vadd.f32 %v4150, %v4211
    %s4220 = scalar_lea.vmem %s3, 328
    %v4221 = vld [vmem:[%s4220] sm:$0xff]
    %4223 = vset.pattern.permute.xlu0 0
    %4224 = vperm.xlu0 %4223, %v4221
    %v4225 = vpop.permute.xlu0 %4224
    %v4227 = vmul.f32 %v4225, %v3809
    %v4228 = vmul.f32 %v4225, %v3810
    %v4229 = vmul.f32 %v4225, %v3811
    %v4230 = vmul.f32 %v4225, %v3812
    %v4231 = vmul.f32 %v4225, %v3813
    %v4232 = vmul.f32 %v4225, %v3814
    %v4233 = vmul.f32 %v4225, %v3815
    %v4234 = vmul.f32 %v4225, %v3816
    %v4235 = vadd.f32 %v4166, %v4227
    %v4236 = vadd.f32 %v4167, %v4228
    %v4237 = vadd.f32 %v4168, %v4229
    %v4238 = vadd.f32 %v4169, %v4230
    %v4239 = vadd.f32 %v4170, %v4231
    %v4240 = vadd.f32 %v4171, %v4232
    %v4241 = vadd.f32 %v4172, %v4233
    %v4242 = vadd.f32 %v4173, %v4234
    %4243 = vrot.lane.b32.xlu0 %v3809, 127
    %v4244 = vpop.permute.xlu0 %4243
    %4245 = vrot.lane.b32.xlu0 %v3810, 127
    %v4246 = vpop.permute.xlu0 %4245
    %4247 = vrot.lane.b32.xlu0 %v3811, 127
    %v4248 = vpop.permute.xlu0 %4247
    %4249 = vrot.lane.b32.xlu0 %v3812, 127
    %v4250 = vpop.permute.xlu0 %4249
    %4251 = vrot.lane.b32.xlu0 %v3813, 127
    %v4252 = vpop.permute.xlu0 %4251
    %4253 = vrot.lane.b32.xlu0 %v3814, 127
    %v4254 = vpop.permute.xlu0 %4253
    %4255 = vrot.lane.b32.xlu0 %v3815, 127
    %v4256 = vpop.permute.xlu0 %4255
    %4257 = vrot.lane.b32.xlu0 %v3816, 127
    %v4258 = vpop.permute.xlu0 %4257
    %v4259 = vsel %vm2879, %v4256, %v4258
    %v4260 = vsel %vm2879, %v4254, %v4256
    %v4261 = vsel %vm2879, %v4252, %v4254
    %v4262 = vsel %vm2879, %v4250, %v4252
    %v4263 = vsel %vm2879, %v4248, %v4250
    %v4264 = vsel %vm2879, %v4246, %v4248
    %v4265 = vsel %vm2879, %v4244, %v4246
    %v4266 = vsel %vm2879, %v4258, %v4244
    %s4267 = scalar_lea.vmem %s3, 336
    %v4268 = vld [vmem:[%s4267] sm:$0xff]
    %4270 = vset.pattern.permute.xlu0 0
    %4271 = vperm.xlu0 %4270, %v4268
    %v4272 = vpop.permute.xlu0 %4271
    %v4274 = vmul.f32 %v4272, %v4265
    %v4275 = vmul.f32 %v4272, %v4264
    %v4276 = vmul.f32 %v4272, %v4263
    %v4277 = vmul.f32 %v4272, %v4262
    %v4278 = vmul.f32 %v4272, %v4261
    %v4279 = vmul.f32 %v4272, %v4260
    %v4280 = vmul.f32 %v4272, %v4259
    %v4281 = vmul.f32 %v4272, %v4266
    %v4282 = vadd.f32 %v4189, %v4274
    %v4283 = vadd.f32 %v4190, %v4275
    %v4284 = vadd.f32 %v4191, %v4276
    %v4285 = vadd.f32 %v4192, %v4277
    %v4286 = vadd.f32 %v4193, %v4278
    %v4287 = vadd.f32 %v4194, %v4279
    %v4288 = vadd.f32 %v4195, %v4280
    %v4289 = vadd.f32 %v4196, %v4281
    %s4290 = scalar_lea.vmem %s3, 344
    %v4291 = vld [vmem:[%s4290] sm:$0xff]
    %4293 = vset.pattern.permute.xlu0 0
    %4294 = vperm.xlu0 %4293, %v4291
    %v4295 = vpop.permute.xlu0 %4294
    %v4297 = vmul.f32 %v4295, %v4265
    %v4298 = vmul.f32 %v4295, %v4264
    %v4299 = vmul.f32 %v4295, %v4263
    %v4300 = vmul.f32 %v4295, %v4262
    %v4301 = vmul.f32 %v4295, %v4261
    %v4302 = vmul.f32 %v4295, %v4260
    %v4303 = vmul.f32 %v4295, %v4259
    %v4304 = vmul.f32 %v4295, %v4266
    %v4305 = vadd.f32 %v4212, %v4297
    %v4306 = vadd.f32 %v4213, %v4298
    %v4307 = vadd.f32 %v4214, %v4299
    %v4308 = vadd.f32 %v4215, %v4300
    %v4309 = vadd.f32 %v4216, %v4301
    %v4310 = vadd.f32 %v4217, %v4302
    %v4311 = vadd.f32 %v4218, %v4303
    %v4312 = vadd.f32 %v4219, %v4304
    %s4313 = scalar_lea.vmem %s3, 352
    %v4314 = vld [vmem:[%s4313] sm:$0xff]
    %4316 = vset.pattern.permute.xlu0 0
    %4317 = vperm.xlu0 %4316, %v4314
    %v4318 = vpop.permute.xlu0 %4317
    %v4320 = vmul.f32 %v4318, %v4265
    %v4321 = vmul.f32 %v4318, %v4264
    %v4322 = vmul.f32 %v4318, %v4263
    %v4323 = vmul.f32 %v4318, %v4262
    %v4324 = vmul.f32 %v4318, %v4261
    %v4325 = vmul.f32 %v4318, %v4260
    %v4326 = vmul.f32 %v4318, %v4259
    %v4327 = vmul.f32 %v4318, %v4266
    %v4328 = vadd.f32 %v4235, %v4320
    %v4329 = vadd.f32 %v4236, %v4321
    %v4330 = vadd.f32 %v4237, %v4322
    %v4331 = vadd.f32 %v4238, %v4323
    %v4332 = vadd.f32 %v4239, %v4324
    %v4333 = vadd.f32 %v4240, %v4325
    %v4334 = vadd.f32 %v4241, %v4326
    %v4335 = vadd.f32 %v4242, %v4327
    %4336 = vrot.lane.b32.xlu0 %v3809, 99
    %v4337 = vpop.permute.xlu0 %4336
    %4338 = vrot.lane.b32.xlu0 %v3810, 99
    %v4339 = vpop.permute.xlu0 %4338
    %4340 = vrot.lane.b32.xlu0 %v3811, 99
    %v4341 = vpop.permute.xlu0 %4340
    %4342 = vrot.lane.b32.xlu0 %v3812, 99
    %v4343 = vpop.permute.xlu0 %4342
    %4344 = vrot.lane.b32.xlu0 %v3813, 99
    %v4345 = vpop.permute.xlu0 %4344
    %4346 = vrot.lane.b32.xlu0 %v3814, 99
    %v4347 = vpop.permute.xlu0 %4346
    %4348 = vrot.lane.b32.xlu0 %v3815, 99
    %v4349 = vpop.permute.xlu0 %4348
    %4350 = vrot.lane.b32.xlu0 %v3816, 99
    %v4351 = vpop.permute.xlu0 %4350
    %v4352 = vsel %vm2973, %v4349, %v4351
    %v4353 = vsel %vm2973, %v4347, %v4349
    %v4354 = vsel %vm2973, %v4345, %v4347
    %v4355 = vsel %vm2973, %v4343, %v4345
    %v4356 = vsel %vm2973, %v4341, %v4343
    %v4357 = vsel %vm2973, %v4339, %v4341
    %v4358 = vsel %vm2973, %v4337, %v4339
    %v4359 = vsel %vm2973, %v4351, %v4337
    %s4360 = scalar_lea.vmem %s3, 360
    %v4361 = vld [vmem:[%s4360] sm:$0xff]
    %4363 = vset.pattern.permute.xlu0 0
    %4364 = vperm.xlu0 %4363, %v4361
    %v4365 = vpop.permute.xlu0 %4364
    %v4367 = vmul.f32 %v4365, %v4358
    %v4368 = vmul.f32 %v4365, %v4357
    %v4369 = vmul.f32 %v4365, %v4356
    %v4370 = vmul.f32 %v4365, %v4355
    %v4371 = vmul.f32 %v4365, %v4354
    %v4372 = vmul.f32 %v4365, %v4353
    %v4373 = vmul.f32 %v4365, %v4352
    %v4374 = vmul.f32 %v4365, %v4359
    %v4375 = vadd.f32 %v4282, %v4367
    %v4376 = vadd.f32 %v4283, %v4368
    %v4377 = vadd.f32 %v4284, %v4369
    %v4378 = vadd.f32 %v4285, %v4370
    %v4379 = vadd.f32 %v4286, %v4371
    %v4380 = vadd.f32 %v4287, %v4372
    %v4381 = vadd.f32 %v4288, %v4373
    %v4382 = vadd.f32 %v4289, %v4374
    %s4383 = scalar_lea.vmem %s3, 368
    %v4384 = vld [vmem:[%s4383] sm:$0xff]
    %4386 = vset.pattern.permute.xlu0 0
    %4387 = vperm.xlu0 %4386, %v4384
    %v4388 = vpop.permute.xlu0 %4387
    %v4390 = vmul.f32 %v4388, %v4358
    %v4391 = vmul.f32 %v4388, %v4357
    %v4392 = vmul.f32 %v4388, %v4356
    %v4393 = vmul.f32 %v4388, %v4355
    %v4394 = vmul.f32 %v4388, %v4354
    %v4395 = vmul.f32 %v4388, %v4353
    %v4396 = vmul.f32 %v4388, %v4352
    %v4397 = vmul.f32 %v4388, %v4359
    %v4398 = vadd.f32 %v4305, %v4390
    %v4399 = vadd.f32 %v4306, %v4391
    %v4400 = vadd.f32 %v4307, %v4392
    %v4401 = vadd.f32 %v4308, %v4393
    %v4402 = vadd.f32 %v4309, %v4394
    %v4403 = vadd.f32 %v4310, %v4395
    %v4404 = vadd.f32 %v4311, %v4396
    %v4405 = vadd.f32 %v4312, %v4397
    %s4406 = scalar_lea.vmem %s3, 376
    %v4407 = vld [vmem:[%s4406] sm:$0xff]
    %4409 = vset.pattern.permute.xlu0 0
    %4410 = vperm.xlu0 %4409, %v4407
    %v4411 = vpop.permute.xlu0 %4410
    %v4413 = vmul.f32 %v4411, %v4358
    %v4414 = vmul.f32 %v4411, %v4357
    %v4415 = vmul.f32 %v4411, %v4356
    %v4416 = vmul.f32 %v4411, %v4355
    %v4417 = vmul.f32 %v4411, %v4354
    %v4418 = vmul.f32 %v4411, %v4353
    %v4419 = vmul.f32 %v4411, %v4352
    %v4420 = vmul.f32 %v4411, %v4359
    %v4421 = vadd.f32 %v4328, %v4413
    %v4422 = vadd.f32 %v4329, %v4414
    %v4423 = vadd.f32 %v4330, %v4415
    %v4424 = vadd.f32 %v4331, %v4416
    %v4425 = vadd.f32 %v4332, %v4417
    %v4426 = vadd.f32 %v4333, %v4418
    %v4427 = vadd.f32 %v4334, %v4419
    %v4428 = vadd.f32 %v4335, %v4420
    %4429 = vrot.lane.b32.xlu0 %v3809, 98
    %v4430 = vpop.permute.xlu0 %4429
    %4431 = vrot.lane.b32.xlu0 %v3810, 98
    %v4432 = vpop.permute.xlu0 %4431
    %4433 = vrot.lane.b32.xlu0 %v3811, 98
    %v4434 = vpop.permute.xlu0 %4433
    %4435 = vrot.lane.b32.xlu0 %v3812, 98
    %v4436 = vpop.permute.xlu0 %4435
    %4437 = vrot.lane.b32.xlu0 %v3813, 98
    %v4438 = vpop.permute.xlu0 %4437
    %4439 = vrot.lane.b32.xlu0 %v3814, 98
    %v4440 = vpop.permute.xlu0 %4439
    %4441 = vrot.lane.b32.xlu0 %v3815, 98
    %v4442 = vpop.permute.xlu0 %4441
    %4443 = vrot.lane.b32.xlu0 %v3816, 98
    %v4444 = vpop.permute.xlu0 %4443
    %v4445 = vsel %vm3067, %v4442, %v4444
    %v4446 = vsel %vm3067, %v4440, %v4442
    %v4447 = vsel %vm3067, %v4438, %v4440
    %v4448 = vsel %vm3067, %v4436, %v4438
    %v4449 = vsel %vm3067, %v4434, %v4436
    %v4450 = vsel %vm3067, %v4432, %v4434
    %v4451 = vsel %vm3067, %v4430, %v4432
    %v4452 = vsel %vm3067, %v4444, %v4430
    %s4453 = scalar_lea.vmem %s3, 384
    %v4454 = vld [vmem:[%s4453] sm:$0xff]
    %4456 = vset.pattern.permute.xlu0 0
    %4457 = vperm.xlu0 %4456, %v4454
    %v4458 = vpop.permute.xlu0 %4457
    %v4460 = vmul.f32 %v4458, %v4451
    %v4461 = vmul.f32 %v4458, %v4450
    %v4462 = vmul.f32 %v4458, %v4449
    %v4463 = vmul.f32 %v4458, %v4448
    %v4464 = vmul.f32 %v4458, %v4447
    %v4465 = vmul.f32 %v4458, %v4446
    %v4466 = vmul.f32 %v4458, %v4445
    %v4467 = vmul.f32 %v4458, %v4452
    %v4468 = vadd.f32 %v4375, %v4460
    %v4469 = vadd.f32 %v4376, %v4461
    %v4470 = vadd.f32 %v4377, %v4462
    %v4471 = vadd.f32 %v4378, %v4463
    %v4472 = vadd.f32 %v4379, %v4464
    %v4473 = vadd.f32 %v4380, %v4465
    %v4474 = vadd.f32 %v4381, %v4466
    %v4475 = vadd.f32 %v4382, %v4467
    %s4476 = scalar_lea.vmem %s3, 392
    %v4477 = vld [vmem:[%s4476] sm:$0xff]
    %4479 = vset.pattern.permute.xlu0 0
    %4480 = vperm.xlu0 %4479, %v4477
    %v4481 = vpop.permute.xlu0 %4480
    %v4483 = vmul.f32 %v4481, %v4451
    %v4484 = vmul.f32 %v4481, %v4450
    %v4485 = vmul.f32 %v4481, %v4449
    %v4486 = vmul.f32 %v4481, %v4448
    %v4487 = vmul.f32 %v4481, %v4447
    %v4488 = vmul.f32 %v4481, %v4446
    %v4489 = vmul.f32 %v4481, %v4445
    %v4490 = vmul.f32 %v4481, %v4452
    %v4491 = vadd.f32 %v4398, %v4483
    %v4492 = vadd.f32 %v4399, %v4484
    %v4493 = vadd.f32 %v4400, %v4485
    %v4494 = vadd.f32 %v4401, %v4486
    %v4495 = vadd.f32 %v4402, %v4487
    %v4496 = vadd.f32 %v4403, %v4488
    %v4497 = vadd.f32 %v4404, %v4489
    %v4498 = vadd.f32 %v4405, %v4490
    %s4499 = scalar_lea.vmem %s3, 400
    %v4500 = vld [vmem:[%s4499] sm:$0xff]
    %4502 = vset.pattern.permute.xlu0 0
    %4503 = vperm.xlu0 %4502, %v4500
    %v4504 = vpop.permute.xlu0 %4503
    %v4506 = vmul.f32 %v4504, %v4451
    %v4507 = vmul.f32 %v4504, %v4450
    %v4508 = vmul.f32 %v4504, %v4449
    %v4509 = vmul.f32 %v4504, %v4448
    %v4510 = vmul.f32 %v4504, %v4447
    %v4511 = vmul.f32 %v4504, %v4446
    %v4512 = vmul.f32 %v4504, %v4445
    %v4513 = vmul.f32 %v4504, %v4452
    %v4514 = vadd.f32 %v4421, %v4506
    %v4515 = vadd.f32 %v4422, %v4507
    %v4516 = vadd.f32 %v4423, %v4508
    %v4517 = vadd.f32 %v4424, %v4509
    %v4518 = vadd.f32 %v4425, %v4510
    %v4519 = vadd.f32 %v4426, %v4511
    %v4520 = vadd.f32 %v4427, %v4512
    %v4521 = vadd.f32 %v4428, %v4513
    %4522 = vrot.lane.b32.xlu0 %v3809, 97
    %v4523 = vpop.permute.xlu0 %4522
    %4524 = vrot.lane.b32.xlu0 %v3810, 97
    %v4525 = vpop.permute.xlu0 %4524
    %4526 = vrot.lane.b32.xlu0 %v3811, 97
    %v4527 = vpop.permute.xlu0 %4526
    %4528 = vrot.lane.b32.xlu0 %v3812, 97
    %v4529 = vpop.permute.xlu0 %4528
    %4530 = vrot.lane.b32.xlu0 %v3813, 97
    %v4531 = vpop.permute.xlu0 %4530
    %4532 = vrot.lane.b32.xlu0 %v3814, 97
    %v4533 = vpop.permute.xlu0 %4532
    %4534 = vrot.lane.b32.xlu0 %v3815, 97
    %v4535 = vpop.permute.xlu0 %4534
    %4536 = vrot.lane.b32.xlu0 %v3816, 97
    %v4537 = vpop.permute.xlu0 %4536
    %v4538 = vsel %vm3161, %v4535, %v4537
    %v4539 = vsel %vm3161, %v4533, %v4535
    %v4540 = vsel %vm3161, %v4531, %v4533
    %v4541 = vsel %vm3161, %v4529, %v4531
    %v4542 = vsel %vm3161, %v4527, %v4529
    %v4543 = vsel %vm3161, %v4525, %v4527
    %v4544 = vsel %vm3161, %v4523, %v4525
    %v4545 = vsel %vm3161, %v4537, %v4523
    %s4546 = scalar_lea.vmem %s3, 408
    %v4547 = vld [vmem:[%s4546] sm:$0xff]
    %4549 = vset.pattern.permute.xlu0 0
    %4550 = vperm.xlu0 %4549, %v4547
    %v4551 = vpop.permute.xlu0 %4550
    %v4553 = vmul.f32 %v4551, %v4544
    %v4554 = vmul.f32 %v4551, %v4543
    %v4555 = vmul.f32 %v4551, %v4542
    %v4556 = vmul.f32 %v4551, %v4541
    %v4557 = vmul.f32 %v4551, %v4540
    %v4558 = vmul.f32 %v4551, %v4539
    %v4559 = vmul.f32 %v4551, %v4538
    %v4560 = vmul.f32 %v4551, %v4545
    %v4561 = vadd.f32 %v4468, %v4553
    %v4562 = vadd.f32 %v4469, %v4554
    %v4563 = vadd.f32 %v4470, %v4555
    %v4564 = vadd.f32 %v4471, %v4556
    %v4565 = vadd.f32 %v4472, %v4557
    %v4566 = vadd.f32 %v4473, %v4558
    %v4567 = vadd.f32 %v4474, %v4559
    %v4568 = vadd.f32 %v4475, %v4560
    %s4569 = scalar_lea.vmem %s3, 416
    %v4570 = vld [vmem:[%s4569] sm:$0xff]
    %4572 = vset.pattern.permute.xlu0 0
    %4573 = vperm.xlu0 %4572, %v4570
    %v4574 = vpop.permute.xlu0 %4573
    %v4576 = vmul.f32 %v4574, %v4544
    %v4577 = vmul.f32 %v4574, %v4543
    %v4578 = vmul.f32 %v4574, %v4542
    %v4579 = vmul.f32 %v4574, %v4541
    %v4580 = vmul.f32 %v4574, %v4540
    %v4581 = vmul.f32 %v4574, %v4539
    %v4582 = vmul.f32 %v4574, %v4538
    %v4583 = vmul.f32 %v4574, %v4545
    %v4584 = vadd.f32 %v4491, %v4576
    %v4585 = vadd.f32 %v4492, %v4577
    %v4586 = vadd.f32 %v4493, %v4578
    %v4587 = vadd.f32 %v4494, %v4579
    %v4588 = vadd.f32 %v4495, %v4580
    %v4589 = vadd.f32 %v4496, %v4581
    %v4590 = vadd.f32 %v4497, %v4582
    %v4591 = vadd.f32 %v4498, %v4583
    %s4592 = scalar_lea.vmem %s3, 424
    %v4593 = vld [vmem:[%s4592] sm:$0xff]
    %4595 = vset.pattern.permute.xlu0 0
    %4596 = vperm.xlu0 %4595, %v4593
    %v4597 = vpop.permute.xlu0 %4596
    %v4599 = vmul.f32 %v4597, %v4544
    %v4600 = vmul.f32 %v4597, %v4543
    %v4601 = vmul.f32 %v4597, %v4542
    %v4602 = vmul.f32 %v4597, %v4541
    %v4603 = vmul.f32 %v4597, %v4540
    %v4604 = vmul.f32 %v4597, %v4539
    %v4605 = vmul.f32 %v4597, %v4538
    %v4606 = vmul.f32 %v4597, %v4545
    %v4607 = vadd.f32 %v4514, %v4599
    %v4608 = vadd.f32 %v4515, %v4600
    %v4609 = vadd.f32 %v4516, %v4601
    %v4610 = vadd.f32 %v4517, %v4602
    %v4611 = vadd.f32 %v4518, %v4603
    %v4612 = vadd.f32 %v4519, %v4604
    %v4613 = vadd.f32 %v4520, %v4605
    %v4614 = vadd.f32 %v4521, %v4606
    %v4623 = vrot.slane %v4561, 2
    %v4624 = vrot.slane %v4562, 2
    %v4625 = vrot.slane %v4563, 2
    %v4626 = vrot.slane %v4564, 2
    %v4627 = vrot.slane %v4565, 2
    %v4628 = vrot.slane %v4566, 2
    %v4629 = vrot.slane %v4567, 2
    %v4630 = vrot.slane %v4568, 2
    %v4639 = vadd.f32 %v4561, %v4623
    %v4640 = vadd.f32 %v4562, %v4624
    %v4641 = vadd.f32 %v4563, %v4625
    %v4642 = vadd.f32 %v4564, %v4626
    %v4643 = vadd.f32 %v4565, %v4627
    %v4644 = vadd.f32 %v4566, %v4628
    %v4645 = vadd.f32 %v4567, %v4629
    %v4646 = vadd.f32 %v4568, %v4630
    %v4647 = vrot.slane %v4561, 4
    %v4648 = vrot.slane %v4562, 4
    %v4649 = vrot.slane %v4563, 4
    %v4650 = vrot.slane %v4564, 4
    %v4651 = vrot.slane %v4565, 4
    %v4652 = vrot.slane %v4566, 4
    %v4653 = vrot.slane %v4567, 4
    %v4654 = vrot.slane %v4568, 4
    %v4663 = vadd.f32 %v4639, %v4647
    %v4664 = vadd.f32 %v4640, %v4648
    %v4665 = vadd.f32 %v4641, %v4649
    %v4666 = vadd.f32 %v4642, %v4650
    %v4667 = vadd.f32 %v4643, %v4651
    %v4668 = vadd.f32 %v4644, %v4652
    %v4669 = vadd.f32 %v4645, %v4653
    %v4670 = vadd.f32 %v4646, %v4654
    %v4671 = vstv %s3817
    %v4672 = vadd.f32 %v4663, %v4671
    %v4673 = vadd.f32 %v4664, %v4671
    %v4674 = vadd.f32 %v4665, %v4671
    %v4675 = vadd.f32 %v4666, %v4671
    %v4676 = vadd.f32 %v4667, %v4671
    %v4677 = vadd.f32 %v4668, %v4671
    %v4678 = vadd.f32 %v4669, %v4671
    %v4679 = vadd.f32 %v4670, %v4671
    %v4680 = vmul.f32 %v4672, 0.1
    %v4681 = vmul.f32 %v4673, 0.1
    %v4682 = vmul.f32 %v4674, 0.1
    %v4683 = vmul.f32 %v4675, 0.1
    %v4684 = vmul.f32 %v4676, 0.1
    %v4685 = vmul.f32 %v4677, 0.1
    %v4686 = vmul.f32 %v4678, 0.1
    %v4687 = vmul.f32 %v4679, 0.1
    %v4688 = vmax.f32 %v4672, %v4680
    %v4689 = vmax.f32 %v4673, %v4681
    %v4690 = vmax.f32 %v4674, %v4682
    %v4691 = vmax.f32 %v4675, %v4683
    %v4692 = vmax.f32 %v4676, %v4684
    %v4693 = vmax.f32 %v4677, %v4685
    %v4694 = vmax.f32 %v4678, %v4686
    %v4695 = vmax.f32 %v4679, %v4687
    %v4696 = vadd.f32 %v3809, %v4688
    %v4697 = vadd.f32 %v3810, %v4689
    %v4698 = vadd.f32 %v3811, %v4690
    %v4699 = vadd.f32 %v3812, %v4691
    %v4700 = vadd.f32 %v3813, %v4692
    %v4701 = vadd.f32 %v3814, %v4693
    %v4702 = vadd.f32 %v3815, %v4694
    %v4703 = vadd.f32 %v3816, %v4695
    %v4712 = vrot.slane %v4584, 2
    %v4713 = vrot.slane %v4585, 2
    %v4714 = vrot.slane %v4586, 2
    %v4715 = vrot.slane %v4587, 2
    %v4716 = vrot.slane %v4588, 2
    %v4717 = vrot.slane %v4589, 2
    %v4718 = vrot.slane %v4590, 2
    %v4719 = vrot.slane %v4591, 2
    %v4728 = vadd.f32 %v4584, %v4712
    %v4729 = vadd.f32 %v4585, %v4713
    %v4730 = vadd.f32 %v4586, %v4714
    %v4731 = vadd.f32 %v4587, %v4715
    %v4732 = vadd.f32 %v4588, %v4716
    %v4733 = vadd.f32 %v4589, %v4717
    %v4734 = vadd.f32 %v4590, %v4718
    %v4735 = vadd.f32 %v4591, %v4719
    %v4736 = vrot.slane %v4584, 4
    %v4737 = vrot.slane %v4585, 4
    %v4738 = vrot.slane %v4586, 4
    %v4739 = vrot.slane %v4587, 4
    %v4740 = vrot.slane %v4588, 4
    %v4741 = vrot.slane %v4589, 4
    %v4742 = vrot.slane %v4590, 4
    %v4743 = vrot.slane %v4591, 4
    %v4752 = vadd.f32 %v4728, %v4736
    %v4753 = vadd.f32 %v4729, %v4737
    %v4754 = vadd.f32 %v4730, %v4738
    %v4755 = vadd.f32 %v4731, %v4739
    %v4756 = vadd.f32 %v4732, %v4740
    %v4757 = vadd.f32 %v4733, %v4741
    %v4758 = vadd.f32 %v4734, %v4742
    %v4759 = vadd.f32 %v4735, %v4743
    %v4760 = vstv %s3818
    %v4761 = vadd.f32 %v4752, %v4760
    %v4762 = vadd.f32 %v4753, %v4760
    %v4763 = vadd.f32 %v4754, %v4760
    %v4764 = vadd.f32 %v4755, %v4760
    %v4765 = vadd.f32 %v4756, %v4760
    %v4766 = vadd.f32 %v4757, %v4760
    %v4767 = vadd.f32 %v4758, %v4760
    %v4768 = vadd.f32 %v4759, %v4760
    %v4769 = vmul.f32 %v4761, 0.1
    %v4770 = vmul.f32 %v4762, 0.1
    %v4771 = vmul.f32 %v4763, 0.1
    %v4772 = vmul.f32 %v4764, 0.1
    %v4773 = vmul.f32 %v4765, 0.1
    %v4774 = vmul.f32 %v4766, 0.1
    %v4775 = vmul.f32 %v4767, 0.1
    %v4776 = vmul.f32 %v4768, 0.1
    %v4777 = vmax.f32 %v4761, %v4769
    %v4778 = vmax.f32 %v4762, %v4770
    %v4779 = vmax.f32 %v4763, %v4771
    %v4780 = vmax.f32 %v4764, %v4772
    %v4781 = vmax.f32 %v4765, %v4773
    %v4782 = vmax.f32 %v4766, %v4774
    %v4783 = vmax.f32 %v4767, %v4775
    %v4784 = vmax.f32 %v4768, %v4776
    %v4793 = vrot.slane %v4777, 6
    %v4794 = vrot.slane %v4778, 6
    %v4795 = vrot.slane %v4779, 6
    %v4796 = vrot.slane %v4780, 6
    %v4797 = vrot.slane %v4781, 6
    %v4798 = vrot.slane %v4782, 6
    %v4799 = vrot.slane %v4783, 6
    %v4800 = vrot.slane %v4784, 6
    %v4809 = vadd.f32 %v3809, %v4793
    %v4810 = vadd.f32 %v3810, %v4794
    %v4811 = vadd.f32 %v3811, %v4795
    %v4812 = vadd.f32 %v3812, %v4796
    %v4813 = vadd.f32 %v3813, %v4797
    %v4814 = vadd.f32 %v3814, %v4798
    %v4815 = vadd.f32 %v3815, %v4799
    %v4816 = vadd.f32 %v3816, %v4800
    %v4825 = vrot.slane %v4607, 2
    %v4826 = vrot.slane %v4608, 2
    %v4827 = vrot.slane %v4609, 2
    %v4828 = vrot.slane %v4610, 2
    %v4829 = vrot.slane %v4611, 2
    %v4830 = vrot.slane %v4612, 2
    %v4831 = vrot.slane %v4613, 2
    %v4832 = vrot.slane %v4614, 2
    %v4841 = vadd.f32 %v4607, %v4825
    %v4842 = vadd.f32 %v4608, %v4826
    %v4843 = vadd.f32 %v4609, %v4827
    %v4844 = vadd.f32 %v4610, %v4828
    %v4845 = vadd.f32 %v4611, %v4829
    %v4846 = vadd.f32 %v4612, %v4830
    %v4847 = vadd.f32 %v4613, %v4831
    %v4848 = vadd.f32 %v4614, %v4832
    %v4849 = vrot.slane %v4607, 4
    %v4850 = vrot.slane %v4608, 4
    %v4851 = vrot.slane %v4609, 4
    %v4852 = vrot.slane %v4610, 4
    %v4853 = vrot.slane %v4611, 4
    %v4854 = vrot.slane %v4612, 4
    %v4855 = vrot.slane %v4613, 4
    %v4856 = vrot.slane %v4614, 4
    %v4865 = vadd.f32 %v4841, %v4849
    %v4866 = vadd.f32 %v4842, %v4850
    %v4867 = vadd.f32 %v4843, %v4851
    %v4868 = vadd.f32 %v4844, %v4852
    %v4869 = vadd.f32 %v4845, %v4853
    %v4870 = vadd.f32 %v4846, %v4854
    %v4871 = vadd.f32 %v4847, %v4855
    %v4872 = vadd.f32 %v4848, %v4856
    %v4873 = vstv %s3819
    %v4874 = vadd.f32 %v4865, %v4873
    %v4875 = vadd.f32 %v4866, %v4873
    %v4876 = vadd.f32 %v4867, %v4873
    %v4877 = vadd.f32 %v4868, %v4873
    %v4878 = vadd.f32 %v4869, %v4873
    %v4879 = vadd.f32 %v4870, %v4873
    %v4880 = vadd.f32 %v4871, %v4873
    %v4881 = vadd.f32 %v4872, %v4873
    %v4882 = vmul.f32 %v4874, 0.1
    %v4883 = vmul.f32 %v4875, 0.1
    %v4884 = vmul.f32 %v4876, 0.1
    %v4885 = vmul.f32 %v4877, 0.1
    %v4886 = vmul.f32 %v4878, 0.1
    %v4887 = vmul.f32 %v4879, 0.1
    %v4888 = vmul.f32 %v4880, 0.1
    %v4889 = vmul.f32 %v4881, 0.1
    %v4890 = vmax.f32 %v4874, %v4882
    %v4891 = vmax.f32 %v4875, %v4883
    %v4892 = vmax.f32 %v4876, %v4884
    %v4893 = vmax.f32 %v4877, %v4885
    %v4894 = vmax.f32 %v4878, %v4886
    %v4895 = vmax.f32 %v4879, %v4887
    %v4896 = vmax.f32 %v4880, %v4888
    %v4897 = vmax.f32 %v4881, %v4889
    %v4906 = vrot.slane %v4890, 4
    %v4907 = vrot.slane %v4891, 4
    %v4908 = vrot.slane %v4892, 4
    %v4909 = vrot.slane %v4893, 4
    %v4910 = vrot.slane %v4894, 4
    %v4911 = vrot.slane %v4895, 4
    %v4912 = vrot.slane %v4896, 4
    %v4913 = vrot.slane %v4897, 4
    %v4922 = vadd.f32 %v3809, %v4906
    %v4923 = vadd.f32 %v3810, %v4907
    %v4924 = vadd.f32 %v3811, %v4908
    %v4925 = vadd.f32 %v3812, %v4909
    %v4926 = vadd.f32 %v3813, %v4910
    %v4927 = vadd.f32 %v3814, %v4911
    %v4928 = vadd.f32 %v3815, %v4912
    %v4929 = vadd.f32 %v3816, %v4913
    %v4930 = vsel %vm3554, %v4696, %v4809
    %v4931 = vsel %vm3554, %v4697, %v4810
    %v4932 = vsel %vm3554, %v4698, %v4811
    %v4933 = vsel %vm3554, %v4699, %v4812
    %v4934 = vsel %vm3554, %v4700, %v4813
    %v4935 = vsel %vm3554, %v4701, %v4814
    %v4936 = vsel %vm3554, %v4702, %v4815
    %v4937 = vsel %vm3554, %v4703, %v4816
    %v4938 = vsel %vm1915, %v4930, %v4922
    %v4939 = vsel %vm1915, %v4931, %v4923
    %v4940 = vsel %vm1915, %v4932, %v4924
    %v4941 = vsel %vm1915, %v4933, %v4925
    %v4942 = vsel %vm1915, %v4934, %v4926
    %v4943 = vsel %vm1915, %v4935, %v4927
    %v4944 = vsel %vm1915, %v4936, %v4928
    %v4945 = vsel %vm1915, %v4937, %v4929
    %v4946 = vsel %vm3571, %v4938, 0.0
    %v4947 = vsel %vm3571, %v4939, 0.0
    %v4948 = vsel %vm3571, %v4940, 0.0
    %v4949 = vsel %vm3571, %v4941, 0.0
    %v4950 = vsel %vm3571, %v4942, 0.0
    %v4951 = vsel %vm3571, %v4943, 0.0
    %v4952 = vsel %vm3571, %v4944, 0.0
    %v4953 = vsel %vm3571, %v4945, 0.0
    %v4954 = vmul.f32 %v4946, %v3584
    %v4955 = vmul.f32 %v4947, %v3588
    %v4956 = vmul.f32 %v4948, %v3592
    %v4957 = vmul.f32 %v4949, %v3596
    %v4958 = vmul.f32 %v4950, %v3600
    %v4959 = vmul.f32 %v4951, %v3604
    %v4960 = vmul.f32 %v4952, %v3608
    %v4961 = vmul.f32 %v4953, %v3612
    %v4962 = vadd.f32 %v4954, %v4955
    %v4963 = vadd.f32 %v4962, %v4956
    %v4964 = vadd.f32 %v4963, %v4957
    %v4965 = vadd.f32 %v4964, %v4958
    %v4966 = vadd.f32 %v4965, %v4959
    %v4967 = vadd.f32 %v4966, %v4960
    %v4968 = vadd.f32 %v4967, %v4961
    %4969 = vadd.xlane.f32.xlu0 %v4968
    %v4970 = vpop.xlane.xlu0 %4969
    %v4971 = vmul.f32 %v4954, %v4954
    %v4972 = vmul.f32 %v4955, %v4955
    %v4973 = vmul.f32 %v4956, %v4956
    %v4974 = vmul.f32 %v4957, %v4957
    %v4975 = vmul.f32 %v4958, %v4958
    %v4976 = vmul.f32 %v4959, %v4959
    %v4977 = vmul.f32 %v4960, %v4960
    %v4978 = vmul.f32 %v4961, %v4961
    %v4979 = vadd.f32 %v4971, %v4972
    %v4980 = vadd.f32 %v4979, %v4973
    %v4981 = vadd.f32 %v4980, %v4974
    %v4982 = vadd.f32 %v4981, %v4975
    %v4983 = vadd.f32 %v4982, %v4976
    %v4984 = vadd.f32 %v4983, %v4977
    %v4985 = vadd.f32 %v4984, %v4978
    %4986 = vadd.xlane.f32.xlu0 %v4985
    %v4987 = vpop.xlane.xlu0 %4986
    %v4988 = vsel %vm3655, %v4970, 0.0
    %4989 = vadd.xlane.f32.xlu0 %v4988
    %v4990 = vpop.xlane.xlu0 %4989
    %v4991 = vrot.slane %v4990, 4
    %v4992 = vadd.f32 %v4990, %v4991
    %v4993 = vrot.slane %v4992, 2
    %v4994 = vadd.f32 %v4992, %v4993
    %v4995 = vrot.slane %v4994, 1
    %v4996 = vadd.f32 %v4994, %v4995
    %s4997 = vtos %v4996
    %v4998 = vsel %vm3655, %v4987, 0.0
    %4999 = vadd.xlane.f32.xlu0 %v4998
    %v5000 = vpop.xlane.xlu0 %4999
    %v5001 = vrot.slane %v5000, 4
    %v5002 = vadd.f32 %v5000, %v5001
    %v5003 = vrot.slane %v5002, 2
    %v5004 = vadd.f32 %v5002, %v5003
    %v5005 = vrot.slane %v5004, 1
    %v5006 = vadd.f32 %v5004, %v5005
    %s5007 = vtos %v5006
    %v5008 = vrcp.pop 1352.0
    %s5009 = vtos %v5008
    %s5010 = smul.f32 %s4997, %s5009
    %v5011 = vrcp.pop 1352.0
    %s5012 = vtos %v5011
    %s5013 = smul.f32 %s5007, %s5012
    %s5014 = smul.f32 %s5010, %s5010
    %s5015 = ssub.f32 %s5013, %s5014
    %s5016 = sadd.f32 %s5015, 1e-05
    %v5017 = vstv %s5016
    %v5018 = vrsqrt.pop %v5017
    %s5019 = vtos %v5018
    %s5020 = smul.f32 %s3820, %s5019
    %s5021 = smul.f32 %s5010, %s5020
    %s5022 = ssub.f32 %s3823, %s5021
    %v5023 = vstv %s5020
    %v5024 = vstv %s5022
    %v5026 = vrot.slane %v4970, 2
    %v5028 = vsel %vm3655, %v5026, 0.0
    %5029 = vadd.xlane.f32.xlu0 %v5028
    %v5030 = vpop.xlane.xlu0 %5029
    %v5031 = vrot.slane %v5030, 4
    %v5032 = vadd.f32 %v5030, %v5031
    %v5033 = vrot.slane %v5032, 2
    %v5034 = vadd.f32 %v5032, %v5033
    %v5035 = vrot.slane %v5034, 1
    %v5036 = vadd.f32 %v5034, %v5035
    %s5037 = vtos %v5036
    %v5039 = vrot.slane %v4987, 2
    %v5041 = vsel %vm3655, %v5039, 0.0
    %5042 = vadd.xlane.f32.xlu0 %v5041
    %v5043 = vpop.xlane.xlu0 %5042
    %v5044 = vrot.slane %v5043, 4
    %v5045 = vadd.f32 %v5043, %v5044
    %v5046 = vrot.slane %v5045, 2
    %v5047 = vadd.f32 %v5045, %v5046
    %v5048 = vrot.slane %v5047, 1
    %v5049 = vadd.f32 %v5047, %v5048
    %s5050 = vtos %v5049
    %v5051 = vrcp.pop 1352.0
    %s5052 = vtos %v5051
    %s5053 = smul.f32 %s5037, %s5052
    %v5054 = vrcp.pop 1352.0
    %s5055 = vtos %v5054
    %s5056 = smul.f32 %s5050, %s5055
    %s5057 = smul.f32 %s5053, %s5053
    %s5058 = ssub.f32 %s5056, %s5057
    %s5059 = sadd.f32 %s5058, 1e-05
    %v5060 = vstv %s5059
    %v5061 = vrsqrt.pop %v5060
    %s5062 = vtos %v5061
    %s5063 = smul.f32 %s3821, %s5062
    %s5064 = smul.f32 %s5053, %s5063
    %s5065 = ssub.f32 %s3824, %s5064
    %v5066 = vstv %s5063
    %v5067 = vstv %s5065
    %v5068 = vrot.slane %v4970, 4
    %v5070 = vsel %vm3655, %v5068, 0.0
    %5071 = vadd.xlane.f32.xlu0 %v5070
    %v5072 = vpop.xlane.xlu0 %5071
    %v5073 = vrot.slane %v5072, 4
    %v5074 = vadd.f32 %v5072, %v5073
    %v5075 = vrot.slane %v5074, 2
    %v5076 = vadd.f32 %v5074, %v5075
    %v5077 = vrot.slane %v5076, 1
    %v5078 = vadd.f32 %v5076, %v5077
    %s5079 = vtos %v5078
    %v5080 = vrot.slane %v4987, 4
    %v5082 = vsel %vm3655, %v5080, 0.0
    %5083 = vadd.xlane.f32.xlu0 %v5082
    %v5084 = vpop.xlane.xlu0 %5083
    %v5085 = vrot.slane %v5084, 4
    %v5086 = vadd.f32 %v5084, %v5085
    %v5087 = vrot.slane %v5086, 2
    %v5088 = vadd.f32 %v5086, %v5087
    %v5089 = vrot.slane %v5088, 1
    %v5090 = vadd.f32 %v5088, %v5089
    %s5091 = vtos %v5090
    %v5092 = vrcp.pop 1352.0
    %s5093 = vtos %v5092
    %s5094 = smul.f32 %s5079, %s5093
    %v5095 = vrcp.pop 1352.0
    %s5096 = vtos %v5095
    %s5097 = smul.f32 %s5091, %s5096
    %s5098 = smul.f32 %s5094, %s5094
    %s5099 = ssub.f32 %s5097, %s5098
    %s5100 = sadd.f32 %s5099, 1e-05
    %v5101 = vstv %s5100
    %v5102 = vrsqrt.pop %v5101
    %s5103 = vtos %v5102
    %s5104 = smul.f32 %s3822, %s5103
    %s5105 = smul.f32 %s5094, %s5104
    %s5106 = ssub.f32 %s3825, %s5105
    %v5107 = vstv %s5104
    %v5108 = vstv %s5106
    %v5109 = vsel %vm3554, %v5023, %v5066
    %v5110 = vsel %vm1915, %v5109, %v5107
    %v5111 = vsel %vm3571, %v5110, 0.0
    %v5112 = vsel %vm3554, %v5024, %v5067
    %v5113 = vsel %vm1915, %v5112, %v5108
    %v5114 = vsel %vm3571, %v5113, 0.0
    %5116 = vset.pattern.permute.xlu0 0
    %5117 = vperm.xlu0 %5116, %v5111
    %v5118 = vpop.permute.xlu0 %5117
    %v5120 = vmul.f32 %v4946, %v5118
    %v5121 = vmul.f32 %v4947, %v5118
    %v5122 = vmul.f32 %v4948, %v5118
    %v5123 = vmul.f32 %v4949, %v5118
    %v5124 = vmul.f32 %v4950, %v5118
    %v5125 = vmul.f32 %v4951, %v5118
    %v5126 = vmul.f32 %v4952, %v5118
    %v5127 = vmul.f32 %v4953, %v5118
    %5129 = vset.pattern.permute.xlu0 0
    %5130 = vperm.xlu0 %5129, %v5114
    %v5131 = vpop.permute.xlu0 %5130
    %v5133 = vadd.f32 %v5120, %v5131
    %v5134 = vadd.f32 %v5121, %v5131
    %v5135 = vadd.f32 %v5122, %v5131
    %v5136 = vadd.f32 %v5123, %v5131
    %v5137 = vadd.f32 %v5124, %v5131
    %v5138 = vadd.f32 %v5125, %v5131
    %v5139 = vadd.f32 %v5126, %v5131
    %v5140 = vadd.f32 %v5127, %v5131
    %v5141 = vmul.f32 %v5133, %v3584
    %v5142 = vmul.f32 %v5134, %v3588
    %v5143 = vmul.f32 %v5135, %v3592
    %v5144 = vmul.f32 %v5136, %v3596
    %v5145 = vmul.f32 %v5137, %v3600
    %v5146 = vmul.f32 %v5138, %v3604
    %v5147 = vmul.f32 %v5139, %v3608
    %v5148 = vmul.f32 %v5140, %v3612
    %v5149 = vld [vmem:[%s4] sm:$0xff]
    %5151 = vset.pattern.permute.xlu0 0
    %5152 = vperm.xlu0 %5151, %v5149
    %v5153 = vpop.permute.xlu0 %5152
    %v5155 = vmul.f32 %v5153, %v5141
    %v5156 = vmul.f32 %v5153, %v5142
    %v5157 = vmul.f32 %v5153, %v5143
    %v5158 = vmul.f32 %v5153, %v5144
    %v5159 = vmul.f32 %v5153, %v5145
    %v5160 = vmul.f32 %v5153, %v5146
    %v5161 = vmul.f32 %v5153, %v5147
    %v5162 = vmul.f32 %v5153, %v5148
    %5163 = vrot.lane.b32.xlu0 %v5141, 127
    %v5164 = vpop.permute.xlu0 %5163
    %5165 = vrot.lane.b32.xlu0 %v5142, 127
    %v5166 = vpop.permute.xlu0 %5165
    %5167 = vrot.lane.b32.xlu0 %v5143, 127
    %v5168 = vpop.permute.xlu0 %5167
    %5169 = vrot.lane.b32.xlu0 %v5144, 127
    %v5170 = vpop.permute.xlu0 %5169
    %5171 = vrot.lane.b32.xlu0 %v5145, 127
    %v5172 = vpop.permute.xlu0 %5171
    %5173 = vrot.lane.b32.xlu0 %v5146, 127
    %v5174 = vpop.permute.xlu0 %5173
    %5175 = vrot.lane.b32.xlu0 %v5147, 127
    %v5176 = vpop.permute.xlu0 %5175
    %5177 = vrot.lane.b32.xlu0 %v5148, 127
    %v5178 = vpop.permute.xlu0 %5177
    %v5179 = vsel %vm2879, %v5176, %v5178
    %v5180 = vsel %vm2879, %v5174, %v5176
    %v5181 = vsel %vm2879, %v5172, %v5174
    %v5182 = vsel %vm2879, %v5170, %v5172
    %v5183 = vsel %vm2879, %v5168, %v5170
    %v5184 = vsel %vm2879, %v5166, %v5168
    %v5185 = vsel %vm2879, %v5164, %v5166
    %v5186 = vsel %vm2879, %v5178, %v5164
    %s5187 = scalar_lea.vmem %s4, 8
    %v5188 = vld [vmem:[%s5187] sm:$0xff]
    %5190 = vset.pattern.permute.xlu0 0
    %5191 = vperm.xlu0 %5190, %v5188
    %v5192 = vpop.permute.xlu0 %5191
    %v5194 = vmul.f32 %v5192, %v5185
    %v5195 = vmul.f32 %v5192, %v5184
    %v5196 = vmul.f32 %v5192, %v5183
    %v5197 = vmul.f32 %v5192, %v5182
    %v5198 = vmul.f32 %v5192, %v5181
    %v5199 = vmul.f32 %v5192, %v5180
    %v5200 = vmul.f32 %v5192, %v5179
    %v5201 = vmul.f32 %v5192, %v5186
    %v5202 = vadd.f32 %v5155, %v5194
    %v5203 = vadd.f32 %v5156, %v5195
    %v5204 = vadd.f32 %v5157, %v5196
    %v5205 = vadd.f32 %v5158, %v5197
    %v5206 = vadd.f32 %v5159, %v5198
    %v5207 = vadd.f32 %v5160, %v5199
    %v5208 = vadd.f32 %v5161, %v5200
    %v5209 = vadd.f32 %v5162, %v5201
    %5210 = vrot.lane.b32.xlu0 %v5141, 126
    %v5211 = vpop.permute.xlu0 %5210
    %5212 = vrot.lane.b32.xlu0 %v5142, 126
    %v5213 = vpop.permute.xlu0 %5212
    %5214 = vrot.lane.b32.xlu0 %v5143, 126
    %v5215 = vpop.permute.xlu0 %5214
    %5216 = vrot.lane.b32.xlu0 %v5144, 126
    %v5217 = vpop.permute.xlu0 %5216
    %5218 = vrot.lane.b32.xlu0 %v5145, 126
    %v5219 = vpop.permute.xlu0 %5218
    %5220 = vrot.lane.b32.xlu0 %v5146, 126
    %v5221 = vpop.permute.xlu0 %5220
    %5222 = vrot.lane.b32.xlu0 %v5147, 126
    %v5223 = vpop.permute.xlu0 %5222
    %5224 = vrot.lane.b32.xlu0 %v5148, 126
    %v5225 = vpop.permute.xlu0 %5224
    %vm5226 = vcmp.lt.s32.totalorder %v2458, 126
    %v5227 = vsel %vm5226, %v5223, %v5225
    %v5228 = vsel %vm5226, %v5221, %v5223
    %v5229 = vsel %vm5226, %v5219, %v5221
    %v5230 = vsel %vm5226, %v5217, %v5219
    %v5231 = vsel %vm5226, %v5215, %v5217
    %v5232 = vsel %vm5226, %v5213, %v5215
    %v5233 = vsel %vm5226, %v5211, %v5213
    %v5234 = vsel %vm5226, %v5225, %v5211
    %s5235 = scalar_lea.vmem %s4, 16
    %v5236 = vld [vmem:[%s5235] sm:$0xff]
    %5238 = vset.pattern.permute.xlu0 0
    %5239 = vperm.xlu0 %5238, %v5236
    %v5240 = vpop.permute.xlu0 %5239
    %v5242 = vmul.f32 %v5240, %v5233
    %v5243 = vmul.f32 %v5240, %v5232
    %v5244 = vmul.f32 %v5240, %v5231
    %v5245 = vmul.f32 %v5240, %v5230
    %v5246 = vmul.f32 %v5240, %v5229
    %v5247 = vmul.f32 %v5240, %v5228
    %v5248 = vmul.f32 %v5240, %v5227
    %v5249 = vmul.f32 %v5240, %v5234
    %v5250 = vadd.f32 %v5202, %v5242
    %v5251 = vadd.f32 %v5203, %v5243
    %v5252 = vadd.f32 %v5204, %v5244
    %v5253 = vadd.f32 %v5205, %v5245
    %v5254 = vadd.f32 %v5206, %v5246
    %v5255 = vadd.f32 %v5207, %v5247
    %v5256 = vadd.f32 %v5208, %v5248
    %v5257 = vadd.f32 %v5209, %v5249
    %5258 = vrot.lane.b32.xlu0 %v5141, 98
    %v5259 = vpop.permute.xlu0 %5258
    %5260 = vrot.lane.b32.xlu0 %v5142, 98
    %v5261 = vpop.permute.xlu0 %5260
    %5262 = vrot.lane.b32.xlu0 %v5143, 98
    %v5263 = vpop.permute.xlu0 %5262
    %5264 = vrot.lane.b32.xlu0 %v5144, 98
    %v5265 = vpop.permute.xlu0 %5264
    %5266 = vrot.lane.b32.xlu0 %v5145, 98
    %v5267 = vpop.permute.xlu0 %5266
    %5268 = vrot.lane.b32.xlu0 %v5146, 98
    %v5269 = vpop.permute.xlu0 %5268
    %5270 = vrot.lane.b32.xlu0 %v5147, 98
    %v5271 = vpop.permute.xlu0 %5270
    %5272 = vrot.lane.b32.xlu0 %v5148, 98
    %v5273 = vpop.permute.xlu0 %5272
    %v5274 = vsel %vm3067, %v5271, %v5273
    %v5275 = vsel %vm3067, %v5269, %v5271
    %v5276 = vsel %vm3067, %v5267, %v5269
    %v5277 = vsel %vm3067, %v5265, %v5267
    %v5278 = vsel %vm3067, %v5263, %v5265
    %v5279 = vsel %vm3067, %v5261, %v5263
    %v5280 = vsel %vm3067, %v5259, %v5261
    %v5281 = vsel %vm3067, %v5273, %v5259
    %s5282 = scalar_lea.vmem %s4, 24
    %v5283 = vld [vmem:[%s5282] sm:$0xff]
    %5285 = vset.pattern.permute.xlu0 0
    %5286 = vperm.xlu0 %5285, %v5283
    %v5287 = vpop.permute.xlu0 %5286
    %v5289 = vmul.f32 %v5287, %v5280
    %v5290 = vmul.f32 %v5287, %v5279
    %v5291 = vmul.f32 %v5287, %v5278
    %v5292 = vmul.f32 %v5287, %v5277
    %v5293 = vmul.f32 %v5287, %v5276
    %v5294 = vmul.f32 %v5287, %v5275
    %v5295 = vmul.f32 %v5287, %v5274
    %v5296 = vmul.f32 %v5287, %v5281
    %v5297 = vadd.f32 %v5250, %v5289
    %v5298 = vadd.f32 %v5251, %v5290
    %v5299 = vadd.f32 %v5252, %v5291
    %v5300 = vadd.f32 %v5253, %v5292
    %v5301 = vadd.f32 %v5254, %v5293
    %v5302 = vadd.f32 %v5255, %v5294
    %v5303 = vadd.f32 %v5256, %v5295
    %v5304 = vadd.f32 %v5257, %v5296
    %5305 = vrot.lane.b32.xlu0 %v5141, 97
    %v5306 = vpop.permute.xlu0 %5305
    %5307 = vrot.lane.b32.xlu0 %v5142, 97
    %v5308 = vpop.permute.xlu0 %5307
    %5309 = vrot.lane.b32.xlu0 %v5143, 97
    %v5310 = vpop.permute.xlu0 %5309
    %5311 = vrot.lane.b32.xlu0 %v5144, 97
    %v5312 = vpop.permute.xlu0 %5311
    %5313 = vrot.lane.b32.xlu0 %v5145, 97
    %v5314 = vpop.permute.xlu0 %5313
    %5315 = vrot.lane.b32.xlu0 %v5146, 97
    %v5316 = vpop.permute.xlu0 %5315
    %5317 = vrot.lane.b32.xlu0 %v5147, 97
    %v5318 = vpop.permute.xlu0 %5317
    %5319 = vrot.lane.b32.xlu0 %v5148, 97
    %v5320 = vpop.permute.xlu0 %5319
    %v5321 = vsel %vm3161, %v5318, %v5320
    %v5322 = vsel %vm3161, %v5316, %v5318
    %v5323 = vsel %vm3161, %v5314, %v5316
    %v5324 = vsel %vm3161, %v5312, %v5314
    %v5325 = vsel %vm3161, %v5310, %v5312
    %v5326 = vsel %vm3161, %v5308, %v5310
    %v5327 = vsel %vm3161, %v5306, %v5308
    %v5328 = vsel %vm3161, %v5320, %v5306
    %s5329 = scalar_lea.vmem %s4, 32
    %v5330 = vld [vmem:[%s5329] sm:$0xff]
    %5332 = vset.pattern.permute.xlu0 0
    %5333 = vperm.xlu0 %5332, %v5330
    %v5334 = vpop.permute.xlu0 %5333
    %v5336 = vmul.f32 %v5334, %v5327
    %v5337 = vmul.f32 %v5334, %v5326
    %v5338 = vmul.f32 %v5334, %v5325
    %v5339 = vmul.f32 %v5334, %v5324
    %v5340 = vmul.f32 %v5334, %v5323
    %v5341 = vmul.f32 %v5334, %v5322
    %v5342 = vmul.f32 %v5334, %v5321
    %v5343 = vmul.f32 %v5334, %v5328
    %v5344 = vadd.f32 %v5297, %v5336
    %v5345 = vadd.f32 %v5298, %v5337
    %v5346 = vadd.f32 %v5299, %v5338
    %v5347 = vadd.f32 %v5300, %v5339
    %v5348 = vadd.f32 %v5301, %v5340
    %v5349 = vadd.f32 %v5302, %v5341
    %v5350 = vadd.f32 %v5303, %v5342
    %v5351 = vadd.f32 %v5304, %v5343
    %5352 = vrot.lane.b32.xlu0 %v5141, 96
    %v5353 = vpop.permute.xlu0 %5352
    %5354 = vrot.lane.b32.xlu0 %v5142, 96
    %v5355 = vpop.permute.xlu0 %5354
    %5356 = vrot.lane.b32.xlu0 %v5143, 96
    %v5357 = vpop.permute.xlu0 %5356
    %5358 = vrot.lane.b32.xlu0 %v5144, 96
    %v5359 = vpop.permute.xlu0 %5358
    %5360 = vrot.lane.b32.xlu0 %v5145, 96
    %v5361 = vpop.permute.xlu0 %5360
    %5362 = vrot.lane.b32.xlu0 %v5146, 96
    %v5363 = vpop.permute.xlu0 %5362
    %5364 = vrot.lane.b32.xlu0 %v5147, 96
    %v5365 = vpop.permute.xlu0 %5364
    %5366 = vrot.lane.b32.xlu0 %v5148, 96
    %v5367 = vpop.permute.xlu0 %5366
    %vm5368 = vcmp.lt.s32.totalorder %v2458, 96
    %v5369 = vsel %vm5368, %v5365, %v5367
    %v5370 = vsel %vm5368, %v5363, %v5365
    %v5371 = vsel %vm5368, %v5361, %v5363
    %v5372 = vsel %vm5368, %v5359, %v5361
    %v5373 = vsel %vm5368, %v5357, %v5359
    %v5374 = vsel %vm5368, %v5355, %v5357
    %v5375 = vsel %vm5368, %v5353, %v5355
    %v5376 = vsel %vm5368, %v5367, %v5353
    %s5377 = scalar_lea.vmem %s4, 40
    %v5378 = vld [vmem:[%s5377] sm:$0xff]
    %5380 = vset.pattern.permute.xlu0 0
    %5381 = vperm.xlu0 %5380, %v5378
    %v5382 = vpop.permute.xlu0 %5381
    %v5384 = vmul.f32 %v5382, %v5375
    %v5385 = vmul.f32 %v5382, %v5374
    %v5386 = vmul.f32 %v5382, %v5373
    %v5387 = vmul.f32 %v5382, %v5372
    %v5388 = vmul.f32 %v5382, %v5371
    %v5389 = vmul.f32 %v5382, %v5370
    %v5390 = vmul.f32 %v5382, %v5369
    %v5391 = vmul.f32 %v5382, %v5376
    %v5392 = vadd.f32 %v5344, %v5384
    %v5393 = vadd.f32 %v5345, %v5385
    %v5394 = vadd.f32 %v5346, %v5386
    %v5395 = vadd.f32 %v5347, %v5387
    %v5396 = vadd.f32 %v5348, %v5388
    %v5397 = vadd.f32 %v5349, %v5389
    %v5398 = vadd.f32 %v5350, %v5390
    %v5399 = vadd.f32 %v5351, %v5391
    %5400 = vrot.lane.b32.xlu0 %v5141, 68
    %v5401 = vpop.permute.xlu0 %5400
    %5402 = vrot.lane.b32.xlu0 %v5142, 68
    %v5403 = vpop.permute.xlu0 %5402
    %5404 = vrot.lane.b32.xlu0 %v5143, 68
    %v5405 = vpop.permute.xlu0 %5404
    %5406 = vrot.lane.b32.xlu0 %v5144, 68
    %v5407 = vpop.permute.xlu0 %5406
    %5408 = vrot.lane.b32.xlu0 %v5145, 68
    %v5409 = vpop.permute.xlu0 %5408
    %5410 = vrot.lane.b32.xlu0 %v5146, 68
    %v5411 = vpop.permute.xlu0 %5410
    %5412 = vrot.lane.b32.xlu0 %v5147, 68
    %v5413 = vpop.permute.xlu0 %5412
    %5414 = vrot.lane.b32.xlu0 %v5148, 68
    %v5415 = vpop.permute.xlu0 %5414
    %vm5416 = vcmp.lt.s32.totalorder %v2458, 68
    %v5417 = vsel %vm5416, %v5413, %v5415
    %v5418 = vsel %vm5416, %v5411, %v5413
    %v5419 = vsel %vm5416, %v5409, %v5411
    %v5420 = vsel %vm5416, %v5407, %v5409
    %v5421 = vsel %vm5416, %v5405, %v5407
    %v5422 = vsel %vm5416, %v5403, %v5405
    %v5423 = vsel %vm5416, %v5401, %v5403
    %v5424 = vsel %vm5416, %v5415, %v5401
    %s5425 = scalar_lea.vmem %s4, 48
    %v5426 = vld [vmem:[%s5425] sm:$0xff]
    %5428 = vset.pattern.permute.xlu0 0
    %5429 = vperm.xlu0 %5428, %v5426
    %v5430 = vpop.permute.xlu0 %5429
    %v5432 = vmul.f32 %v5430, %v5423
    %v5433 = vmul.f32 %v5430, %v5422
    %v5434 = vmul.f32 %v5430, %v5421
    %v5435 = vmul.f32 %v5430, %v5420
    %v5436 = vmul.f32 %v5430, %v5419
    %v5437 = vmul.f32 %v5430, %v5418
    %v5438 = vmul.f32 %v5430, %v5417
    %v5439 = vmul.f32 %v5430, %v5424
    %v5440 = vadd.f32 %v5392, %v5432
    %v5441 = vadd.f32 %v5393, %v5433
    %v5442 = vadd.f32 %v5394, %v5434
    %v5443 = vadd.f32 %v5395, %v5435
    %v5444 = vadd.f32 %v5396, %v5436
    %v5445 = vadd.f32 %v5397, %v5437
    %v5446 = vadd.f32 %v5398, %v5438
    %v5447 = vadd.f32 %v5399, %v5439
    %5448 = vrot.lane.b32.xlu0 %v5141, 67
    %v5449 = vpop.permute.xlu0 %5448
    %5450 = vrot.lane.b32.xlu0 %v5142, 67
    %v5451 = vpop.permute.xlu0 %5450
    %5452 = vrot.lane.b32.xlu0 %v5143, 67
    %v5453 = vpop.permute.xlu0 %5452
    %5454 = vrot.lane.b32.xlu0 %v5144, 67
    %v5455 = vpop.permute.xlu0 %5454
    %5456 = vrot.lane.b32.xlu0 %v5145, 67
    %v5457 = vpop.permute.xlu0 %5456
    %5458 = vrot.lane.b32.xlu0 %v5146, 67
    %v5459 = vpop.permute.xlu0 %5458
    %5460 = vrot.lane.b32.xlu0 %v5147, 67
    %v5461 = vpop.permute.xlu0 %5460
    %5462 = vrot.lane.b32.xlu0 %v5148, 67
    %v5463 = vpop.permute.xlu0 %5462
    %vm5464 = vcmp.lt.s32.totalorder %v2458, 67
    %v5465 = vsel %vm5464, %v5461, %v5463
    %v5466 = vsel %vm5464, %v5459, %v5461
    %v5467 = vsel %vm5464, %v5457, %v5459
    %v5468 = vsel %vm5464, %v5455, %v5457
    %v5469 = vsel %vm5464, %v5453, %v5455
    %v5470 = vsel %vm5464, %v5451, %v5453
    %v5471 = vsel %vm5464, %v5449, %v5451
    %v5472 = vsel %vm5464, %v5463, %v5449
    %s5473 = scalar_lea.vmem %s4, 56
    %v5474 = vld [vmem:[%s5473] sm:$0xff]
    %5476 = vset.pattern.permute.xlu0 0
    %5477 = vperm.xlu0 %5476, %v5474
    %v5478 = vpop.permute.xlu0 %5477
    %v5480 = vmul.f32 %v5478, %v5471
    %v5481 = vmul.f32 %v5478, %v5470
    %v5482 = vmul.f32 %v5478, %v5469
    %v5483 = vmul.f32 %v5478, %v5468
    %v5484 = vmul.f32 %v5478, %v5467
    %v5485 = vmul.f32 %v5478, %v5466
    %v5486 = vmul.f32 %v5478, %v5465
    %v5487 = vmul.f32 %v5478, %v5472
    %v5488 = vadd.f32 %v5440, %v5480
    %v5489 = vadd.f32 %v5441, %v5481
    %v5490 = vadd.f32 %v5442, %v5482
    %v5491 = vadd.f32 %v5443, %v5483
    %v5492 = vadd.f32 %v5444, %v5484
    %v5493 = vadd.f32 %v5445, %v5485
    %v5494 = vadd.f32 %v5446, %v5486
    %v5495 = vadd.f32 %v5447, %v5487
    %5496 = vrot.lane.b32.xlu0 %v5141, 66
    %v5497 = vpop.permute.xlu0 %5496
    %5498 = vrot.lane.b32.xlu0 %v5142, 66
    %v5499 = vpop.permute.xlu0 %5498
    %5500 = vrot.lane.b32.xlu0 %v5143, 66
    %v5501 = vpop.permute.xlu0 %5500
    %5502 = vrot.lane.b32.xlu0 %v5144, 66
    %v5503 = vpop.permute.xlu0 %5502
    %5504 = vrot.lane.b32.xlu0 %v5145, 66
    %v5505 = vpop.permute.xlu0 %5504
    %5506 = vrot.lane.b32.xlu0 %v5146, 66
    %v5507 = vpop.permute.xlu0 %5506
    %5508 = vrot.lane.b32.xlu0 %v5147, 66
    %v5509 = vpop.permute.xlu0 %5508
    %5510 = vrot.lane.b32.xlu0 %v5148, 66
    %v5511 = vpop.permute.xlu0 %5510
    %vm5512 = vcmp.lt.s32.totalorder %v2458, 66
    %v5513 = vsel %vm5512, %v5509, %v5511
    %v5514 = vsel %vm5512, %v5507, %v5509
    %v5515 = vsel %vm5512, %v5505, %v5507
    %v5516 = vsel %vm5512, %v5503, %v5505
    %v5517 = vsel %vm5512, %v5501, %v5503
    %v5518 = vsel %vm5512, %v5499, %v5501
    %v5519 = vsel %vm5512, %v5497, %v5499
    %v5520 = vsel %vm5512, %v5511, %v5497
    %s5521 = scalar_lea.vmem %s4, 64
    %v5522 = vld [vmem:[%s5521] sm:$0xff]
    %5524 = vset.pattern.permute.xlu0 0
    %5525 = vperm.xlu0 %5524, %v5522
    %v5526 = vpop.permute.xlu0 %5525
    %v5528 = vmul.f32 %v5526, %v5519
    %v5529 = vmul.f32 %v5526, %v5518
    %v5530 = vmul.f32 %v5526, %v5517
    %v5531 = vmul.f32 %v5526, %v5516
    %v5532 = vmul.f32 %v5526, %v5515
    %v5533 = vmul.f32 %v5526, %v5514
    %v5534 = vmul.f32 %v5526, %v5513
    %v5535 = vmul.f32 %v5526, %v5520
    %v5536 = vadd.f32 %v5488, %v5528
    %v5537 = vadd.f32 %v5489, %v5529
    %v5538 = vadd.f32 %v5490, %v5530
    %v5539 = vadd.f32 %v5491, %v5531
    %v5540 = vadd.f32 %v5492, %v5532
    %v5541 = vadd.f32 %v5493, %v5533
    %v5542 = vadd.f32 %v5494, %v5534
    %v5543 = vadd.f32 %v5495, %v5535
    %v5552 = vrot.slane %v5536, 2
    %v5553 = vrot.slane %v5537, 2
    %v5554 = vrot.slane %v5538, 2
    %v5555 = vrot.slane %v5539, 2
    %v5556 = vrot.slane %v5540, 2
    %v5557 = vrot.slane %v5541, 2
    %v5558 = vrot.slane %v5542, 2
    %v5559 = vrot.slane %v5543, 2
    %v5568 = vadd.f32 %v5536, %v5552
    %v5569 = vadd.f32 %v5537, %v5553
    %v5570 = vadd.f32 %v5538, %v5554
    %v5571 = vadd.f32 %v5539, %v5555
    %v5572 = vadd.f32 %v5540, %v5556
    %v5573 = vadd.f32 %v5541, %v5557
    %v5574 = vadd.f32 %v5542, %v5558
    %v5575 = vadd.f32 %v5543, %v5559
    %v5576 = vrot.slane %v5536, 4
    %v5577 = vrot.slane %v5537, 4
    %v5578 = vrot.slane %v5538, 4
    %v5579 = vrot.slane %v5539, 4
    %v5580 = vrot.slane %v5540, 4
    %v5581 = vrot.slane %v5541, 4
    %v5582 = vrot.slane %v5542, 4
    %v5583 = vrot.slane %v5543, 4
    %v5592 = vadd.f32 %v5568, %v5576
    %v5593 = vadd.f32 %v5569, %v5577
    %v5594 = vadd.f32 %v5570, %v5578
    %v5595 = vadd.f32 %v5571, %v5579
    %v5596 = vadd.f32 %v5572, %v5580
    %v5597 = vadd.f32 %v5573, %v5581
    %v5598 = vadd.f32 %v5574, %v5582
    %v5599 = vadd.f32 %v5575, %v5583
    %s5600 = sld [smem:[#allocation2]]
    %v5601 = vstv %s5600
    %v5602 = vadd.f32 %v5592, %v5601
    %v5603 = vadd.f32 %v5593, %v5601
    %v5604 = vadd.f32 %v5594, %v5601
    %v5605 = vadd.f32 %v5595, %v5601
    %v5606 = vadd.f32 %v5596, %v5601
    %v5607 = vadd.f32 %v5597, %v5601
    %v5608 = vadd.f32 %v5598, %v5601
    %v5609 = vadd.f32 %v5599, %v5601
    %v5618 = vcombine.low %v5602, %v5603
    %v5619 = vcombine.low %v5604, %v5605
    %v5621 = vunpack.c.l.s4 1983009808
    %v5622 = vunpack.c.0.s8 %v5621
    %v5623 = vlaneseq
    %v5624 = vshrl.u32 %v5623, 7
    %v5625 = vsub.s32 %v5622, %v5624
    %v5626 = vrot.slane %v5618, %v5625
    %v5628 = vunpack.c.l.s4 1983009808
    %v5629 = vunpack.c.0.s8 %v5628
    %v5630 = vlaneseq
    %v5631 = vshrl.u32 %v5630, 7
    %v5632 = vsub.s32 %v5629, %v5631
    %v5633 = vrot.slane %v5619, %v5632
    %v5634 = vcombine.low %v5626, %v5633
    %v5635 = vcombine.low %v5606, %v5607
    %v5636 = vcombine.low %v5608, %v5609
    %v5638 = vunpack.c.l.s4 1983009808
    %v5639 = vunpack.c.0.s8 %v5638
    %v5640 = vlaneseq
    %v5641 = vshrl.u32 %v5640, 7
    %v5642 = vsub.s32 %v5639, %v5641
    %v5643 = vrot.slane %v5635, %v5642
    %v5645 = vunpack.c.l.s4 1983009808
    %v5646 = vunpack.c.0.s8 %v5645
    %v5647 = vlaneseq
    %v5648 = vshrl.u32 %v5647, 7
    %v5649 = vsub.s32 %v5646, %v5648
    %v5650 = vrot.slane %v5636, %v5649
    %v5651 = vcombine.low %v5643, %v5650
    %5654 = vst [vmem:[%s9] sm:$0xff] %v5634
    %5655 = vst [vmem:[%s9 + $0x8] sm:$0xff] %v5651
    // Predicated region
    $region58: #{decoder_forward.1} parent=1 // pred_check
      _
    $region59: #{decoder_forward.1} parent=1 // pred_check_branch
      %5657 = sbr.rel (0) target = $region61
    $region60: #{decoder_forward.1} parent=1 // pred_region
      _
    $region61: #{decoder_forward.1} parent=1 // pred_fallthru
      _
    // Predicated region
    $region62: #{decoder_forward.1} parent=1 // pred_check
      _
    $region63: #{decoder_forward.1} parent=1 // pred_check_branch
      %5659 = sbr.rel (0) target = $region65
    $region64: #{decoder_forward.1} parent=1 // pred_region
      _
    $region65: #{decoder_forward.1} parent=1 // pred_fallthru
      _
    %5660 = vsyncpa [#allocation4], 1
    %5661 = vsyncpa [#allocation7], 1
    %5662 = vsyncpa [#allocation5], 1
    %5663 = vsyncpa [#allocation10], 1

</llo_original>
